<compile_context>
chip_gen: v7x
topology: tpu7x:2x2x1
jax: 0.10.0
libtpu: 0.0.40
codegen_flags: <defaults>
</compile_context>

<pallas_src>
import functools
import math

import jax
import jax.numpy as jnp
from jax import lax
from jax.experimental import pallas as pl
from jax.experimental.pallas import tpu as pltpu

EPS = 1e-5          # LayerNorm epsilon
NEG_INF = -1e30     # additive key-mask bias


def _layer_norm(x, gamma, beta):
    mean = jnp.mean(x, axis=-1, keepdims=True)
    var = jnp.mean((x - mean) ** 2, axis=-1, keepdims=True)
    return (x - mean) * lax.rsqrt(var + EPS) * gamma + beta


def encoder_layer_kernel(n_heads,
                         x_ref, mask_ref,
                         g1_ref, b1_ref,
                         wqkv_ref, bqkv_ref,
                         wo_ref, bo_ref,
                         g2_ref, b2_ref,
                         w1_ref, bf1_ref, w2_ref, bf2_ref,
                         out_ref,
                         qkv_ref, ctx_ref):
    # One grid step == Bb batch elements.
    Bb, T, D = x_ref.shape
    BT = Bb * T
    d_k = D // n_heads

    x = x_ref[...].reshape(BT, D)                               # (BT, D) f32

    # ---------------- block 1: pre-norm + fused QKV projection ----------------
    # Single (BT, D) x (D, 3D) bf16 matmul (f32 accumulation); the 1/sqrt(d_k) scale is
    # already folded into the Q columns of wqkv/bqkv at pack time.
    xn = _layer_norm(x, g1_ref[...], b1_ref[...])
    qkv = jnp.dot(xn.astype(jnp.bfloat16), wqkv_ref[...],
                  preferred_element_type=jnp.float32) + bqkv_ref[...]
    qkv_ref[...] = qkv                                          # (BT, 3D) f32 scratch

    # -------- attention scores/softmax: inner fori_loop over the Bb sub-batch --------
    def attend_one(b, carry):
        row0 = pl.multiple_of(b * T, T)
        rows = qkv_ref[pl.ds(row0, T), :]                       # (T, 3D) f32

        km = mask_ref[b]                                        # (1, T): 1.0 keep, 0.0 mask
        key_bias = jnp.where(km == 0.0, NEG_INF, 0.0)           # (1, T) additive key bias
        has_key = jnp.max(jnp.where(km == 0.0, 0.0, 1.0),
                          axis=-1, keepdims=True)               # (1, 1): 0 iff all masked

        q_b = rows[:, :D].astype(jnp.bfloat16)                  # pre-scaled
        k_b = rows[:, D:2 * D].astype(jnp.bfloat16)
        v_b = rows[:, 2 * D:].astype(jnp.bfloat16)

        ctxs = []
        for h in range(n_heads):                                # small static unroll (H=4)
            lo = h * d_k
            qh = q_b[:, lo:lo + d_k]                            # (T, d_k)
            kh = k_b[:, lo:lo + d_k]
            vh = v_b[:, lo:lo + d_k]

            # QK^T without an explicit transpose: contract the last dims directly.
            s = lax.dot_general(qh, kh, (((1,), (1,)), ((), ())),
                                preferred_element_type=jnp.float32)     # (T, T) f32
            s = s + key_bias
            m = jnp.max(s, axis=-1, keepdims=True)
            p = jnp.exp(s - m)                                  # masked keys underflow to 0
            l = jnp.sum(p, axis=-1, keepdims=True)              # (T, 1) f32

            ctx = jnp.dot(p.astype(jnp.bfloat16), vh,
                          preferred_element_type=jnp.float32)   # (T, d_k) f32
            # Deferred normalization on the (T, d_k) context; guarded denominator so a
            # fully-masked row cannot produce 0/0; approx recip uses the idle EUP slot.
            ctx = ctx * pl.reciprocal(jnp.maximum(l, 1e-30), approx=True)
            ctxs.append(ctx)

        # Concat heads into one full-lane (T, D) row block (single unmasked store);
        # has_key zeroes fully-masked batch elements (matches softmax->masked_fill(0)).
        ctx_ref[pl.ds(row0, T), :] = jnp.concatenate(ctxs, axis=-1) * has_key
        return carry

    lax.fori_loop(0, Bb, attend_one, 0)

    # ---- single output projection over all heads and all sub-batch rows (K = D) ----
    att = jnp.dot(ctx_ref[...].astype(jnp.bfloat16), wo_ref[...],
                  preferred_element_type=jnp.float32) + bo_ref[...]
    x1 = x_ref[...].reshape(BT, D) + att                        # dropout == identity (eval)

    # ---------------- block 2: pre-norm + positionwise feed forward ----------------
    xn2 = _layer_norm(x1, g2_ref[...], b2_ref[...])
    h1 = jnp.maximum(jnp.dot(xn2.astype(jnp.bfloat16), w1_ref[...],
                             preferred_element_type=jnp.float32) + bf1_ref[...], 0.0)
    ff = jnp.dot(h1.astype(jnp.bfloat16), w2_ref[...],
                 preferred_element_type=jnp.float32) + bf2_ref[...]

    out_ref[...] = (x1 + ff).reshape(Bb, T, D)


def pack_params(params, n_heads):
    """One-time weight packing (do at parameter-load time, NOT per forward call).

    Fuses Wq/Wk/Wv into one (D, 3D) matrix, folds the 1/sqrt(d_k) scale into the Q
    columns, and casts matmul weights to bf16 (biases / LayerNorm params stay f32).
    """
    D = params["wq"].shape[0]
    d_k = D // n_heads
    scale = 1.0 / math.sqrt(d_k)
    wqkv = jnp.concatenate([params["wq"] * scale, params["wk"], params["wv"]], axis=1)
    bqkv = jnp.concatenate([params["bq"] * scale, params["bk"], params["bv"]], axis=1)
    f32 = jnp.float32
    bf16 = jnp.bfloat16
    return {
        "g1": params["g1"].astype(f32), "b1": params["b1"].astype(f32),
        "wqkv": wqkv.astype(bf16), "bqkv": bqkv.astype(f32),
        "wo": params["wo"].astype(bf16), "bo": params["bo"].astype(f32),
        "g2": params["g2"].astype(f32), "b2": params["b2"].astype(f32),
        "w1": params["w1"].astype(bf16), "bf1": params["bf1"].astype(f32),
        "w2": params["w2"].astype(bf16), "bf2": params["bf2"].astype(f32),
    }


def transformer_encoder_layer(x, mask, packed, n_heads, block_batch=8):
    B, T, D = x.shape
    Bb = min(block_batch, B)
    assert B % Bb == 0, "batch must be divisible by block_batch"
    assert T % 8 == 0 and D % 128 == 0, "T must be a multiple of 8, D a multiple of 128"
    BT = Bb * T

    kernel = functools.partial(encoder_layer_kernel, n_heads)

    def full(shape):  # whole-array (weight) spec: constant block index
        zeros = (0,) * len(shape)
        return pl.BlockSpec(shape, lambda g, _z=zeros: _z)

    weight_order = ["g1", "b1", "wqkv", "bqkv", "wo", "bo",
                    "g2", "b2", "w1", "bf1", "w2", "bf2"]
    weights = [packed[k] for k in weight_order]

    in_specs = ([pl.BlockSpec((Bb, T, D), lambda g: (g, 0, 0)),   # x
                 pl.BlockSpec((Bb, 1, T), lambda g: (g, 0, 0))]   # mask
                + [full(w.shape) for w in weights])
    out_spec = pl.BlockSpec((Bb, T, D), lambda g: (g, 0, 0))
    scratch = [pltpu.VMEM((BT, 3 * D), jnp.float32),              # fused qkv
               pltpu.VMEM((BT, D), jnp.float32)]                  # concatenated head contexts

    # Derive the VMEM limit from the actual block / scratch footprint (double-buffered
    # blocks + single-buffered scratch + headroom for intermediates / compiler scratch).
    def nbytes(shape, dtype):
        n = 1
        for s in shape:
            n *= s
        return n * jnp.dtype(dtype).itemsize

    block_bytes = (2 * nbytes((Bb, T, D), x.dtype)                # x block + out block
                   + nbytes((Bb, 1, T), mask.dtype)
                   + sum(nbytes(w.shape, w.dtype) for w in weights))
    scratch_bytes = nbytes((BT, 3 * D), jnp.float32) + nbytes((BT, D), jnp.float32)
    vmem_limit = int(min(2 * block_bytes + scratch_bytes + (8 << 20), 64 << 20))

    out = pl.pallas_call(
        kernel,
        out_shape=jax.ShapeDtypeStruct((B, T, D), jnp.float32),
        grid_spec=pltpu.PrefetchScalarGridSpec(
            num_scalar_prefetch=0,
            grid=(B // Bb,),                  # even step count -> both v7x TCs busy
            in_specs=in_specs,
            out_specs=out_spec,
            scratch_shapes=scratch),
        compiler_params=pltpu.CompilerParams(
            dimension_semantics=("parallel",),
            vmem_limit_bytes=vmem_limit),
    )(x, mask, *weights)
    return out, mask


def reference(x, mask, params, n_heads):
    """Pure-JAX f32 mirror of the PyTorch forward (eval mode)."""
    B, T, D = x.shape
    d_k = D // n_heads
    km = mask

    def ln(v, g, b):
        m = jnp.mean(v, -1, keepdims=True)
        s = jnp.mean((v - m) ** 2, -1, keepdims=True)
        return (v - m) * lax.rsqrt(s + EPS) * g + b

    residual = x
    xn = ln(x, params["g1"], params["b1"])
    q = xn @ params["wq"] + params["bq"]
    k = xn @ params["wk"] + params["bk"]
    v = xn @ params["wv"] + params["bv"]
    q = q.reshape(B, T, n_heads, d_k).transpose(0, 2, 1, 3)
    k = k.reshape(B, T, n_heads, d_k).transpose(0, 2, 1, 3)
    v = v.reshape(B, T, n_heads, d_k).transpose(0, 2, 1, 3)
    scores = jnp.einsum("bhqd,bhkd->bhqk", q, k) / math.sqrt(d_k)
    m = km[:, None, :, :]                                        # (B,1,1,T)
    scores = jnp.where(m == 0.0, NEG_INF, scores)
    p = jax.nn.softmax(scores, axis=-1)
    p = jnp.where(m == 0.0, 0.0, p)
    ctx = jnp.einsum("bhqk,bhkd->bhqd", p, v).transpose(0, 2, 1, 3).reshape(B, T, D)
    x = residual + (ctx @ params["wo"] + params["bo"])
    residual = x
    xn2 = ln(x, params["g2"], params["b2"])
    ff = jnp.maximum(xn2 @ params["w1"] + params["bf1"], 0.0) @ params["w2"] + params["bf2"]
    return residual + ff


if __name__ == "__main__":
    # Lane-dense D (128) and BT = Bb*T = 128 so every flop-dominant matmul has a full MXU
    # M dimension; grid = B/Bb = 2 parallel steps (even -> megacore friendly on v7x).
    B, T, D, H, D_FF = 16, 16, 128, 4, 256
    BLOCK_BATCH = 8

    key = jax.random.PRNGKey(0)
    keys = jax.random.split(key, 13)

    def w(k, shape, scale=0.05):
        return (scale * jax.random.normal(k, shape)).astype(jnp.float32)

    params = {
        "g1": jnp.ones((1, D), jnp.float32), "b1": jnp.zeros((1, D), jnp.float32),
        "wq": w(keys[0], (D, D)), "bq": w(keys[1], (1, D)),
        "wk": w(keys[2], (D, D)), "bk": w(keys[3], (1, D)),
        "wv": w(keys[4], (D, D)), "bv": w(keys[5], (1, D)),
        "wo": w(keys[6], (D, D)), "bo": w(keys[7], (1, D)),
        "g2": jnp.ones((1, D), jnp.float32), "b2": jnp.zeros((1, D), jnp.float32),
        "w1": w(keys[8], (D, D_FF)), "bf1": w(keys[9], (1, D_FF)),
        "w2": w(keys[10], (D_FF, D)), "bf2": w(keys[11], (1, D)),
    }

    x = jax.random.normal(keys[12], (B, T, D), jnp.float32)
    mask = jnp.ones((B, 1, T), jnp.float32)
    mask = mask.at[1, 0, 12:].set(0.0)   # partially masked batch element
    mask = mask.at[5, 0, :].set(0.0)     # fully masked batch element (exercises the guard)

    packed = pack_params(params, H)      # one-time packing (parameter-load time)

    out, out_mask = transformer_encoder_layer(x, mask, packed, H, block_batch=BLOCK_BATCH)
    out = jax.block_until_ready(out)

    ref = reference(x, mask, params, H)
    assert out.shape == (B, T, D) and out.dtype == jnp.float32
    assert bool(jnp.all(jnp.isfinite(out))), "Pallas output contains non-finite values"
    # bf16 MXU inputs (f32 accumulation) vs pure-f32 reference -> relaxed tolerance.
    assert jnp.allclose(out, ref, atol=4e-2, rtol=4e-2), "Pallas output mismatch vs reference"

    print("KERNEL_OK")
</pallas_src>

<mosaic_0001>
module attributes {stable_mosaic.version = 11 : i64} {
  func.func @encoder_layer_kernel(%arg0: i32, %arg1: memref<8x16x128xf32, #tpu.memory_space<vmem>>, %arg2: memref<8x1x16xf32, #tpu.memory_space<vmem>>, %arg3: memref<1x128xf32, #tpu.memory_space<vmem>>, %arg4: memref<1x128xf32, #tpu.memory_space<vmem>>, %arg5: memref<128x384xbf16, #tpu.memory_space<vmem>>, %arg6: memref<1x384xf32, #tpu.memory_space<vmem>>, %arg7: memref<128x128xbf16, #tpu.memory_space<vmem>>, %arg8: memref<1x128xf32, #tpu.memory_space<vmem>>, %arg9: memref<1x128xf32, #tpu.memory_space<vmem>>, %arg10: memref<1x128xf32, #tpu.memory_space<vmem>>, %arg11: memref<128x256xbf16, #tpu.memory_space<vmem>>, %arg12: memref<1x256xf32, #tpu.memory_space<vmem>>, %arg13: memref<256x128xbf16, #tpu.memory_space<vmem>>, %arg14: memref<1x128xf32, #tpu.memory_space<vmem>>, %arg15: memref<8x16x128xf32, #tpu.memory_space<vmem>>, %arg16: memref<128x384xf32, #tpu.memory_space<vmem>>, %arg17: memref<128x128xf32, #tpu.memory_space<vmem>>) attributes {dimension_semantics = [#tpu.dimension_semantics<parallel>], iteration_bounds = array<i64: 2>, scalar_prefetch = 0 : i64, scratch_operands = 2 : i64, tpu.core_type = #tpu.core_type<tc>, window_params = [{transform_indices = @transform_0, window_bounds = array<i64: 8, 16, 128>}, {transform_indices = @transform_1, window_bounds = array<i64: 8, 1, 16>}, {pipeline_mode = #tpu.pipeline_mode<synchronous>, transform_indices = @transform_2, window_bounds = array<i64: 1, 128>}, {pipeline_mode = #tpu.pipeline_mode<synchronous>, transform_indices = @transform_3, window_bounds = array<i64: 1, 128>}, {pipeline_mode = #tpu.pipeline_mode<synchronous>, transform_indices = @transform_4, window_bounds = array<i64: 128, 384>}, {pipeline_mode = #tpu.pipeline_mode<synchronous>, transform_indices = @transform_5, window_bounds = array<i64: 1, 384>}, {pipeline_mode = #tpu.pipeline_mode<synchronous>, transform_indices = @transform_6, window_bounds = array<i64: 128, 128>}, {pipeline_mode = #tpu.pipeline_mode<synchronous>, transform_indices = @transform_7, window_bounds = array<i64: 1, 128>}, {pipeline_mode = #tpu.pipeline_mode<synchronous>, transform_indices = @transform_8, window_bounds = array<i64: 1, 128>}, {pipeline_mode = #tpu.pipeline_mode<synchronous>, transform_indices = @transform_9, window_bounds = array<i64: 1, 128>}, {pipeline_mode = #tpu.pipeline_mode<synchronous>, transform_indices = @transform_10, window_bounds = array<i64: 128, 256>}, {pipeline_mode = #tpu.pipeline_mode<synchronous>, transform_indices = @transform_11, window_bounds = array<i64: 1, 256>}, {pipeline_mode = #tpu.pipeline_mode<synchronous>, transform_indices = @transform_12, window_bounds = array<i64: 256, 128>}, {pipeline_mode = #tpu.pipeline_mode<synchronous>, transform_indices = @transform_13, window_bounds = array<i64: 1, 128>}, {transform_indices = @transform_14, window_bounds = array<i64: 8, 16, 128>}]} {
    %c0 = arith.constant 0 : index
    %c0_0 = arith.constant 0 : index
    %c0_1 = arith.constant 0 : index
    %0 = vector.load %arg1[%c0, %c0_0, %c0_1] : memref<8x16x128xf32, #tpu.memory_space<vmem>>, vector<8x16x128xf32>
    %1 = vector.shape_cast %0 : vector<8x16x128xf32> to vector<128x128xf32>
    %c0_2 = arith.constant 0 : index
    %c0_3 = arith.constant 0 : index
    %2 = vector.load %arg3[%c0_2, %c0_3] : memref<1x128xf32, #tpu.memory_space<vmem>>, vector<1x128xf32>
    %c0_4 = arith.constant 0 : index
    %c0_5 = arith.constant 0 : index
    %3 = vector.load %arg4[%c0_4, %c0_5] : memref<1x128xf32, #tpu.memory_space<vmem>>, vector<1x128xf32>
    %cst = arith.constant dense<0.000000e+00> : vector<128xf32>
    %4 = vector.multi_reduction <add>, %1, %cst [1] : vector<128x128xf32> to vector<128xf32>
    %5 = vector.shape_cast %4 : vector<128xf32> to vector<128x1xf32>
    %cst_6 = arith.constant 1.280000e+02 : f32
    %6 = vector.broadcast %cst_6 : f32 to vector<128x1xf32>
    %7 = arith.divf %5, %6 : vector<128x1xf32>
    %8 = vector.broadcast %7 : vector<128x1xf32> to vector<128x128xf32>
    %9 = arith.subf %1, %8 : vector<128x128xf32>
    %10 = arith.mulf %9, %9 : vector<128x128xf32>
    %cst_7 = arith.constant dense<0.000000e+00> : vector<128xf32>
    %11 = vector.multi_reduction <add>, %10, %cst_7 [1] : vector<128x128xf32> to vector<128xf32>
    %12 = vector.shape_cast %11 : vector<128xf32> to vector<128x1xf32>
    %cst_8 = arith.constant 1.280000e+02 : f32
    %13 = vector.broadcast %cst_8 : f32 to vector<128x1xf32>
    %14 = arith.divf %12, %13 : vector<128x1xf32>
    %15 = vector.broadcast %7 : vector<128x1xf32> to vector<128x128xf32>
    %16 = arith.subf %1, %15 : vector<128x128xf32>
    %cst_9 = arith.constant 9.99999974E-6 : f32
    %17 = vector.broadcast %cst_9 : f32 to vector<128x1xf32>
    %18 = arith.addf %14, %17 : vector<128x1xf32>
    %19 = math.rsqrt %18 : vector<128x1xf32>
    %20 = vector.broadcast %19 : vector<128x1xf32> to vector<128x128xf32>
    %21 = arith.mulf %16, %20 : vector<128x128xf32>
    %22 = vector.broadcast %2 : vector<1x128xf32> to vector<128x128xf32>
    %23 = arith.mulf %21, %22 : vector<128x128xf32>
    %24 = vector.broadcast %3 : vector<1x128xf32> to vector<128x128xf32>
    %25 = arith.addf %23, %24 : vector<128x128xf32>
    %26 = arith.truncf %25 : vector<128x128xf32> to vector<128x128xbf16>
    %c0_10 = arith.constant 0 : index
    %c0_11 = arith.constant 0 : index
    %27 = vector.load %arg5[%c0_10, %c0_11] : memref<128x384xbf16, #tpu.memory_space<vmem>>, vector<128x384xbf16>
    %cst_12 = arith.constant dense<0.000000e+00> : vector<128x384xf32>
    %28 = tpu.matmul %26, %27, %cst_12 {dimension_numbers = #tpu.dot_dimension_numbers<[1], [0], [0], [1], [0, 0, 1, 1], [], []>} : vector<128x128xbf16>, vector<128x384xbf16>, vector<128x384xf32> -> vector<128x384xf32>
    %c0_13 = arith.constant 0 : index
    %c0_14 = arith.constant 0 : index
    %29 = vector.load %arg6[%c0_13, %c0_14] : memref<1x384xf32, #tpu.memory_space<vmem>>, vector<1x384xf32>
    %30 = vector.broadcast %29 : vector<1x384xf32> to vector<128x384xf32>
    %31 = arith.addf %28, %30 : vector<128x384xf32>
    %c0_15 = arith.constant 0 : index
    %c0_16 = arith.constant 0 : index
    %32 = vector.load %arg16[%c0_15, %c0_16] : memref<128x384xf32, #tpu.memory_space<vmem>>, vector<128x384xf32>
    tpu.vector_store %arg16[%c0_15, %c0_16], %31 {strides = array<i32>} : memref<128x384xf32, #tpu.memory_space<vmem>>, vector<128x384xf32>,
    %c0_i32 = arith.constant 0 : i32
    %c8_i32 = arith.constant 8 : i32
    %33 = arith.addi %c0_i32, %c8_i32 : i32
    %c1_i32 = arith.constant 1 : i32
    scf.for %arg18 = %c0_i32 to %33 step %c1_i32  : i32 {
      %c16_i32 = arith.constant 16 : i32
      %85 = arith.muli %arg18, %c16_i32 : i32
      %86 = tpu.assume_multiple %85, 16 : i32
      %87 = arith.index_cast %86 : i32 to index
      %c0_51 = arith.constant 0 : index
      %88 = vector.load %arg16[%87, %c0_51] : memref<128x384xf32, #tpu.memory_space<vmem>>, vector<16x384xf32>
      %89 = arith.index_cast %arg18 : i32 to index
      %c0_52 = arith.constant 0 : index
      %c0_53 = arith.constant 0 : index
      %90 = vector.load %arg2[%89, %c0_52, %c0_53] : memref<8x1x16xf32, #tpu.memory_space<vmem>>, vector<1x1x16xf32>
      %91 = vector.shape_cast %90 : vector<1x1x16xf32> to vector<1x16xf32>
      %cst_54 = arith.constant 0.000000e+00 : f32
      %92 = vector.broadcast %cst_54 : f32 to vector<1x16xf32>
      %93 = arith.cmpf oeq, %91, %92 : vector<1x16xf32>
      %cst_55 = arith.constant -1.000000e+30 : f32
      %cst_56 = arith.constant 0.000000e+00 : f32
      %94 = vector.broadcast %cst_55 : f32 to vector<1x16xf32>
      %95 = vector.broadcast %cst_56 : f32 to vector<1x16xf32>
      %96 = arith.select %93, %94, %95 : vector<1x16xi1>, vector<1x16xf32>
      %cst_57 = arith.constant 0.000000e+00 : f32
      %97 = vector.broadcast %cst_57 : f32 to vector<1x16xf32>
      %98 = arith.cmpf oeq, %91, %97 : vector<1x16xf32>
      %cst_58 = arith.constant 0.000000e+00 : f32
      %cst_59 = arith.constant 1.000000e+00 : f32
      %99 = vector.broadcast %cst_58 : f32 to vector<1x16xf32>
      %100 = vector.broadcast %cst_59 : f32 to vector<1x16xf32>
      %101 = arith.select %98, %99, %100 : vector<1x16xi1>, vector<1x16xf32>
      %cst_60 = arith.constant dense<0xFF800000> : vector<1xf32>
      %102 = vector.multi_reduction <maximumf>, %101, %cst_60 [1] : vector<1x16xf32> to vector<1xf32>
      %103 = vector.shape_cast %102 : vector<1xf32> to vector<1x1xf32>
      %104 = vector.extract_strided_slice %88 {offsets = [0, 0], sizes = [16, 128], strides = [1, 1]} : vector<16x384xf32> to vector<16x128xf32>
      %105 = arith.truncf %104 : vector<16x128xf32> to vector<16x128xbf16>
      %106 = vector.extract_strided_slice %88 {offsets = [0, 128], sizes = [16, 128], strides = [1, 1]} : vector<16x384xf32> to vector<16x128xf32>
      %107 = arith.truncf %106 : vector<16x128xf32> to vector<16x128xbf16>
      %108 = vector.extract_strided_slice %88 {offsets = [0, 256], sizes = [16, 128], strides = [1, 1]} : vector<16x384xf32> to vector<16x128xf32>
      %109 = arith.truncf %108 : vector<16x128xf32> to vector<16x128xbf16>
      %110 = vector.extract_strided_slice %105 {offsets = [0, 0], sizes = [16, 32], strides = [1, 1]} : vector<16x128xbf16> to vector<16x32xbf16>
      %111 = vector.extract_strided_slice %107 {offsets = [0, 0], sizes = [16, 32], strides = [1, 1]} : vector<16x128xbf16> to vector<16x32xbf16>
      %112 = vector.extract_strided_slice %109 {offsets = [0, 0], sizes = [16, 32], strides = [1, 1]} : vector<16x128xbf16> to vector<16x32xbf16>
      %cst_61 = arith.constant dense<0.000000e+00> : vector<16x16xf32>
      %113 = tpu.matmul %110, %111, %cst_61 {dimension_numbers = #tpu.dot_dimension_numbers<[1], [1], [0], [0], [0, 0, 1, 0], [], []>} : vector<16x32xbf16>, vector<16x32xbf16>, vector<16x16xf32> -> vector<16x16xf32>
      %114 = vector.broadcast %96 : vector<1x16xf32> to vector<16x16xf32>
      %115 = arith.addf %113, %114 : vector<16x16xf32>
      %cst_62 = arith.constant dense<0xFF800000> : vector<16xf32>
      %116 = vector.multi_reduction <maximumf>, %115, %cst_62 [1] : vector<16x16xf32> to vector<16xf32>
      %117 = vector.shape_cast %116 : vector<16xf32> to vector<16x1xf32>
      %118 = vector.broadcast %117 : vector<16x1xf32> to vector<16x16xf32>
      %119 = arith.subf %115, %118 : vector<16x16xf32>
      %120 = math.exp %119 : vector<16x16xf32>
      %cst_63 = arith.constant dense<0.000000e+00> : vector<16xf32>
      %121 = vector.multi_reduction <add>, %120, %cst_63 [1] : vector<16x16xf32> to vector<16xf32>
      %122 = vector.shape_cast %121 : vector<16xf32> to vector<16x1xf32>
      %123 = arith.truncf %120 : vector<16x16xf32> to vector<16x16xbf16>
      %cst_64 = arith.constant dense<0.000000e+00> : vector<16x32xf32>
      %124 = tpu.matmul %123, %112, %cst_64 {dimension_numbers = #tpu.dot_dimension_numbers<[1], [0], [0], [1], [0, 0, 1, 1], [], []>} : vector<16x16xbf16>, vector<16x32xbf16>, vector<16x32xf32> -> vector<16x32xf32>
      %cst_65 = arith.constant 1.000000e-30 : f32
      %125 = vector.broadcast %cst_65 : f32 to vector<16x1xf32>
      %126 = arith.maximumf %122, %125 : vector<16x1xf32>
      %127 = tpu.reciprocal %126 {approx = true} : vector<16x1xf32> -> vector<16x1xf32>
      %128 = vector.broadcast %127 : vector<16x1xf32> to vector<16x32xf32>
      %129 = arith.mulf %124, %128 : vector<16x32xf32>
      %130 = vector.extract_strided_slice %105 {offsets = [0, 32], sizes = [16, 32], strides = [1, 1]} : vector<16x128xbf16> to vector<16x32xbf16>
      %131 = vector.extract_strided_slice %107 {offsets = [0, 32], sizes = [16, 32], strides = [1, 1]} : vector<16x128xbf16> to vector<16x32xbf16>
      %132 = vector.extract_strided_slice %109 {offsets = [0, 32], sizes = [16, 32], strides = [1, 1]} : vector<16x128xbf16> to vector<16x32xbf16>
      %cst_66 = arith.constant dense<0.000000e+00> : vector<16x16xf32>
      %133 = tpu.matmul %130, %131, %cst_66 {dimension_numbers = #tpu.dot_dimension_numbers<[1], [1], [0], [0], [0, 0, 1, 0], [], []>} : vector<16x32xbf16>, vector<16x32xbf16>, vector<16x16xf32> -> vector<16x16xf32>
      %134 = vector.broadcast %96 : vector<1x16xf32> to vector<16x16xf32>
      %135 = arith.addf %133, %134 : vector<16x16xf32>
      %cst_67 = arith.constant dense<0xFF800000> : vector<16xf32>
      %136 = vector.multi_reduction <maximumf>, %135, %cst_67 [1] : vector<16x16xf32> to vector<16xf32>
      %137 = vector.shape_cast %136 : vector<16xf32> to vector<16x1xf32>
      %138 = vector.broadcast %137 : vector<16x1xf32> to vector<16x16xf32>
      %139 = arith.subf %135, %138 : vector<16x16xf32>
      %140 = math.exp %139 : vector<16x16xf32>
      %cst_68 = arith.constant dense<0.000000e+00> : vector<16xf32>
      %141 = vector.multi_reduction <add>, %140, %cst_68 [1] : vector<16x16xf32> to vector<16xf32>
      %142 = vector.shape_cast %141 : vector<16xf32> to vector<16x1xf32>
      %143 = arith.truncf %140 : vector<16x16xf32> to vector<16x16xbf16>
      %cst_69 = arith.constant dense<0.000000e+00> : vector<16x32xf32>
      %144 = tpu.matmul %143, %132, %cst_69 {dimension_numbers = #tpu.dot_dimension_numbers<[1], [0], [0], [1], [0, 0, 1, 1], [], []>} : vector<16x16xbf16>, vector<16x32xbf16>, vector<16x32xf32> -> vector<16x32xf32>
      %cst_70 = arith.constant 1.000000e-30 : f32
      %145 = vector.broadcast %cst_70 : f32 to vector<16x1xf32>
      %146 = arith.maximumf %142, %145 : vector<16x1xf32>
      %147 = tpu.reciprocal %146 {approx = true} : vector<16x1xf32> -> vector<16x1xf32>
      %148 = vector.broadcast %147 : vector<16x1xf32> to vector<16x32xf32>
      %149 = arith.mulf %144, %148 : vector<16x32xf32>
      %150 = vector.extract_strided_slice %105 {offsets = [0, 64], sizes = [16, 32], strides = [1, 1]} : vector<16x128xbf16> to vector<16x32xbf16>
      %151 = vector.extract_strided_slice %107 {offsets = [0, 64], sizes = [16, 32], strides = [1, 1]} : vector<16x128xbf16> to vector<16x32xbf16>
      %152 = vector.extract_strided_slice %109 {offsets = [0, 64], sizes = [16, 32], strides = [1, 1]} : vector<16x128xbf16> to vector<16x32xbf16>
      %cst_71 = arith.constant dense<0.000000e+00> : vector<16x16xf32>
      %153 = tpu.matmul %150, %151, %cst_71 {dimension_numbers = #tpu.dot_dimension_numbers<[1], [1], [0], [0], [0, 0, 1, 0], [], []>} : vector<16x32xbf16>, vector<16x32xbf16>, vector<16x16xf32> -> vector<16x16xf32>
      %154 = vector.broadcast %96 : vector<1x16xf32> to vector<16x16xf32>
      %155 = arith.addf %153, %154 : vector<16x16xf32>
      %cst_72 = arith.constant dense<0xFF800000> : vector<16xf32>
      %156 = vector.multi_reduction <maximumf>, %155, %cst_72 [1] : vector<16x16xf32> to vector<16xf32>
      %157 = vector.shape_cast %156 : vector<16xf32> to vector<16x1xf32>
      %158 = vector.broadcast %157 : vector<16x1xf32> to vector<16x16xf32>
      %159 = arith.subf %155, %158 : vector<16x16xf32>
      %160 = math.exp %159 : vector<16x16xf32>
      %cst_73 = arith.constant dense<0.000000e+00> : vector<16xf32>
      %161 = vector.multi_reduction <add>, %160, %cst_73 [1] : vector<16x16xf32> to vector<16xf32>
      %162 = vector.shape_cast %161 : vector<16xf32> to vector<16x1xf32>
      %163 = arith.truncf %160 : vector<16x16xf32> to vector<16x16xbf16>
      %cst_74 = arith.constant dense<0.000000e+00> : vector<16x32xf32>
      %164 = tpu.matmul %163, %152, %cst_74 {dimension_numbers = #tpu.dot_dimension_numbers<[1], [0], [0], [1], [0, 0, 1, 1], [], []>} : vector<16x16xbf16>, vector<16x32xbf16>, vector<16x32xf32> -> vector<16x32xf32>
      %cst_75 = arith.constant 1.000000e-30 : f32
      %165 = vector.broadcast %cst_75 : f32 to vector<16x1xf32>
      %166 = arith.maximumf %162, %165 : vector<16x1xf32>
      %167 = tpu.reciprocal %166 {approx = true} : vector<16x1xf32> -> vector<16x1xf32>
      %168 = vector.broadcast %167 : vector<16x1xf32> to vector<16x32xf32>
      %169 = arith.mulf %164, %168 : vector<16x32xf32>
      %170 = vector.extract_strided_slice %105 {offsets = [0, 96], sizes = [16, 32], strides = [1, 1]} : vector<16x128xbf16> to vector<16x32xbf16>
      %171 = vector.extract_strided_slice %107 {offsets = [0, 96], sizes = [16, 32], strides = [1, 1]} : vector<16x128xbf16> to vector<16x32xbf16>
      %172 = vector.extract_strided_slice %109 {offsets = [0, 96], sizes = [16, 32], strides = [1, 1]} : vector<16x128xbf16> to vector<16x32xbf16>
      %cst_76 = arith.constant dense<0.000000e+00> : vector<16x16xf32>
      %173 = tpu.matmul %170, %171, %cst_76 {dimension_numbers = #tpu.dot_dimension_numbers<[1], [1], [0], [0], [0, 0, 1, 0], [], []>} : vector<16x32xbf16>, vector<16x32xbf16>, vector<16x16xf32> -> vector<16x16xf32>
      %174 = vector.broadcast %96 : vector<1x16xf32> to vector<16x16xf32>
      %175 = arith.addf %173, %174 : vector<16x16xf32>
      %cst_77 = arith.constant dense<0xFF800000> : vector<16xf32>
      %176 = vector.multi_reduction <maximumf>, %175, %cst_77 [1] : vector<16x16xf32> to vector<16xf32>
      %177 = vector.shape_cast %176 : vector<16xf32> to vector<16x1xf32>
      %178 = vector.broadcast %177 : vector<16x1xf32> to vector<16x16xf32>
      %179 = arith.subf %175, %178 : vector<16x16xf32>
      %180 = math.exp %179 : vector<16x16xf32>
      %cst_78 = arith.constant dense<0.000000e+00> : vector<16xf32>
      %181 = vector.multi_reduction <add>, %180, %cst_78 [1] : vector<16x16xf32> to vector<16xf32>
      %182 = vector.shape_cast %181 : vector<16xf32> to vector<16x1xf32>
      %183 = arith.truncf %180 : vector<16x16xf32> to vector<16x16xbf16>
      %cst_79 = arith.constant dense<0.000000e+00> : vector<16x32xf32>
      %184 = tpu.matmul %183, %172, %cst_79 {dimension_numbers = #tpu.dot_dimension_numbers<[1], [0], [0], [1], [0, 0, 1, 1], [], []>} : vector<16x16xbf16>, vector<16x32xbf16>, vector<16x32xf32> -> vector<16x32xf32>
      %cst_80 = arith.constant 1.000000e-30 : f32
      %185 = vector.broadcast %cst_80 : f32 to vector<16x1xf32>
      %186 = arith.maximumf %182, %185 : vector<16x1xf32>
      %187 = tpu.reciprocal %186 {approx = true} : vector<16x1xf32> -> vector<16x1xf32>
      %188 = vector.broadcast %187 : vector<16x1xf32> to vector<16x32xf32>
      %189 = arith.mulf %184, %188 : vector<16x32xf32>
      %190 = tpu.concatenate %129, %149, %169, %189 in 1 : vector<16x32xf32>, vector<16x32xf32>, vector<16x32xf32>, vector<16x32xf32> -> vector<16x128xf32>
      %191 = vector.broadcast %103 : vector<1x1xf32> to vector<16x128xf32>
      %192 = arith.mulf %190, %191 : vector<16x128xf32>
      %193 = arith.index_cast %86 : i32 to index
      %c0_81 = arith.constant 0 : index
      %194 = vector.load %arg17[%193, %c0_81] : memref<128x128xf32, #tpu.memory_space<vmem>>, vector<16x128xf32>
      tpu.vector_store %arg17[%193, %c0_81], %192 {strides = array<i32>} : memref<128x128xf32, #tpu.memory_space<vmem>>, vector<16x128xf32>,
    }
    %c8_i32_17 = arith.constant 8 : i32
    %c0_18 = arith.constant 0 : index
    %c0_19 = arith.constant 0 : index
    %34 = vector.load %arg17[%c0_18, %c0_19] : memref<128x128xf32, #tpu.memory_space<vmem>>, vector<128x128xf32>
    %35 = arith.truncf %34 : vector<128x128xf32> to vector<128x128xbf16>
    %c0_20 = arith.constant 0 : index
    %c0_21 = arith.constant 0 : index
    %36 = vector.load %arg7[%c0_20, %c0_21] : memref<128x128xbf16, #tpu.memory_space<vmem>>, vector<128x128xbf16>
    %cst_22 = arith.constant dense<0.000000e+00> : vector<128x128xf32>
    %37 = tpu.matmul %35, %36, %cst_22 {dimension_numbers = #tpu.dot_dimension_numbers<[1], [0], [0], [1], [0, 0, 1, 1], [], []>} : vector<128x128xbf16>, vector<128x128xbf16>, vector<128x128xf32> -> vector<128x128xf32>
    %c0_23 = arith.constant 0 : index
    %c0_24 = arith.constant 0 : index
    %38 = vector.load %arg8[%c0_23, %c0_24] : memref<1x128xf32, #tpu.memory_space<vmem>>, vector<1x128xf32>
    %39 = vector.broadcast %38 : vector<1x128xf32> to vector<128x128xf32>
    %40 = arith.addf %37, %39 : vector<128x128xf32>
    %c0_25 = arith.constant 0 : index
    %c0_26 = arith.constant 0 : index
    %c0_27 = arith.constant 0 : index
    %41 = vector.load %arg1[%c0_25, %c0_26, %c0_27] : memref<8x16x128xf32, #tpu.memory_space<vmem>>, vector<8x16x128xf32>
    %42 = vector.shape_cast %41 : vector<8x16x128xf32> to vector<128x128xf32>
    %43 = arith.addf %42, %40 : vector<128x128xf32>
    %c0_28 = arith.constant 0 : index
    %c0_29 = arith.constant 0 : index
    %44 = vector.load %arg9[%c0_28, %c0_29] : memref<1x128xf32, #tpu.memory_space<vmem>>, vector<1x128xf32>
    %c0_30 = arith.constant 0 : index
    %c0_31 = arith.constant 0 : index
    %45 = vector.load %arg10[%c0_30, %c0_31] : memref<1x128xf32, #tpu.memory_space<vmem>>, vector<1x128xf32>
    %cst_32 = arith.constant dense<0.000000e+00> : vector<128xf32>
    %46 = vector.multi_reduction <add>, %43, %cst_32 [1] : vector<128x128xf32> to vector<128xf32>
    %47 = vector.shape_cast %46 : vector<128xf32> to vector<128x1xf32>
    %cst_33 = arith.constant 1.280000e+02 : f32
    %48 = vector.broadcast %cst_33 : f32 to vector<128x1xf32>
    %49 = arith.divf %47, %48 : vector<128x1xf32>
    %50 = vector.broadcast %49 : vector<128x1xf32> to vector<128x128xf32>
    %51 = arith.subf %43, %50 : vector<128x128xf32>
    %52 = arith.mulf %51, %51 : vector<128x128xf32>
    %cst_34 = arith.constant dense<0.000000e+00> : vector<128xf32>
    %53 = vector.multi_reduction <add>, %52, %cst_34 [1] : vector<128x128xf32> to vector<128xf32>
    %54 = vector.shape_cast %53 : vector<128xf32> to vector<128x1xf32>
    %cst_35 = arith.constant 1.280000e+02 : f32
    %55 = vector.broadcast %cst_35 : f32 to vector<128x1xf32>
    %56 = arith.divf %54, %55 : vector<128x1xf32>
    %57 = vector.broadcast %49 : vector<128x1xf32> to vector<128x128xf32>
    %58 = arith.subf %43, %57 : vector<128x128xf32>
    %cst_36 = arith.constant 9.99999974E-6 : f32
    %59 = vector.broadcast %cst_36 : f32 to vector<128x1xf32>
    %60 = arith.addf %56, %59 : vector<128x1xf32>
    %61 = math.rsqrt %60 : vector<128x1xf32>
    %62 = vector.broadcast %61 : vector<128x1xf32> to vector<128x128xf32>
    %63 = arith.mulf %58, %62 : vector<128x128xf32>
    %64 = vector.broadcast %44 : vector<1x128xf32> to vector<128x128xf32>
    %65 = arith.mulf %63, %64 : vector<128x128xf32>
    %66 = vector.broadcast %45 : vector<1x128xf32> to vector<128x128xf32>
    %67 = arith.addf %65, %66 : vector<128x128xf32>
    %68 = arith.truncf %67 : vector<128x128xf32> to vector<128x128xbf16>
    %c0_37 = arith.constant 0 : index
    %c0_38 = arith.constant 0 : index
    %69 = vector.load %arg11[%c0_37, %c0_38] : memref<128x256xbf16, #tpu.memory_space<vmem>>, vector<128x256xbf16>
    %cst_39 = arith.constant dense<0.000000e+00> : vector<128x256xf32>
    %70 = tpu.matmul %68, %69, %cst_39 {dimension_numbers = #tpu.dot_dimension_numbers<[1], [0], [0], [1], [0, 0, 1, 1], [], []>} : vector<128x128xbf16>, vector<128x256xbf16>, vector<128x256xf32> -> vector<128x256xf32>
    %c0_40 = arith.constant 0 : index
    %c0_41 = arith.constant 0 : index
    %71 = vector.load %arg12[%c0_40, %c0_41] : memref<1x256xf32, #tpu.memory_space<vmem>>, vector<1x256xf32>
    %72 = vector.broadcast %71 : vector<1x256xf32> to vector<128x256xf32>
    %73 = arith.addf %70, %72 : vector<128x256xf32>
    %cst_42 = arith.constant 0.000000e+00 : f32
    %74 = vector.broadcast %cst_42 : f32 to vector<128x256xf32>
    %75 = arith.maximumf %73, %74 : vector<128x256xf32>
    %76 = arith.truncf %75 : vector<128x256xf32> to vector<128x256xbf16>
    %c0_43 = arith.constant 0 : index
    %c0_44 = arith.constant 0 : index
    %77 = vector.load %arg13[%c0_43, %c0_44] : memref<256x128xbf16, #tpu.memory_space<vmem>>, vector<256x128xbf16>
    %cst_45 = arith.constant dense<0.000000e+00> : vector<128x128xf32>
    %78 = tpu.matmul %76, %77, %cst_45 {dimension_numbers = #tpu.dot_dimension_numbers<[1], [0], [0], [1], [0, 0, 1, 1], [], []>} : vector<128x256xbf16>, vector<256x128xbf16>, vector<128x128xf32> -> vector<128x128xf32>
    %c0_46 = arith.constant 0 : index
    %c0_47 = arith.constant 0 : index
    %79 = vector.load %arg14[%c0_46, %c0_47] : memref<1x128xf32, #tpu.memory_space<vmem>>, vector<1x128xf32>
    %80 = vector.broadcast %79 : vector<1x128xf32> to vector<128x128xf32>
    %81 = arith.addf %78, %80 : vector<128x128xf32>
    %82 = arith.addf %43, %81 : vector<128x128xf32>
    %83 = vector.shape_cast %82 : vector<128x128xf32> to vector<8x16x128xf32>
    %c0_48 = arith.constant 0 : index
    %c0_49 = arith.constant 0 : index
    %c0_50 = arith.constant 0 : index
    %84 = vector.load %arg15[%c0_48, %c0_49, %c0_50] : memref<8x16x128xf32, #tpu.memory_space<vmem>>, vector<8x16x128xf32>
    tpu.vector_store %arg15[%c0_48, %c0_49, %c0_50], %83 {strides = array<i32>} : memref<8x16x128xf32, #tpu.memory_space<vmem>>, vector<8x16x128xf32>,
    return
  }
  func.func @transform_0(%arg0: i32) -> (i32, i32, i32) {
    %c0_i32 = arith.constant 0 : i32
    %c0_i32_0 = arith.constant 0 : i32
    %c0_i32_1 = arith.constant 0 : i32
    return %arg0, %c0_i32, %c0_i32_0 : i32, i32, i32
  }
  func.func @transform_1(%arg0: i32) -> (i32, i32, i32) {
    %c0_i32 = arith.constant 0 : i32
    %c0_i32_0 = arith.constant 0 : i32
    %c0_i32_1 = arith.constant 0 : i32
    return %arg0, %c0_i32, %c0_i32_0 : i32, i32, i32
  }
  func.func @transform_2(%arg0: i32) -> (i32, i32) {
    %c0_i32 = arith.constant 0 : i32
    %c0_i32_0 = arith.constant 0 : i32
    %c0_i32_1 = arith.constant 0 : i32
    return %c0_i32, %c0_i32_0 : i32, i32
  }
  func.func @transform_3(%arg0: i32) -> (i32, i32) {
    %c0_i32 = arith.constant 0 : i32
    %c0_i32_0 = arith.constant 0 : i32
    %c0_i32_1 = arith.constant 0 : i32
    return %c0_i32, %c0_i32_0 : i32, i32
  }
  func.func @transform_4(%arg0: i32) -> (i32, i32) {
    %c0_i32 = arith.constant 0 : i32
    %c0_i32_0 = arith.constant 0 : i32
    %c0_i32_1 = arith.constant 0 : i32
    return %c0_i32, %c0_i32_0 : i32, i32
  }
  func.func @transform_5(%arg0: i32) -> (i32, i32) {
    %c0_i32 = arith.constant 0 : i32
    %c0_i32_0 = arith.constant 0 : i32
    %c0_i32_1 = arith.constant 0 : i32
    return %c0_i32, %c0_i32_0 : i32, i32
  }
  func.func @transform_6(%arg0: i32) -> (i32, i32) {
    %c0_i32 = arith.constant 0 : i32
    %c0_i32_0 = arith.constant 0 : i32
    %c0_i32_1 = arith.constant 0 : i32
    return %c0_i32, %c0_i32_0 : i32, i32
  }
  func.func @transform_7(%arg0: i32) -> (i32, i32) {
    %c0_i32 = arith.constant 0 : i32
    %c0_i32_0 = arith.constant 0 : i32
    %c0_i32_1 = arith.constant 0 : i32
    return %c0_i32, %c0_i32_0 : i32, i32
  }
  func.func @transform_8(%arg0: i32) -> (i32, i32) {
    %c0_i32 = arith.constant 0 : i32
    %c0_i32_0 = arith.constant 0 : i32
    %c0_i32_1 = arith.constant 0 : i32
    return %c0_i32, %c0_i32_0 : i32, i32
  }
  func.func @transform_9(%arg0: i32) -> (i32, i32) {
    %c0_i32 = arith.constant 0 : i32
    %c0_i32_0 = arith.constant 0 : i32
    %c0_i32_1 = arith.constant 0 : i32
    return %c0_i32, %c0_i32_0 : i32, i32
  }
  func.func @transform_10(%arg0: i32) -> (i32, i32) {
    %c0_i32 = arith.constant 0 : i32
    %c0_i32_0 = arith.constant 0 : i32
    %c0_i32_1 = arith.constant 0 : i32
    return %c0_i32, %c0_i32_0 : i32, i32
  }
  func.func @transform_11(%arg0: i32) -> (i32, i32) {
    %c0_i32 = arith.constant 0 : i32
    %c0_i32_0 = arith.constant 0 : i32
    %c0_i32_1 = arith.constant 0 : i32
    return %c0_i32, %c0_i32_0 : i32, i32
  }
  func.func @transform_12(%arg0: i32) -> (i32, i32) {
    %c0_i32 = arith.constant 0 : i32
    %c0_i32_0 = arith.constant 0 : i32
    %c0_i32_1 = arith.constant 0 : i32
    return %c0_i32, %c0_i32_0 : i32, i32
  }
  func.func @transform_13(%arg0: i32) -> (i32, i32) {
    %c0_i32 = arith.constant 0 : i32
    %c0_i32_0 = arith.constant 0 : i32
    %c0_i32_1 = arith.constant 0 : i32
    return %c0_i32, %c0_i32_0 : i32, i32
  }
  func.func @transform_14(%arg0: i32) -> (i32, i32, i32) {
    %c0_i32 = arith.constant 0 : i32
    %c0_i32_0 = arith.constant 0 : i32
    %c0_i32_1 = arith.constant 0 : i32
    return %arg0, %c0_i32, %c0_i32_0 : i32, i32, i32
  }
}

</mosaic_0001>

<llo_original>
// kernel: tpu_custom_call.1
$region0: #{tpu_custom_call.1}
  #allocation0 [shape = 'u32[]', space=smem, size = 0x4, offset = 0x4, fixed_abs, tag = 'smem constant byte address 0x4 - core index']
  #allocation1 [shape = 'u32[144,128]{1,0:T(1,128)}', space=vmem, size = 0x12000, scoped, tag = 'internal scratch']
  #allocation2 [shape = 'f32[128,384]{1,0:T(8,128)}', space=vmem, size = 0x30000, scoped, tag = 'scratch operand']
  #allocation3 [shape = 'f32[128,128]{1,0:T(8,128)}', space=vmem, size = 0x10000, scoped, tag = 'scratch operand']
  %s0 = inlined_call_operand.hbm [shape: f32[16,16,128], index: 0, kind: input, shape index: {}]
  %s1 = inlined_call_operand.hbm [shape: f32[16,1,16], index: 1, kind: input, shape index: {}]
  %s2 = inlined_call_operand.vmem [shape: f32[1,128], index: 2, kind: input, shape index: {}]
  %s3 = inlined_call_operand.vmem [shape: f32[1,128], index: 3, kind: input, shape index: {}]
  %s4 = inlined_call_operand.hbm [shape: bf16[128,384], index: 4, kind: input, shape index: {}]
  %s5 = inlined_call_operand.vmem [shape: f32[1,384], index: 5, kind: input, shape index: {}]
  %s6 = inlined_call_operand.hbm [shape: bf16[128,128], index: 6, kind: input, shape index: {}]
  %s7 = inlined_call_operand.vmem [shape: f32[1,128], index: 7, kind: input, shape index: {}]
  %s8 = inlined_call_operand.vmem [shape: f32[1,128], index: 8, kind: input, shape index: {}]
  %s9 = inlined_call_operand.vmem [shape: f32[1,128], index: 9, kind: input, shape index: {}]
  %s10 = inlined_call_operand.hbm [shape: bf16[128,256], index: 10, kind: input, shape index: {}]
  %s11 = inlined_call_operand.vmem [shape: f32[1,256], index: 11, kind: input, shape index: {}]
  %s12 = inlined_call_operand.hbm [shape: bf16[256,128], index: 12, kind: input, shape index: {}]
  %s13 = inlined_call_operand.vmem [shape: f32[1,128], index: 13, kind: input, shape index: {}]
  %s14 = inlined_call_operand.hbm [shape: f32[16,16,128], index: 14, kind: output, shape index: {}]
  %s15 = sld [smem:[#allocation0]]
  $region120: #{tpu_custom_call.1} parent=0
    _
  %s17 = ssub.s32 1, %s15
  %s18 = scalar_select 0, %s17, %s15
  $region1: #{tpu_custom_call.1} parent=0
    #allocation4 [shape = 'u8[131072]{0}', space=vmem, size = 0x20000, scoped, tag = 'input window, operand 0']
    #allocation5 [shape = 's32[2]{0}', space=sflag, size = 0x8, scoped, tag = 'scoped memory for tpu_custom_call.1']
    #allocation6 [shape = 's32[2]{0}', space=sflag, size = 0x8, scoped, tag = 'scoped memory for tpu_custom_call.1']
    #allocation7 [shape = 'u8[8192]{0}', space=vmem, size = 0x2000, scoped, tag = 'input window, operand 1']
    #allocation8 [shape = 's32[2]{0}', space=sflag, size = 0x8, scoped, tag = 'scoped memory for tpu_custom_call.1']
    #allocation9 [shape = 'u8[98304]{0}', space=vmem, size = 0x18000, scoped, tag = 'input window, operand 4, single buffered']
    #allocation10 [shape = 'u8[32768]{0}', space=vmem, size = 0x8000, scoped, tag = 'input window, operand 6, single buffered']
    #allocation11 [shape = 's32[1]{0}', space=sflag, size = 0x4, scoped, tag = 'scoped memory for tpu_custom_call.1']
    #allocation12 [shape = 'u8[65536]{0}', space=vmem, size = 0x10000, scoped, tag = 'input window, operand 10, single buffered']
    #allocation13 [shape = 'u8[65536]{0}', space=vmem, size = 0x10000, scoped, tag = 'input window, operand 12, single buffered']
    #allocation14 [shape = 's32[1]{0}', space=sflag, size = 0x4, scoped, tag = 'scoped memory for tpu_custom_call.1']
    #allocation15 [shape = 'u8[131072]{0}', space=vmem, size = 0x20000, scoped, tag = 'output window, operand 0']
    %19 = vsyncpa [#allocation5], 0
    %s20 = scalar_lea.sflag [#allocation5], 1
    %21 = vsyncpa %s20, 0
    %22 = vsyncpa [#allocation8], 0
    %s23 = scalar_lea.sflag [#allocation8], 1
    %24 = vsyncpa %s23, 0
    %25 = vsyncpa [#allocation11], 0
    %26 = vsyncpa [#allocation14], 0
    %27 = vsyncpa [#allocation6], 0
    %s28 = scalar_lea.sflag [#allocation6], 1
    %29 = vsyncpa %s28, 0
    loop: start=0, step=1, limit=4
    $region2: #{tpu_custom_call.1} parent=1 // loop_pre_header
      _
    $region3: #{tpu_custom_call.1} parent=1 // loop_header
      %s31 = sphi 0, %s35
      %p32 = scmp.ge.s32.totalorder %s31, 4
      %s41 = sphi 0, %s43
      %s44 = sphi 0, %s41
      %s45 = sphi 0, %s44
      %s61 = sphi 0, %s45
      %s67 = sphi 0, %s69
      %s70 = sphi 0, %s67
      %s71 = sphi 0, %s70
      %s87 = sphi 0, %s71
      %s91 = sphi 0, %s91
      %s93 = sphi 0, %s91
      %s94 = sphi 0, %s93
      %s108 = sphi 0, %s94
      %s112 = sphi 0, %s112
      %s114 = sphi 0, %s112
      %s115 = sphi 0, %s114
      %s129 = sphi 0, %s115
      %s133 = sphi 0, %s133
      %s135 = sphi 0, %s133
      %s136 = sphi 0, %s135
      %s150 = sphi 0, %s136
      %s154 = sphi 0, %s154
      %s156 = sphi 0, %s154
      %s157 = sphi 0, %s156
      %s171 = sphi 0, %s157
      %s175 = sphi 0, %s175
      %s177 = sphi 0, %s175
      %s178 = sphi 0, %s177
      %s192 = sphi 0, %s178
      %s196 = sphi 0, %s196
      %s198 = sphi 0, %s196
      %s199 = sphi 0, %s198
      %s213 = sphi 0, %s199
      %s217 = sphi 0, %s217
      %s219 = sphi 0, %s217
      %s220 = sphi 0, %s219
      %s234 = sphi 0, %s220
      %s238 = sphi 0, %s238
      %s240 = sphi 0, %s238
      %s241 = sphi 0, %s240
      %s255 = sphi 0, %s241
      %s259 = sphi 0, %s259
      %s261 = sphi 0, %s259
      %s262 = sphi 0, %s261
      %s276 = sphi 0, %s262
      %s280 = sphi 0, %s280
      %s282 = sphi 0, %s280
      %s283 = sphi 0, %s282
      %s297 = sphi 0, %s283
      %s301 = sphi 0, %s301
      %s303 = sphi 0, %s301
      %s304 = sphi 0, %s303
      %s318 = sphi 0, %s304
      %s322 = sphi 0, %s322
      %s324 = sphi 0, %s322
      %s325 = sphi 0, %s324
      %s339 = sphi 0, %s325
      %s345 = sphi 0, %s347
      %s348 = sphi 0, %s345
      %s349 = sphi 0, %s348
      %s365 = sphi 0, %s349
    $region4: #{tpu_custom_call.1} parent=1 // loop_header_branch
      %34 = sbr.rel (%p32) target = $region8
    $region5: #{tpu_custom_call.1} parent=1 // loop_body
      %s36 = ssub.s32 %s31, 1
      %s37 = ssub.s32 %s31, 2
      %s38 = sadd.s32 %s31, 1
      %s39 = ssub.s32 %s31, %s38
      %p40 = scmp.eq.s32.totalorder %s39, 0
      %s42 = sadd.s32 %s41, 1
      %s43 = scalar_select %p40, %s41, %s42
      %p46 = pneg %p40
      %p47 = scmp.eq.s32.totalorder %s31, 1
      %p48 = por %p46, %p47
      %p49 = scmp.ne.s32.totalorder %s41, %s44
      %p50 = scmp.eq.s32.totalorder %s31, 0
      %p51 = por %p49, %p50
      %p52 = scmp.ne.s32.totalorder %s41, %s44
      %p53 = scmp.eq.s32.totalorder %s36, 1
      %p54 = por %p52, %p53
      %p55 = scmp.ne.s32.totalorder %s44, %s45
      %p56 = scmp.eq.s32.totalorder %s36, 0
      %p57 = por %p55, %p56
      %p58 = scmp.ne.s32.totalorder %s44, %s45
      %p59 = scmp.eq.s32.totalorder %s37, 1
      %p60 = por %p58, %p59
      %p62 = scmp.ne.s32.totalorder %s45, %s61
      %p63 = scmp.eq.s32.totalorder %s37, 0
      %p64 = por %p62, %p63
      %s65 = ssub.s32 %s31, %s38
      %p66 = scmp.eq.s32.totalorder %s65, 0
      %s68 = sadd.s32 %s67, 1
      %s69 = scalar_select %p66, %s67, %s68
      %p72 = pneg %p66
      %p73 = scmp.eq.s32.totalorder %s31, 1
      %p74 = por %p72, %p73
      %p75 = scmp.ne.s32.totalorder %s67, %s70
      %p76 = scmp.eq.s32.totalorder %s31, 0
      %p77 = por %p75, %p76
      %p78 = scmp.ne.s32.totalorder %s67, %s70
      %p79 = scmp.eq.s32.totalorder %s36, 1
      %p80 = por %p78, %p79
      %p81 = scmp.ne.s32.totalorder %s70, %s71
      %p82 = scmp.eq.s32.totalorder %s36, 0
      %p83 = por %p81, %p82
      %p84 = scmp.ne.s32.totalorder %s70, %s71
      %p85 = scmp.eq.s32.totalorder %s37, 1
      %p86 = por %p84, %p85
      %p88 = scmp.ne.s32.totalorder %s71, %s87
      %p89 = scmp.eq.s32.totalorder %s37, 0
      %p90 = por %p88, %p89
      %s92 = sadd.s32 %s91, 1
      %p95 = scmp.eq.s32.totalorder %s31, 1
      %p96 = scmp.ne.s32.totalorder %s91, %s93
      %p97 = scmp.eq.s32.totalorder %s31, 0
      %p98 = por %p96, %p97
      %p99 = scmp.ne.s32.totalorder %s91, %s93
      %p100 = scmp.eq.s32.totalorder %s36, 1
      %p101 = por %p99, %p100
      %p102 = scmp.ne.s32.totalorder %s93, %s94
      %p103 = scmp.eq.s32.totalorder %s36, 0
      %p104 = por %p102, %p103
      %p105 = scmp.ne.s32.totalorder %s93, %s94
      %p106 = scmp.eq.s32.totalorder %s37, 1
      %p107 = por %p105, %p106
      %p109 = scmp.ne.s32.totalorder %s94, %s108
      %p110 = scmp.eq.s32.totalorder %s37, 0
      %p111 = por %p109, %p110
      %s113 = sadd.s32 %s112, 1
      %p116 = scmp.eq.s32.totalorder %s31, 1
      %p117 = scmp.ne.s32.totalorder %s112, %s114
      %p118 = scmp.eq.s32.totalorder %s31, 0
      %p119 = por %p117, %p118
      %p120 = scmp.ne.s32.totalorder %s112, %s114
      %p121 = scmp.eq.s32.totalorder %s36, 1
      %p122 = por %p120, %p121
      %p123 = scmp.ne.s32.totalorder %s114, %s115
      %p124 = scmp.eq.s32.totalorder %s36, 0
      %p125 = por %p123, %p124
      %p126 = scmp.ne.s32.totalorder %s114, %s115
      %p127 = scmp.eq.s32.totalorder %s37, 1
      %p128 = por %p126, %p127
      %p130 = scmp.ne.s32.totalorder %s115, %s129
      %p131 = scmp.eq.s32.totalorder %s37, 0
      %p132 = por %p130, %p131
      %s134 = sadd.s32 %s133, 1
      %p137 = scmp.eq.s32.totalorder %s31, 1
      %p138 = scmp.ne.s32.totalorder %s133, %s135
      %p139 = scmp.eq.s32.totalorder %s31, 0
      %p140 = por %p138, %p139
      %p141 = scmp.ne.s32.totalorder %s133, %s135
      %p142 = scmp.eq.s32.totalorder %s36, 1
      %p143 = por %p141, %p142
      %p144 = scmp.ne.s32.totalorder %s135, %s136
      %p145 = scmp.eq.s32.totalorder %s36, 0
      %p146 = por %p144, %p145
      %p147 = scmp.ne.s32.totalorder %s135, %s136
      %p148 = scmp.eq.s32.totalorder %s37, 1
      %p149 = por %p147, %p148
      %p151 = scmp.ne.s32.totalorder %s136, %s150
      %p152 = scmp.eq.s32.totalorder %s37, 0
      %p153 = por %p151, %p152
      %s155 = sadd.s32 %s154, 1
      %p158 = scmp.eq.s32.totalorder %s31, 1
      %p159 = scmp.ne.s32.totalorder %s154, %s156
      %p160 = scmp.eq.s32.totalorder %s31, 0
      %p161 = por %p159, %p160
      %p162 = scmp.ne.s32.totalorder %s154, %s156
      %p163 = scmp.eq.s32.totalorder %s36, 1
      %p164 = por %p162, %p163
      %p165 = scmp.ne.s32.totalorder %s156, %s157
      %p166 = scmp.eq.s32.totalorder %s36, 0
      %p167 = por %p165, %p166
      %p168 = scmp.ne.s32.totalorder %s156, %s157
      %p169 = scmp.eq.s32.totalorder %s37, 1
      %p170 = por %p168, %p169
      %p172 = scmp.ne.s32.totalorder %s157, %s171
      %p173 = scmp.eq.s32.totalorder %s37, 0
      %p174 = por %p172, %p173
      %s176 = sadd.s32 %s175, 1
      %p179 = scmp.eq.s32.totalorder %s31, 1
      %p180 = scmp.ne.s32.totalorder %s175, %s177
      %p181 = scmp.eq.s32.totalorder %s31, 0
      %p182 = por %p180, %p181
      %p183 = scmp.ne.s32.totalorder %s175, %s177
      %p184 = scmp.eq.s32.totalorder %s36, 1
      %p185 = por %p183, %p184
      %p186 = scmp.ne.s32.totalorder %s177, %s178
      %p187 = scmp.eq.s32.totalorder %s36, 0
      %p188 = por %p186, %p187
      %p189 = scmp.ne.s32.totalorder %s177, %s178
      %p190 = scmp.eq.s32.totalorder %s37, 1
      %p191 = por %p189, %p190
      %p193 = scmp.ne.s32.totalorder %s178, %s192
      %p194 = scmp.eq.s32.totalorder %s37, 0
      %p195 = por %p193, %p194
      %s197 = sadd.s32 %s196, 1
      %p200 = scmp.eq.s32.totalorder %s31, 1
      %p201 = scmp.ne.s32.totalorder %s196, %s198
      %p202 = scmp.eq.s32.totalorder %s31, 0
      %p203 = por %p201, %p202
      %p204 = scmp.ne.s32.totalorder %s196, %s198
      %p205 = scmp.eq.s32.totalorder %s36, 1
      %p206 = por %p204, %p205
      %p207 = scmp.ne.s32.totalorder %s198, %s199
      %p208 = scmp.eq.s32.totalorder %s36, 0
      %p209 = por %p207, %p208
      %p210 = scmp.ne.s32.totalorder %s198, %s199
      %p211 = scmp.eq.s32.totalorder %s37, 1
      %p212 = por %p210, %p211
      %p214 = scmp.ne.s32.totalorder %s199, %s213
      %p215 = scmp.eq.s32.totalorder %s37, 0
      %p216 = por %p214, %p215
      %s218 = sadd.s32 %s217, 1
      %p221 = scmp.eq.s32.totalorder %s31, 1
      %p222 = scmp.ne.s32.totalorder %s217, %s219
      %p223 = scmp.eq.s32.totalorder %s31, 0
      %p224 = por %p222, %p223
      %p225 = scmp.ne.s32.totalorder %s217, %s219
      %p226 = scmp.eq.s32.totalorder %s36, 1
      %p227 = por %p225, %p226
      %p228 = scmp.ne.s32.totalorder %s219, %s220
      %p229 = scmp.eq.s32.totalorder %s36, 0
      %p230 = por %p228, %p229
      %p231 = scmp.ne.s32.totalorder %s219, %s220
      %p232 = scmp.eq.s32.totalorder %s37, 1
      %p233 = por %p231, %p232
      %p235 = scmp.ne.s32.totalorder %s220, %s234
      %p236 = scmp.eq.s32.totalorder %s37, 0
      %p237 = por %p235, %p236
      %s239 = sadd.s32 %s238, 1
      %p242 = scmp.eq.s32.totalorder %s31, 1
      %p243 = scmp.ne.s32.totalorder %s238, %s240
      %p244 = scmp.eq.s32.totalorder %s31, 0
      %p245 = por %p243, %p244
      %p246 = scmp.ne.s32.totalorder %s238, %s240
      %p247 = scmp.eq.s32.totalorder %s36, 1
      %p248 = por %p246, %p247
      %p249 = scmp.ne.s32.totalorder %s240, %s241
      %p250 = scmp.eq.s32.totalorder %s36, 0
      %p251 = por %p249, %p250
      %p252 = scmp.ne.s32.totalorder %s240, %s241
      %p253 = scmp.eq.s32.totalorder %s37, 1
      %p254 = por %p252, %p253
      %p256 = scmp.ne.s32.totalorder %s241, %s255
      %p257 = scmp.eq.s32.totalorder %s37, 0
      %p258 = por %p256, %p257
      %s260 = sadd.s32 %s259, 1
      %p263 = scmp.eq.s32.totalorder %s31, 1
      %p264 = scmp.ne.s32.totalorder %s259, %s261
      %p265 = scmp.eq.s32.totalorder %s31, 0
      %p266 = por %p264, %p265
      %p267 = scmp.ne.s32.totalorder %s259, %s261
      %p268 = scmp.eq.s32.totalorder %s36, 1
      %p269 = por %p267, %p268
      %p270 = scmp.ne.s32.totalorder %s261, %s262
      %p271 = scmp.eq.s32.totalorder %s36, 0
      %p272 = por %p270, %p271
      %p273 = scmp.ne.s32.totalorder %s261, %s262
      %p274 = scmp.eq.s32.totalorder %s37, 1
      %p275 = por %p273, %p274
      %p277 = scmp.ne.s32.totalorder %s262, %s276
      %p278 = scmp.eq.s32.totalorder %s37, 0
      %p279 = por %p277, %p278
      %s281 = sadd.s32 %s280, 1
      %p284 = scmp.eq.s32.totalorder %s31, 1
      %p285 = scmp.ne.s32.totalorder %s280, %s282
      %p286 = scmp.eq.s32.totalorder %s31, 0
      %p287 = por %p285, %p286
      %p288 = scmp.ne.s32.totalorder %s280, %s282
      %p289 = scmp.eq.s32.totalorder %s36, 1
      %p290 = por %p288, %p289
      %p291 = scmp.ne.s32.totalorder %s282, %s283
      %p292 = scmp.eq.s32.totalorder %s36, 0
      %p293 = por %p291, %p292
      %p294 = scmp.ne.s32.totalorder %s282, %s283
      %p295 = scmp.eq.s32.totalorder %s37, 1
      %p296 = por %p294, %p295
      %p298 = scmp.ne.s32.totalorder %s283, %s297
      %p299 = scmp.eq.s32.totalorder %s37, 0
      %p300 = por %p298, %p299
      %s302 = sadd.s32 %s301, 1
      %p305 = scmp.eq.s32.totalorder %s31, 1
      %p306 = scmp.ne.s32.totalorder %s301, %s303
      %p307 = scmp.eq.s32.totalorder %s31, 0
      %p308 = por %p306, %p307
      %p309 = scmp.ne.s32.totalorder %s301, %s303
      %p310 = scmp.eq.s32.totalorder %s36, 1
      %p311 = por %p309, %p310
      %p312 = scmp.ne.s32.totalorder %s303, %s304
      %p313 = scmp.eq.s32.totalorder %s36, 0
      %p314 = por %p312, %p313
      %p315 = scmp.ne.s32.totalorder %s303, %s304
      %p316 = scmp.eq.s32.totalorder %s37, 1
      %p317 = por %p315, %p316
      %p319 = scmp.ne.s32.totalorder %s304, %s318
      %p320 = scmp.eq.s32.totalorder %s37, 0
      %p321 = por %p319, %p320
      %s323 = sadd.s32 %s322, 1
      %p326 = scmp.eq.s32.totalorder %s31, 1
      %p327 = scmp.ne.s32.totalorder %s322, %s324
      %p328 = scmp.eq.s32.totalorder %s31, 0
      %p329 = por %p327, %p328
      %p330 = scmp.ne.s32.totalorder %s322, %s324
      %p331 = scmp.eq.s32.totalorder %s36, 1
      %p332 = por %p330, %p331
      %p333 = scmp.ne.s32.totalorder %s324, %s325
      %p334 = scmp.eq.s32.totalorder %s36, 0
      %p335 = por %p333, %p334
      %p336 = scmp.ne.s32.totalorder %s324, %s325
      %p337 = scmp.eq.s32.totalorder %s37, 1
      %p338 = por %p336, %p337
      %p340 = scmp.ne.s32.totalorder %s325, %s339
      %p341 = scmp.eq.s32.totalorder %s37, 0
      %p342 = por %p340, %p341
      %s343 = ssub.s32 %s31, %s38
      %p344 = scmp.eq.s32.totalorder %s343, 0
      %s346 = sadd.s32 %s345, 1
      %s347 = scalar_select %p344, %s345, %s346
      %p350 = pneg %p344
      %p351 = scmp.eq.s32.totalorder %s31, 1
      %p352 = por %p350, %p351
      %p353 = scmp.ne.s32.totalorder %s345, %s348
      %p354 = scmp.eq.s32.totalorder %s31, 0
      %p355 = por %p353, %p354
      %p356 = scmp.ne.s32.totalorder %s345, %s348
      %p357 = scmp.eq.s32.totalorder %s36, 1
      %p358 = por %p356, %p357
      %p359 = scmp.ne.s32.totalorder %s348, %s349
      %p360 = scmp.eq.s32.totalorder %s36, 0
      %p361 = por %p359, %p360
      %p362 = scmp.ne.s32.totalorder %s348, %s349
      %p363 = scmp.eq.s32.totalorder %s37, 1
      %p364 = por %p362, %p363
      %p366 = scmp.ne.s32.totalorder %s349, %s365
      %p367 = scmp.eq.s32.totalorder %s37, 0
      %p368 = por %p366, %p367
      %p369 = scmp.le.s32.totalorder 1, %s31
      %p370 = scmp.lt.s32.totalorder %s31, 3
      %p371 = pnand %p369, %p370
      %p372 = pneg %p371
      // Predicated region
      $region9: #{tpu_custom_call.1} parent=5 // pred_check
        _
      $region10: #{tpu_custom_call.1} parent=5 // pred_check_branch
        %374 = sbr.rel (%p371) target = $region12
      $region11: #{tpu_custom_call.1} parent=5 // pred_region
        %s375 = ssub.s32 %s31, 1
        // Predicated region
        $region13: #{tpu_custom_call.1} parent=11 // pred_check
          %p376 = pneg %p104
        $region14: #{tpu_custom_call.1} parent=11 // pred_check_branch
          %378 = sbr.rel (%p376) target = $region16
        $region15: #{tpu_custom_call.1} parent=11 // pred_region
          _
        $region16: #{tpu_custom_call.1} parent=11 // pred_fallthru
          _
        // Predicated region
        $region17: #{tpu_custom_call.1} parent=11 // pred_check
          %p379 = pneg %p125
        $region18: #{tpu_custom_call.1} parent=11 // pred_check_branch
          %381 = sbr.rel (%p379) target = $region20
        $region19: #{tpu_custom_call.1} parent=11 // pred_region
          _
        $region20: #{tpu_custom_call.1} parent=11 // pred_fallthru
          _
        // Predicated region
        $region21: #{tpu_custom_call.1} parent=11 // pred_check
          %p382 = pneg %p146
        $region22: #{tpu_custom_call.1} parent=11 // pred_check_branch
          %384 = sbr.rel (%p382) target = $region24
        $region23: #{tpu_custom_call.1} parent=11 // pred_region
          %s386 = ssub.s32 3072, 3072
          %387 = vsyncadd [#allocation8], %s386
          %s388 = sshll.u32 [#allocation9], 4
          %s389 = int_to_ptr.vmem [resolvable:$true] %s388
          %394 = dma.hbm_to_vmem [thread:$0]  %s4, 3072, %s389, [#allocation8], 192, 192, 12
        $region24: #{tpu_custom_call.1} parent=11 // pred_fallthru
          _
        // Predicated region
        $region25: #{tpu_custom_call.1} parent=11 // pred_check
          %p395 = pneg %p167
        $region26: #{tpu_custom_call.1} parent=11 // pred_check_branch
          %397 = sbr.rel (%p395) target = $region28
        $region27: #{tpu_custom_call.1} parent=11 // pred_region
          _
        $region28: #{tpu_custom_call.1} parent=11 // pred_fallthru
          _
        // Predicated region
        $region29: #{tpu_custom_call.1} parent=11 // pred_check
          %p398 = pneg %p188
        $region30: #{tpu_custom_call.1} parent=11 // pred_check_branch
          %400 = sbr.rel (%p398) target = $region32
        $region31: #{tpu_custom_call.1} parent=11 // pred_region
          %s402 = ssub.s32 1024, 1024
          %403 = vsyncadd [#allocation11], %s402
          %s404 = sshll.u32 [#allocation10], 4
          %s405 = int_to_ptr.vmem [resolvable:$true] %s404
          %410 = dma.hbm_to_vmem [thread:$0]  %s6, 1024, %s405, [#allocation11], 64, 64, 4
        $region32: #{tpu_custom_call.1} parent=11 // pred_fallthru
          _
        // Predicated region
        $region33: #{tpu_custom_call.1} parent=11 // pred_check
          %p411 = pneg %p209
        $region34: #{tpu_custom_call.1} parent=11 // pred_check_branch
          %413 = sbr.rel (%p411) target = $region36
        $region35: #{tpu_custom_call.1} parent=11 // pred_region
          _
        $region36: #{tpu_custom_call.1} parent=11 // pred_fallthru
          _
        // Predicated region
        $region37: #{tpu_custom_call.1} parent=11 // pred_check
          %p414 = pneg %p230
        $region38: #{tpu_custom_call.1} parent=11 // pred_check_branch
          %416 = sbr.rel (%p414) target = $region40
        $region39: #{tpu_custom_call.1} parent=11 // pred_region
          _
        $region40: #{tpu_custom_call.1} parent=11 // pred_fallthru
          _
        // Predicated region
        $region41: #{tpu_custom_call.1} parent=11 // pred_check
          %p417 = pneg %p251
        $region42: #{tpu_custom_call.1} parent=11 // pred_check_branch
          %419 = sbr.rel (%p417) target = $region44
        $region43: #{tpu_custom_call.1} parent=11 // pred_region
          _
        $region44: #{tpu_custom_call.1} parent=11 // pred_fallthru
          _
        // Predicated region
        $region45: #{tpu_custom_call.1} parent=11 // pred_check
          %p420 = pneg %p272
        $region46: #{tpu_custom_call.1} parent=11 // pred_check_branch
          %422 = sbr.rel (%p420) target = $region48
        $region47: #{tpu_custom_call.1} parent=11 // pred_region
          %s424 = ssub.s32 2048, 2048
          %425 = vsyncadd [#allocation11], %s424
          %s426 = sshll.u32 [#allocation12], 4
          %s427 = int_to_ptr.vmem [resolvable:$true] %s426
          %432 = dma.hbm_to_vmem [thread:$0]  %s10, 2048, %s427, [#allocation11], 128, 128, 8
        $region48: #{tpu_custom_call.1} parent=11 // pred_fallthru
          _
        // Predicated region
        $region49: #{tpu_custom_call.1} parent=11 // pred_check
          %p433 = pneg %p293
        $region50: #{tpu_custom_call.1} parent=11 // pred_check_branch
          %435 = sbr.rel (%p433) target = $region52
        $region51: #{tpu_custom_call.1} parent=11 // pred_region
          _
        $region52: #{tpu_custom_call.1} parent=11 // pred_fallthru
          _
        // Predicated region
        $region53: #{tpu_custom_call.1} parent=11 // pred_check
          %p436 = pneg %p314
        $region54: #{tpu_custom_call.1} parent=11 // pred_check_branch
          %438 = sbr.rel (%p436) target = $region56
        $region55: #{tpu_custom_call.1} parent=11 // pred_region
          %s440 = ssub.s32 2048, 2048
          %441 = vsyncadd [#allocation14], %s440
          %s442 = sshll.u32 [#allocation13], 4
          %s443 = int_to_ptr.vmem [resolvable:$true] %s442
          %448 = dma.hbm_to_vmem [thread:$0]  %s12, 2048, %s443, [#allocation14], 64, 64, 4
        $region56: #{tpu_custom_call.1} parent=11 // pred_fallthru
          _
        // Predicated region
        $region57: #{tpu_custom_call.1} parent=11 // pred_check
          %p449 = pneg %p335
        $region58: #{tpu_custom_call.1} parent=11 // pred_check_branch
          %451 = sbr.rel (%p449) target = $region60
        $region59: #{tpu_custom_call.1} parent=11 // pred_region
          _
        $region60: #{tpu_custom_call.1} parent=11 // pred_fallthru
          _
      $region12: #{tpu_custom_call.1} parent=5 // pred_fallthru
        _
      %p452 = scmp.lt.s32.totalorder %s31, 2
      // Predicated region
      $region61: #{tpu_custom_call.1} parent=5 // pred_check
        %p453 = pneg %p452
      $region62: #{tpu_custom_call.1} parent=5 // pred_check_branch
        %455 = sbr.rel (%p453) target = $region64
      $region63: #{tpu_custom_call.1} parent=5 // pred_region
        // Predicated region
        $region65: #{tpu_custom_call.1} parent=63 // pred_check
          %p456 = pneg %p51
        $region66: #{tpu_custom_call.1} parent=63 // pred_check_branch
          %458 = sbr.rel (%p456) target = $region68
        $region67: #{tpu_custom_call.1} parent=63 // pred_region
          %s459 = sand.u32 %s41, 1
          %s460 = scalar_lea.sflag [#allocation5], %s459
          %s461 = sand.u32 %s41, 1
          %s462 = smul.addr %s461, 128
          %s463 = scalar_lea.vmem [#allocation4], %s462
          %s464 = smul.u32 8, %s31
          %s466 = ssub.s32 2048, 2048
          %467 = vsyncadd %s460, %s466
          %s468 = smul.addr %s464, 2
          %s469 = smul.addr %s468, 128
          %s470 = scalar_lea.hbm %s0, %s469
          %s471 = sshll.u32 %s463, 4
          %s472 = int_to_ptr.vmem [resolvable:$true] %s471
          %477 = dma.hbm_to_vmem [thread:$0]  %s470, 2048, %s472, %s460, 128, 128, 8
        $region68: #{tpu_custom_call.1} parent=63 // pred_fallthru
          _
        // Predicated region
        $region69: #{tpu_custom_call.1} parent=63 // pred_check
          %p478 = pneg %p77
        $region70: #{tpu_custom_call.1} parent=63 // pred_check_branch
          %480 = sbr.rel (%p478) target = $region72
        $region71: #{tpu_custom_call.1} parent=63 // pred_region
          %s481 = sand.u32 %s31, 1
          %s482 = scalar_lea.sflag [#allocation8], %s481
          %s483 = sand.u32 %s67, 1
          %s484 = smul.addr %s483, 8
          %s485 = scalar_lea.vmem [#allocation7], %s484
          %s486 = smul.u32 8, %s31
          %s488 = ssub.s32 128, 128
          %489 = vsyncadd %s482, %s488
          %s490 = smul.addr %s486, 16
          %s491 = scalar_lea.hbm %s1, %s490
          %s492 = sshll.u32 %s485, 4
          %s493 = int_to_ptr.vmem [resolvable:$true] %s492
          %498 = dma.hbm_to_vmem [thread:$0]  %s491, 128, %s493, %s482, 16, 16, 1
        $region72: #{tpu_custom_call.1} parent=63 // pred_fallthru
          _
      $region64: #{tpu_custom_call.1} parent=5 // pred_fallthru
        _
      %p499 = scmp.le.s32.totalorder 1, %s31
      %p500 = scmp.lt.s32.totalorder %s31, 3
      %p501 = pnand %p499, %p500
      %p502 = pneg %p501
      // Predicated region
      $region73: #{tpu_custom_call.1} parent=5 // pred_check
        _
      $region74: #{tpu_custom_call.1} parent=5 // pred_check_branch
        %504 = sbr.rel (%p501) target = $region76
      $region75: #{tpu_custom_call.1} parent=5 // pred_region
        %s505 = ssub.s32 %s31, 1
        %s506 = sand.u32 %s44, 1
        %s507 = scalar_lea.sflag [#allocation5], %s506
        %s508 = sand.u32 %s44, 1
        %s509 = smul.addr %s508, 128
        %s510 = scalar_lea.vmem [#allocation4], %s509
        // Predicated region
        $region77: #{tpu_custom_call.1} parent=75 // pred_check
          %p511 = pneg %p57
        $region78: #{tpu_custom_call.1} parent=75 // pred_check_branch
          %513 = sbr.rel (%p511) target = $region80
        $region79: #{tpu_custom_call.1} parent=75 // pred_region
          %514 = dma.done %s507, 2048
        $region80: #{tpu_custom_call.1} parent=75 // pred_fallthru
          _
        %s515 = sand.u32 %s36, 1
        %s516 = scalar_lea.sflag [#allocation8], %s515
        %s517 = sand.u32 %s70, 1
        %s518 = smul.addr %s517, 8
        %s519 = scalar_lea.vmem [#allocation7], %s518
        // Predicated region
        $region81: #{tpu_custom_call.1} parent=75 // pred_check
          %p520 = pneg %p83
        $region82: #{tpu_custom_call.1} parent=75 // pred_check_branch
          %522 = sbr.rel (%p520) target = $region84
        $region83: #{tpu_custom_call.1} parent=75 // pred_region
          %523 = dma.done %s516, 128
        $region84: #{tpu_custom_call.1} parent=75 // pred_fallthru
          _
        // Predicated region
        $region85: #{tpu_custom_call.1} parent=75 // pred_check
          %p524 = pneg %p146
        $region86: #{tpu_custom_call.1} parent=75 // pred_check_branch
          %526 = sbr.rel (%p524) target = $region88
        $region87: #{tpu_custom_call.1} parent=75 // pred_region
          %527 = dma.done [#allocation8], 3072
        $region88: #{tpu_custom_call.1} parent=75 // pred_fallthru
          _
        // Predicated region
        $region89: #{tpu_custom_call.1} parent=75 // pred_check
          %p528 = pneg %p188
        $region90: #{tpu_custom_call.1} parent=75 // pred_check_branch
          %530 = sbr.rel (%p528) target = $region92
        $region91: #{tpu_custom_call.1} parent=75 // pred_region
          %531 = dma.done [#allocation11], 1024
        $region92: #{tpu_custom_call.1} parent=75 // pred_fallthru
          _
        // Predicated region
        $region93: #{tpu_custom_call.1} parent=75 // pred_check
          %p532 = pneg %p272
        $region94: #{tpu_custom_call.1} parent=75 // pred_check_branch
          %534 = sbr.rel (%p532) target = $region96
        $region95: #{tpu_custom_call.1} parent=75 // pred_region
          %535 = dma.done [#allocation11], 2048
        $region96: #{tpu_custom_call.1} parent=75 // pred_fallthru
          _
        // Predicated region
        $region97: #{tpu_custom_call.1} parent=75 // pred_check
          %p536 = pneg %p314
        $region98: #{tpu_custom_call.1} parent=75 // pred_check_branch
          %538 = sbr.rel (%p536) target = $region100
        $region99: #{tpu_custom_call.1} parent=75 // pred_region
          %539 = dma.done [#allocation14], 2048
        $region100: #{tpu_custom_call.1} parent=75 // pred_fallthru
          _
        %s540 = sand.u32 %s44, 1
        %s541 = scalar_lea.sflag [#allocation5], %s540
        %s542 = sand.u32 %s44, 1
        %s543 = smul.addr %s542, 128
        %s544 = scalar_lea.vmem [#allocation4], %s543
        %p545 = pneg %p57
        %p546 = pneg %p54
        %s547 = sand.u32 %s36, 1
        %s548 = scalar_lea.sflag [#allocation8], %s547
        %s549 = sand.u32 %s70, 1
        %s550 = smul.addr %s549, 8
        %s551 = scalar_lea.vmem [#allocation7], %s550
        %p552 = pneg %p83
        %p553 = pneg %p80
        %p554 = pneg %p104
        %p555 = pneg %p101
        %p556 = pneg %p125
        %p557 = pneg %p122
        %p558 = pneg %p146
        %p559 = pneg %p143
        %p560 = pneg %p167
        %p561 = pneg %p164
        %p562 = pneg %p188
        %p563 = pneg %p185
        %p564 = pneg %p209
        %p565 = pneg %p206
        %p566 = pneg %p230
        %p567 = pneg %p227
        %p568 = pneg %p251
        %p569 = pneg %p248
        %p570 = pneg %p272
        %p571 = pneg %p269
        %p572 = pneg %p293
        %p573 = pneg %p290
        %p574 = pneg %p314
        %p575 = pneg %p311
        %p576 = pneg %p335
        %p577 = pneg %p332
        %p578 = pneg %p361
        %p579 = pneg %p358
        %s580 = sand.u32 %s348, 1
        %s581 = scalar_lea.sflag [#allocation6], %s580
        %s582 = sand.u32 %s348, 1
        %s583 = smul.addr %s582, 128
        %s584 = scalar_lea.vmem [#allocation15], %s583
        %s585 = smul.u32 8, %s36
        %s586 = smul.u32 8, %s36
        %s587 = smul.u32 8, %s36
        %v589 = vld [vmem:[%s510] sm:$0xff]
        %v590 = vld [vmem:[%s510 + $0x8] sm:$0xff]
        %v591 = vld [vmem:[%s510 + $0x10] sm:$0xff]
        %v592 = vld [vmem:[%s510 + $0x18] sm:$0xff]
        %v593 = vld [vmem:[%s510 + $0x20] sm:$0xff]
        %v594 = vld [vmem:[%s510 + $0x28] sm:$0xff]
        %v595 = vld [vmem:[%s510 + $0x30] sm:$0xff]
        %v596 = vld [vmem:[%s510 + $0x38] sm:$0xff]
        %v597 = vld [vmem:[%s510 + $0x40] sm:$0xff]
        %v598 = vld [vmem:[%s510 + $0x48] sm:$0xff]
        %v599 = vld [vmem:[%s510 + $0x50] sm:$0xff]
        %v600 = vld [vmem:[%s510 + $0x58] sm:$0xff]
        %v601 = vld [vmem:[%s510 + $0x60] sm:$0xff]
        %v602 = vld [vmem:[%s510 + $0x68] sm:$0xff]
        %v603 = vld [vmem:[%s510 + $0x70] sm:$0xff]
        %v604 = vld [vmem:[%s510 + $0x78] sm:$0xff]
        %v605 = vld [vmem:[%s2] sm:$0x1]
        %v606 = vld [vmem:[%s3] sm:$0x1]
        %607 = vadd.xlane.f32.xlu0 %v589
        %v608 = vpop.xlane.xlu0 %607
        %609 = vadd.xlane.f32.xlu0 %v590
        %v610 = vpop.xlane.xlu0 %609
        %611 = vadd.xlane.f32.xlu0 %v591
        %v612 = vpop.xlane.xlu0 %611
        %613 = vadd.xlane.f32.xlu0 %v592
        %v614 = vpop.xlane.xlu0 %613
        %615 = vadd.xlane.f32.xlu0 %v593
        %v616 = vpop.xlane.xlu0 %615
        %617 = vadd.xlane.f32.xlu0 %v594
        %v618 = vpop.xlane.xlu0 %617
        %619 = vadd.xlane.f32.xlu0 %v595
        %v620 = vpop.xlane.xlu0 %619
        %621 = vadd.xlane.f32.xlu0 %v596
        %v622 = vpop.xlane.xlu0 %621
        %623 = vadd.xlane.f32.xlu0 %v597
        %v624 = vpop.xlane.xlu0 %623
        %625 = vadd.xlane.f32.xlu0 %v598
        %v626 = vpop.xlane.xlu0 %625
        %627 = vadd.xlane.f32.xlu0 %v599
        %v628 = vpop.xlane.xlu0 %627
        %629 = vadd.xlane.f32.xlu0 %v600
        %v630 = vpop.xlane.xlu0 %629
        %631 = vadd.xlane.f32.xlu0 %v601
        %v632 = vpop.xlane.xlu0 %631
        %633 = vadd.xlane.f32.xlu0 %v602
        %v634 = vpop.xlane.xlu0 %633
        %635 = vadd.xlane.f32.xlu0 %v603
        %v636 = vpop.xlane.xlu0 %635
        %637 = vadd.xlane.f32.xlu0 %v604
        %v638 = vpop.xlane.xlu0 %637
        %v639 = vrcp.pop 128.0
        %v640 = vmul.f32 %v608, %v639
        %v641 = vmul.f32 %v610, %v639
        %v642 = vmul.f32 %v612, %v639
        %v643 = vmul.f32 %v614, %v639
        %v644 = vmul.f32 %v616, %v639
        %v645 = vmul.f32 %v618, %v639
        %v646 = vmul.f32 %v620, %v639
        %v647 = vmul.f32 %v622, %v639
        %v648 = vmul.f32 %v624, %v639
        %v649 = vmul.f32 %v626, %v639
        %v650 = vmul.f32 %v628, %v639
        %v651 = vmul.f32 %v630, %v639
        %v652 = vmul.f32 %v632, %v639
        %v653 = vmul.f32 %v634, %v639
        %v654 = vmul.f32 %v636, %v639
        %v655 = vmul.f32 %v638, %v639
        %v656 = vsub.f32 %v589, %v640
        %v657 = vsub.f32 %v590, %v641
        %v658 = vsub.f32 %v591, %v642
        %v659 = vsub.f32 %v592, %v643
        %v660 = vsub.f32 %v593, %v644
        %v661 = vsub.f32 %v594, %v645
        %v662 = vsub.f32 %v595, %v646
        %v663 = vsub.f32 %v596, %v647
        %v664 = vsub.f32 %v597, %v648
        %v665 = vsub.f32 %v598, %v649
        %v666 = vsub.f32 %v599, %v650
        %v667 = vsub.f32 %v600, %v651
        %v668 = vsub.f32 %v601, %v652
        %v669 = vsub.f32 %v602, %v653
        %v670 = vsub.f32 %v603, %v654
        %v671 = vsub.f32 %v604, %v655
        %v672 = vmul.f32 %v656, %v656
        %v673 = vmul.f32 %v657, %v657
        %v674 = vmul.f32 %v658, %v658
        %v675 = vmul.f32 %v659, %v659
        %v676 = vmul.f32 %v660, %v660
        %v677 = vmul.f32 %v661, %v661
        %v678 = vmul.f32 %v662, %v662
        %v679 = vmul.f32 %v663, %v663
        %v680 = vmul.f32 %v664, %v664
        %v681 = vmul.f32 %v665, %v665
        %v682 = vmul.f32 %v666, %v666
        %v683 = vmul.f32 %v667, %v667
        %v684 = vmul.f32 %v668, %v668
        %v685 = vmul.f32 %v669, %v669
        %v686 = vmul.f32 %v670, %v670
        %v687 = vmul.f32 %v671, %v671
        %688 = vadd.xlane.f32.xlu0 %v672
        %v689 = vpop.xlane.xlu0 %688
        %690 = vadd.xlane.f32.xlu0 %v673
        %v691 = vpop.xlane.xlu0 %690
        %692 = vadd.xlane.f32.xlu0 %v674
        %v693 = vpop.xlane.xlu0 %692
        %694 = vadd.xlane.f32.xlu0 %v675
        %v695 = vpop.xlane.xlu0 %694
        %696 = vadd.xlane.f32.xlu0 %v676
        %v697 = vpop.xlane.xlu0 %696
        %698 = vadd.xlane.f32.xlu0 %v677
        %v699 = vpop.xlane.xlu0 %698
        %700 = vadd.xlane.f32.xlu0 %v678
        %v701 = vpop.xlane.xlu0 %700
        %702 = vadd.xlane.f32.xlu0 %v679
        %v703 = vpop.xlane.xlu0 %702
        %704 = vadd.xlane.f32.xlu0 %v680
        %v705 = vpop.xlane.xlu0 %704
        %706 = vadd.xlane.f32.xlu0 %v681
        %v707 = vpop.xlane.xlu0 %706
        %708 = vadd.xlane.f32.xlu0 %v682
        %v709 = vpop.xlane.xlu0 %708
        %710 = vadd.xlane.f32.xlu0 %v683
        %v711 = vpop.xlane.xlu0 %710
        %712 = vadd.xlane.f32.xlu0 %v684
        %v713 = vpop.xlane.xlu0 %712
        %714 = vadd.xlane.f32.xlu0 %v685
        %v715 = vpop.xlane.xlu0 %714
        %716 = vadd.xlane.f32.xlu0 %v686
        %v717 = vpop.xlane.xlu0 %716
        %718 = vadd.xlane.f32.xlu0 %v687
        %v719 = vpop.xlane.xlu0 %718
        %v720 = vmul.f32 %v689, %v639
        %v721 = vmul.f32 %v691, %v639
        %v722 = vmul.f32 %v693, %v639
        %v723 = vmul.f32 %v695, %v639
        %v724 = vmul.f32 %v697, %v639
        %v725 = vmul.f32 %v699, %v639
        %v726 = vmul.f32 %v701, %v639
        %v727 = vmul.f32 %v703, %v639
        %v728 = vmul.f32 %v705, %v639
        %v729 = vmul.f32 %v707, %v639
        %v730 = vmul.f32 %v709, %v639
        %v731 = vmul.f32 %v711, %v639
        %v732 = vmul.f32 %v713, %v639
        %v733 = vmul.f32 %v715, %v639
        %v734 = vmul.f32 %v717, %v639
        %v735 = vmul.f32 %v719, %v639
        %v736 = vadd.f32 %v720, 1e-05
        %v737 = vadd.f32 %v721, 1e-05
        %v738 = vadd.f32 %v722, 1e-05
        %v739 = vadd.f32 %v723, 1e-05
        %v740 = vadd.f32 %v724, 1e-05
        %v741 = vadd.f32 %v725, 1e-05
        %v742 = vadd.f32 %v726, 1e-05
        %v743 = vadd.f32 %v727, 1e-05
        %v744 = vadd.f32 %v728, 1e-05
        %v745 = vadd.f32 %v729, 1e-05
        %v746 = vadd.f32 %v730, 1e-05
        %v747 = vadd.f32 %v731, 1e-05
        %v748 = vadd.f32 %v732, 1e-05
        %v749 = vadd.f32 %v733, 1e-05
        %v750 = vadd.f32 %v734, 1e-05
        %v751 = vadd.f32 %v735, 1e-05
        %v752 = vrsqrt.pop %v736
        %v753 = vrsqrt.pop %v737
        %v754 = vrsqrt.pop %v738
        %v755 = vrsqrt.pop %v739
        %v756 = vrsqrt.pop %v740
        %v757 = vrsqrt.pop %v741
        %v758 = vrsqrt.pop %v742
        %v759 = vrsqrt.pop %v743
        %v760 = vrsqrt.pop %v744
        %v761 = vrsqrt.pop %v745
        %v762 = vrsqrt.pop %v746
        %v763 = vrsqrt.pop %v747
        %v764 = vrsqrt.pop %v748
        %v765 = vrsqrt.pop %v749
        %v766 = vrsqrt.pop %v750
        %v767 = vrsqrt.pop %v751
        %v768 = vmul.f32 %v656, %v752
        %v769 = vmul.f32 %v657, %v753
        %v770 = vmul.f32 %v658, %v754
        %v771 = vmul.f32 %v659, %v755
        %v772 = vmul.f32 %v660, %v756
        %v773 = vmul.f32 %v661, %v757
        %v774 = vmul.f32 %v662, %v758
        %v775 = vmul.f32 %v663, %v759
        %v776 = vmul.f32 %v664, %v760
        %v777 = vmul.f32 %v665, %v761
        %v778 = vmul.f32 %v666, %v762
        %v779 = vmul.f32 %v667, %v763
        %v780 = vmul.f32 %v668, %v764
        %v781 = vmul.f32 %v669, %v765
        %v782 = vmul.f32 %v670, %v766
        %v783 = vmul.f32 %v671, %v767
        %v785 = vlaneseq
        %v786 = vshrl.u32 %v785, 7
        %v787 = vsub.s32 0, %v786
        %v788 = vrot.slane %v605, %v787
        %v790 = vmul.f32 %v768, %v788
        %v791 = vmul.f32 %v769, %v788
        %v792 = vmul.f32 %v770, %v788
        %v793 = vmul.f32 %v771, %v788
        %v794 = vmul.f32 %v772, %v788
        %v795 = vmul.f32 %v773, %v788
        %v796 = vmul.f32 %v774, %v788
        %v797 = vmul.f32 %v775, %v788
        %v798 = vmul.f32 %v776, %v788
        %v799 = vmul.f32 %v777, %v788
        %v800 = vmul.f32 %v778, %v788
        %v801 = vmul.f32 %v779, %v788
        %v802 = vmul.f32 %v780, %v788
        %v803 = vmul.f32 %v781, %v788
        %v804 = vmul.f32 %v782, %v788
        %v805 = vmul.f32 %v783, %v788
        %v807 = vlaneseq
        %v808 = vshrl.u32 %v807, 7
        %v809 = vsub.s32 0, %v808
        %v810 = vrot.slane %v606, %v809
        %v812 = vadd.f32 %v790, %v810
        %v813 = vadd.f32 %v791, %v810
        %v814 = vadd.f32 %v792, %v810
        %v815 = vadd.f32 %v793, %v810
        %v816 = vadd.f32 %v794, %v810
        %v817 = vadd.f32 %v795, %v810
        %v818 = vadd.f32 %v796, %v810
        %v819 = vadd.f32 %v797, %v810
        %v820 = vadd.f32 %v798, %v810
        %v821 = vadd.f32 %v799, %v810
        %v822 = vadd.f32 %v800, %v810
        %v823 = vadd.f32 %v801, %v810
        %v824 = vadd.f32 %v802, %v810
        %v825 = vadd.f32 %v803, %v810
        %v826 = vadd.f32 %v804, %v810
        %v827 = vadd.f32 %v805, %v810
        %v828 = vpack.c.bf16 %v813, %v812
        %v829 = vpack.c.bf16 %v815, %v814
        %v830 = vpack.c.bf16 %v817, %v816
        %v831 = vpack.c.bf16 %v819, %v818
        %v832 = vpack.c.bf16 %v821, %v820
        %v833 = vpack.c.bf16 %v823, %v822
        %v834 = vpack.c.bf16 %v825, %v824
        %v835 = vpack.c.bf16 %v827, %v826
        %v836 = vld [vmem:[#allocation9] sm:$0xff]
        %v837 = vld [vmem:[#allocation9 + $0x8] sm:$0xf]
        %v838 = vld [vmem:[#allocation9 + $0xc] sm:$0xff]
        %v839 = vld [vmem:[#allocation9 + $0x14] sm:$0xf]
        %v840 = vld [vmem:[#allocation9 + $0x18] sm:$0xff]
        %v841 = vld [vmem:[#allocation9 + $0x20] sm:$0xf]
        %v842 = vld [vmem:[#allocation9 + $0x24] sm:$0xff]
        %v843 = vld [vmem:[#allocation9 + $0x2c] sm:$0xf]
        %v844 = vld [vmem:[#allocation9 + $0x30] sm:$0xff]
        %v845 = vld [vmem:[#allocation9 + $0x38] sm:$0xf]
        %v846 = vld [vmem:[#allocation9 + $0x3c] sm:$0xff]
        %v847 = vld [vmem:[#allocation9 + $0x44] sm:$0xf]
        %v848 = vld [vmem:[#allocation9 + $0x48] sm:$0xff]
        %v849 = vld [vmem:[#allocation9 + $0x50] sm:$0xf]
        %v850 = vld [vmem:[#allocation9 + $0x54] sm:$0xff]
        %v851 = vld [vmem:[#allocation9 + $0x5c] sm:$0xf]
        %v852 = vld [vmem:[#allocation9 + $0x60] sm:$0xff]
        %v853 = vld [vmem:[#allocation9 + $0x68] sm:$0xf]
        %v854 = vld [vmem:[#allocation9 + $0x6c] sm:$0xff]
        %v855 = vld [vmem:[#allocation9 + $0x74] sm:$0xf]
        %v856 = vld [vmem:[#allocation9 + $0x78] sm:$0xff]
        %v857 = vld [vmem:[#allocation9 + $0x80] sm:$0xf]
        %v858 = vld [vmem:[#allocation9 + $0x84] sm:$0xff]
        %v859 = vld [vmem:[#allocation9 + $0x8c] sm:$0xf]
        %v860 = vld [vmem:[#allocation9 + $0x90] sm:$0xff]
        %v861 = vld [vmem:[#allocation9 + $0x98] sm:$0xf]
        %v862 = vld [vmem:[#allocation9 + $0x9c] sm:$0xff]
        %v863 = vld [vmem:[#allocation9 + $0xa4] sm:$0xf]
        %v864 = vld [vmem:[#allocation9 + $0xa8] sm:$0xff]
        %v865 = vld [vmem:[#allocation9 + $0xb0] sm:$0xf]
        %v866 = vld [vmem:[#allocation9 + $0xb4] sm:$0xff]
        %v867 = vld [vmem:[#allocation9 + $0xbc] sm:$0xf]
        %v868 = vld [vmem:[%s5] sm:$0x7]
        %v870 = vlaneseq
        %v871 = vshrl.u32 %v870, 7
        %v872 = vsub.s32 0, %v871
        %v873 = vrot.slane %v868, %v872
        %v874 = vlaneseq
        %v875 = vshrl.u32 %v874, 7
        %v876 = vsub.s32 1, %v875
        %v877 = vrot.slane %v868, %v876
        %v878 = vlaneseq
        %v879 = vshrl.u32 %v878, 7
        %v880 = vsub.s32 2, %v879
        %v881 = vrot.slane %v868, %v880
        %v917 = vunpack.c.l.b16 %v836
        %v918 = vunpack.c.h.b16 %v836
        %v919 = vunpack.c.l.b16 %v837
        %v920 = vunpack.c.l.b16 %v838
        %v921 = vunpack.c.h.b16 %v838
        %v922 = vunpack.c.l.b16 %v839
        %v923 = vunpack.c.l.b16 %v840
        %v924 = vunpack.c.h.b16 %v840
        %v925 = vunpack.c.l.b16 %v841
        %v926 = vunpack.c.l.b16 %v842
        %v927 = vunpack.c.h.b16 %v842
        %v928 = vunpack.c.l.b16 %v843
        %v929 = vunpack.c.l.b16 %v844
        %v930 = vunpack.c.h.b16 %v844
        %v931 = vunpack.c.l.b16 %v845
        %v932 = vunpack.c.l.b16 %v846
        %v933 = vunpack.c.h.b16 %v846
        %v934 = vunpack.c.l.b16 %v847
        %v935 = vunpack.c.l.b16 %v848
        %v936 = vunpack.c.h.b16 %v848
        %v937 = vunpack.c.l.b16 %v849
        %v938 = vunpack.c.l.b16 %v850
        %v939 = vunpack.c.h.b16 %v850
        %v940 = vunpack.c.l.b16 %v851
        %v941 = vunpack.c.l.b16 %v852
        %v942 = vunpack.c.h.b16 %v852
        %v943 = vunpack.c.l.b16 %v853
        %v944 = vunpack.c.l.b16 %v854
        %v945 = vunpack.c.h.b16 %v854
        %v946 = vunpack.c.l.b16 %v855
        %v947 = vunpack.c.l.b16 %v856
        %v948 = vunpack.c.h.b16 %v856
        %v949 = vunpack.c.l.b16 %v857
        %v950 = vunpack.c.l.b16 %v858
        %v951 = vunpack.c.h.b16 %v858
        %v952 = vunpack.c.l.b16 %v859
        %v953 = vunpack.c.l.b16 %v860
        %v954 = vunpack.c.h.b16 %v860
        %v955 = vunpack.c.l.b16 %v861
        %v956 = vunpack.c.l.b16 %v862
        %v957 = vunpack.c.h.b16 %v862
        %v958 = vunpack.c.l.b16 %v863
        %v959 = vunpack.c.l.b16 %v864
        %v960 = vunpack.c.h.b16 %v864
        %v961 = vunpack.c.l.b16 %v865
        %v962 = vunpack.c.l.b16 %v866
        %v963 = vunpack.c.h.b16 %v866
        %v964 = vunpack.c.l.b16 %v867
        %v965 = vpack.c.b16 %v920, %v917
        %v966 = vpack.c.b16 %v921, %v918
        %v967 = vpack.c.b16 %v922, %v919
        %v968 = vpack.c.b16 %v926, %v923
        %v969 = vpack.c.b16 %v927, %v924
        %v970 = vpack.c.b16 %v928, %v925
        %v971 = vpack.c.b16 %v932, %v929
        %v972 = vpack.c.b16 %v933, %v930
        %v973 = vpack.c.b16 %v934, %v931
        %v974 = vpack.c.b16 %v938, %v935
        %v975 = vpack.c.b16 %v939, %v936
        %v976 = vpack.c.b16 %v940, %v937
        %v977 = vpack.c.b16 %v944, %v941
        %v978 = vpack.c.b16 %v945, %v942
        %v979 = vpack.c.b16 %v946, %v943
        %v980 = vpack.c.b16 %v950, %v947
        %v981 = vpack.c.b16 %v951, %v948
        %v982 = vpack.c.b16 %v952, %v949
        %v983 = vpack.c.b16 %v956, %v953
        %v984 = vpack.c.b16 %v957, %v954
        %v985 = vpack.c.b16 %v958, %v955
        %v986 = vpack.c.b16 %v962, %v959
        %v987 = vpack.c.b16 %v963, %v960
        %v988 = vpack.c.b16 %v964, %v961
        %1013 = vmatprep.subr.bf16.mxu0 %v966
        %1014 = vmatpush1.bf16.msra.mxu0 %v965
        %1015 = vmatprep.subr.bf16.mxu0 %v969
        %1016 = vmatpush1.bf16.msra.mxu0 %v968
        %1017 = vmatprep.subr.bf16.mxu0 %v972
        %1018 = vmatpush1.bf16.msra.mxu0 %v971
        %1019 = vmatprep.subr.bf16.mxu0 %v975
        %1020 = vmatpush1.bf16.msra.mxu0 %v974
        %1021 = vmatprep.subr.bf16.mxu0 %v978
        %1022 = vmatpush1.bf16.msra.mxu0 %v977
        %1023 = vmatprep.subr.bf16.mxu0 %v981
        %1024 = vmatpush1.bf16.msra.mxu0 %v980
        %1025 = vmatprep.subr.bf16.mxu0 %v984
        %1026 = vmatpush1.bf16.msra.mxu0 %v983
        %1027 = vmatprep.subr.bf16.mxu0 %v987
        %1028 = vmatpush1.bf16.msra.mxu0 %v986
        %1029 = vmatprep.subr.bf16.mxu0 0
        %1030 = vmatpush1.bf16.msra.mxu0 0
        %1031 = vmatprep.subr.bf16.mxu0 0
        %1032 = vmatpush1.bf16.msra.mxu0 0
        %1033 = vmatprep.subr.bf16.mxu0 0
        %1034 = vmatpush1.bf16.msra.mxu0 0
        %1035 = vmatprep.subr.bf16.mxu0 0
        %1036 = vmatpush1.bf16.msra.mxu0 0
        %1037 = vmatprep.subr.bf16.mxu0 0
        %1038 = vmatpush1.bf16.msra.mxu0 0
        %1039 = vmatprep.subr.bf16.mxu0 0
        %1040 = vmatpush1.bf16.msra.mxu0 0
        %1041 = vmatprep.subr.bf16.mxu0 0
        %1042 = vmatpush1.bf16.msra.mxu0 0
        %1043 = vmatprep.subr.bf16.mxu0 0
        %1044 = vmatpush1.bf16.msra.mxu0 0
        %1045 = vmatprep.mubr.bf16.mxu0 0
        %1046 = vmatmul.mubr.bf16.gmra.mrb[0].mxu0 %v828
        %v1047 = vpop.f32.mrb[0].mxu0
        %v1048 = vadd.f32 %v873, %v1047
        %v1049 = vpop.f32.mrb[0].mxu0
        %v1050 = vadd.f32 %v877, %v1049
        %v1051 = vpop.f32.mrb[0].mxu0
        %v1052 = vadd.f32 %v873, %v1051
        %v1053 = vpop.f32.mrb[0].mxu0
        %v1054 = vadd.f32 %v877, %v1053
        %1055 = vmatprep.mubr.bf16.mxu0 0
        %1056 = vmatmul.mubr.bf16.gmra.mrb[0].mxu0 %v829
        %v1057 = vpop.f32.mrb[0].mxu0
        %v1058 = vadd.f32 %v873, %v1057
        %v1059 = vpop.f32.mrb[0].mxu0
        %v1060 = vadd.f32 %v877, %v1059
        %v1061 = vpop.f32.mrb[0].mxu0
        %v1062 = vadd.f32 %v873, %v1061
        %v1063 = vpop.f32.mrb[0].mxu0
        %v1064 = vadd.f32 %v877, %v1063
        %1065 = vmatprep.mubr.bf16.mxu0 0
        %1066 = vmatmul.mubr.bf16.gmra.mrb[0].mxu0 %v830
        %v1067 = vpop.f32.mrb[0].mxu0
        %v1068 = vadd.f32 %v873, %v1067
        %v1069 = vpop.f32.mrb[0].mxu0
        %v1070 = vadd.f32 %v877, %v1069
        %v1071 = vpop.f32.mrb[0].mxu0
        %v1072 = vadd.f32 %v873, %v1071
        %v1073 = vpop.f32.mrb[0].mxu0
        %v1074 = vadd.f32 %v877, %v1073
        %1075 = vmatprep.mubr.bf16.mxu0 0
        %1076 = vmatmul.mubr.bf16.gmra.mrb[0].mxu0 %v831
        %v1077 = vpop.f32.mrb[0].mxu0
        %v1078 = vadd.f32 %v873, %v1077
        %v1079 = vpop.f32.mrb[0].mxu0
        %v1080 = vadd.f32 %v877, %v1079
        %v1081 = vpop.f32.mrb[0].mxu0
        %v1082 = vadd.f32 %v873, %v1081
        %v1083 = vpop.f32.mrb[0].mxu0
        %v1084 = vadd.f32 %v877, %v1083
        %1085 = vmatprep.mubr.bf16.mxu0 0
        %1086 = vmatmul.mubr.bf16.gmra.mrb[0].mxu0 %v832
        %v1087 = vpop.f32.mrb[0].mxu0
        %v1088 = vadd.f32 %v873, %v1087
        %v1089 = vpop.f32.mrb[0].mxu0
        %v1090 = vadd.f32 %v877, %v1089
        %v1091 = vpop.f32.mrb[0].mxu0
        %v1092 = vadd.f32 %v873, %v1091
        %v1093 = vpop.f32.mrb[0].mxu0
        %v1094 = vadd.f32 %v877, %v1093
        %1095 = vmatprep.mubr.bf16.mxu0 0
        %1096 = vmatmul.mubr.bf16.gmra.mrb[0].mxu0 %v833
        %v1097 = vpop.f32.mrb[0].mxu0
        %v1098 = vadd.f32 %v873, %v1097
        %v1099 = vpop.f32.mrb[0].mxu0
        %v1100 = vadd.f32 %v877, %v1099
        %v1101 = vpop.f32.mrb[0].mxu0
        %v1102 = vadd.f32 %v873, %v1101
        %v1103 = vpop.f32.mrb[0].mxu0
        %v1104 = vadd.f32 %v877, %v1103
        %1105 = vmatprep.mubr.bf16.mxu0 0
        %1106 = vmatmul.mubr.bf16.gmra.mrb[0].mxu0 %v834
        %v1107 = vpop.f32.mrb[0].mxu0
        %v1108 = vadd.f32 %v873, %v1107
        %v1109 = vpop.f32.mrb[0].mxu0
        %v1110 = vadd.f32 %v877, %v1109
        %v1111 = vpop.f32.mrb[0].mxu0
        %v1112 = vadd.f32 %v873, %v1111
        %v1113 = vpop.f32.mrb[0].mxu0
        %v1114 = vadd.f32 %v877, %v1113
        %1115 = vmatprep.mubr.bf16.mxu0 0
        %1116 = vmatmul.mubr.bf16.gmra.mrb[0].mxu0 %v835
        %v1117 = vpop.f32.mrb[0].mxu0
        %v1118 = vadd.f32 %v873, %v1117
        %v1119 = vpop.f32.mrb[0].mxu0
        %v1120 = vadd.f32 %v877, %v1119
        %v1121 = vpop.f32.mrb[0].mxu0
        %v1122 = vadd.f32 %v873, %v1121
        %v1123 = vpop.f32.mrb[0].mxu0
        %v1124 = vadd.f32 %v877, %v1123
        %1125 = vdwg.mxu0
        %1126 = vmatprep.subr.bf16.mxu0 0
        %1127 = vmatpush1.bf16.msra.mxu0 %v967
        %1128 = vmatprep.subr.bf16.mxu0 0
        %1129 = vmatpush1.bf16.msra.mxu0 %v970
        %1130 = vmatprep.subr.bf16.mxu0 0
        %1131 = vmatpush1.bf16.msra.mxu0 %v973
        %1132 = vmatprep.subr.bf16.mxu0 0
        %1133 = vmatpush1.bf16.msra.mxu0 %v976
        %1134 = vmatprep.subr.bf16.mxu0 0
        %1135 = vmatpush1.bf16.msra.mxu0 %v979
        %1136 = vmatprep.subr.bf16.mxu0 0
        %1137 = vmatpush1.bf16.msra.mxu0 %v982
        %1138 = vmatprep.subr.bf16.mxu0 0
        %1139 = vmatpush1.bf16.msra.mxu0 %v985
        %1140 = vmatprep.subr.bf16.mxu0 0
        %1141 = vmatpush1.bf16.msra.mxu0 %v988
        %1142 = vmatprep.subr.bf16.mxu0 0
        %1143 = vmatpush1.bf16.msra.mxu0 0
        %1144 = vmatprep.subr.bf16.mxu0 0
        %1145 = vmatpush1.bf16.msra.mxu0 0
        %1146 = vmatprep.subr.bf16.mxu0 0
        %1147 = vmatpush1.bf16.msra.mxu0 0
        %1148 = vmatprep.subr.bf16.mxu0 0
        %1149 = vmatpush1.bf16.msra.mxu0 0
        %1150 = vmatprep.subr.bf16.mxu0 0
        %1151 = vmatpush1.bf16.msra.mxu0 0
        %1152 = vmatprep.subr.bf16.mxu0 0
        %1153 = vmatpush1.bf16.msra.mxu0 0
        %1154 = vmatprep.subr.bf16.mxu0 0
        %1155 = vmatpush1.bf16.msra.mxu0 0
        %1156 = vmatprep.subr.bf16.mxu0 0
        %1157 = vmatpush1.bf16.msra.mxu0 0
        %1158 = vmatprep.mubr.bf16.mxu0 0
        %1159 = vmatmul.mubr.bf16.gmra.mrb[0].mxu0 %v828
        %v1160 = vpop.f32.mrb[0].mxu0
        %v1161 = vadd.f32 %v881, %v1160
        %v1162 = vpop.f32.mrb[0].mxu0
        %v1163 = vpop.f32.mrb[0].mxu0
        %v1164 = vadd.f32 %v881, %v1163
        %v1165 = vpop.f32.mrb[0].mxu0
        %1166 = vmatprep.mubr.bf16.mxu0 0
        %1167 = vmatmul.mubr.bf16.gmra.mrb[0].mxu0 %v829
        %v1168 = vpop.f32.mrb[0].mxu0
        %v1169 = vadd.f32 %v881, %v1168
        %v1170 = vpop.f32.mrb[0].mxu0
        %v1171 = vpop.f32.mrb[0].mxu0
        %v1172 = vadd.f32 %v881, %v1171
        %v1173 = vpop.f32.mrb[0].mxu0
        %1174 = vmatprep.mubr.bf16.mxu0 0
        %1175 = vmatmul.mubr.bf16.gmra.mrb[0].mxu0 %v830
        %v1176 = vpop.f32.mrb[0].mxu0
        %v1177 = vadd.f32 %v881, %v1176
        %v1178 = vpop.f32.mrb[0].mxu0
        %v1179 = vpop.f32.mrb[0].mxu0
        %v1180 = vadd.f32 %v881, %v1179
        %v1181 = vpop.f32.mrb[0].mxu0
        %1182 = vmatprep.mubr.bf16.mxu0 0
        %1183 = vmatmul.mubr.bf16.gmra.mrb[0].mxu0 %v831
        %v1184 = vpop.f32.mrb[0].mxu0
        %v1185 = vadd.f32 %v881, %v1184
        %v1186 = vpop.f32.mrb[0].mxu0
        %v1187 = vpop.f32.mrb[0].mxu0
        %v1188 = vadd.f32 %v881, %v1187
        %v1189 = vpop.f32.mrb[0].mxu0
        %1190 = vmatprep.mubr.bf16.mxu0 0
        %1191 = vmatmul.mubr.bf16.gmra.mrb[0].mxu0 %v832
        %v1192 = vpop.f32.mrb[0].mxu0
        %v1193 = vadd.f32 %v881, %v1192
        %v1194 = vpop.f32.mrb[0].mxu0
        %v1195 = vpop.f32.mrb[0].mxu0
        %v1196 = vadd.f32 %v881, %v1195
        %v1197 = vpop.f32.mrb[0].mxu0
        %1198 = vmatprep.mubr.bf16.mxu0 0
        %1199 = vmatmul.mubr.bf16.gmra.mrb[0].mxu0 %v833
        %v1200 = vpop.f32.mrb[0].mxu0
        %v1201 = vadd.f32 %v881, %v1200
        %v1202 = vpop.f32.mrb[0].mxu0
        %v1203 = vpop.f32.mrb[0].mxu0
        %v1204 = vadd.f32 %v881, %v1203
        %v1205 = vpop.f32.mrb[0].mxu0
        %1206 = vmatprep.mubr.bf16.mxu0 0
        %1207 = vmatmul.mubr.bf16.gmra.mrb[0].mxu0 %v834
        %v1208 = vpop.f32.mrb[0].mxu0
        %v1209 = vadd.f32 %v881, %v1208
        %v1210 = vpop.f32.mrb[0].mxu0
        %v1211 = vpop.f32.mrb[0].mxu0
        %v1212 = vadd.f32 %v881, %v1211
        %v1213 = vpop.f32.mrb[0].mxu0
        %1214 = vmatprep.mubr.bf16.mxu0 0
        %1215 = vmatmul.mubr.bf16.gmra.mrb[0].mxu0 %v835
        %v1216 = vpop.f32.mrb[0].mxu0
        %v1217 = vadd.f32 %v881, %v1216
        %v1218 = vpop.f32.mrb[0].mxu0
        %v1219 = vpop.f32.mrb[0].mxu0
        %v1220 = vadd.f32 %v881, %v1219
        %v1221 = vpop.f32.mrb[0].mxu0
        %1222 = vdwg.mxu0
        %1223 = vst [vmem:[#allocation2] sm:$0xff] %v1048
        %1224 = vst [vmem:[#allocation2 + $0x8] sm:$0xff] %v1050
        %1225 = vst [vmem:[#allocation2 + $0x10] sm:$0xff] %v1161
        %1226 = vst [vmem:[#allocation2 + $0x18] sm:$0xff] %v1052
        %1227 = vst [vmem:[#allocation2 + $0x20] sm:$0xff] %v1054
        %1228 = vst [vmem:[#allocation2 + $0x28] sm:$0xff] %v1164
        %1229 = vst [vmem:[#allocation2 + $0x30] sm:$0xff] %v1058
        %1230 = vst [vmem:[#allocation2 + $0x38] sm:$0xff] %v1060
        %1231 = vst [vmem:[#allocation2 + $0x40] sm:$0xff] %v1169
        %1232 = vst [vmem:[#allocation2 + $0x48] sm:$0xff] %v1062
        %1233 = vst [vmem:[#allocation2 + $0x50] sm:$0xff] %v1064
        %1234 = vst [vmem:[#allocation2 + $0x58] sm:$0xff] %v1172
        %1235 = vst [vmem:[#allocation2 + $0x60] sm:$0xff] %v1068
        %1236 = vst [vmem:[#allocation2 + $0x68] sm:$0xff] %v1070
        %1237 = vst [vmem:[#allocation2 + $0x70] sm:$0xff] %v1177
        %1238 = vst [vmem:[#allocation2 + $0x78] sm:$0xff] %v1072
        %1239 = vst [vmem:[#allocation2 + $0x80] sm:$0xff] %v1074
        %1240 = vst [vmem:[#allocation2 + $0x88] sm:$0xff] %v1180
        %1241 = vst [vmem:[#allocation2 + $0x90] sm:$0xff] %v1078
        %1242 = vst [vmem:[#allocation2 + $0x98] sm:$0xff] %v1080
        %1243 = vst [vmem:[#allocation2 + $0xa0] sm:$0xff] %v1185
        %1244 = vst [vmem:[#allocation2 + $0xa8] sm:$0xff] %v1082
        %1245 = vst [vmem:[#allocation2 + $0xb0] sm:$0xff] %v1084
        %1246 = vst [vmem:[#allocation2 + $0xb8] sm:$0xff] %v1188
        %1247 = vst [vmem:[#allocation2 + $0xc0] sm:$0xff] %v1088
        %1248 = vst [vmem:[#allocation2 + $0xc8] sm:$0xff] %v1090
        %1249 = vst [vmem:[#allocation2 + $0xd0] sm:$0xff] %v1193
        %1250 = vst [vmem:[#allocation2 + $0xd8] sm:$0xff] %v1092
        %1251 = vst [vmem:[#allocation2 + $0xe0] sm:$0xff] %v1094
        %1252 = vst [vmem:[#allocation2 + $0xe8] sm:$0xff] %v1196
        %1253 = vst [vmem:[#allocation2 + $0xf0] sm:$0xff] %v1098
        %1254 = vst [vmem:[#allocation2 + $0xf8] sm:$0xff] %v1100
        %1255 = vst [vmem:[#allocation2 + $0x100] sm:$0xff] %v1201
        %1256 = vst [vmem:[#allocation2 + $0x108] sm:$0xff] %v1102
        %1257 = vst [vmem:[#allocation2 + $0x110] sm:$0xff] %v1104
        %1258 = vst [vmem:[#allocation2 + $0x118] sm:$0xff] %v1204
        %1259 = vst [vmem:[#allocation2 + $0x120] sm:$0xff] %v1108
        %1260 = vst [vmem:[#allocation2 + $0x128] sm:$0xff] %v1110
        %1261 = vst [vmem:[#allocation2 + $0x130] sm:$0xff] %v1209
        %1262 = vst [vmem:[#allocation2 + $0x138] sm:$0xff] %v1112
        %1263 = vst [vmem:[#allocation2 + $0x140] sm:$0xff] %v1114
        %1264 = vst [vmem:[#allocation2 + $0x148] sm:$0xff] %v1212
        %1265 = vst [vmem:[#allocation2 + $0x150] sm:$0xff] %v1118
        %1266 = vst [vmem:[#allocation2 + $0x158] sm:$0xff] %v1120
        %1267 = vst [vmem:[#allocation2 + $0x160] sm:$0xff] %v1217
        %1268 = vst [vmem:[#allocation2 + $0x168] sm:$0xff] %v1122
        %1269 = vst [vmem:[#allocation2 + $0x170] sm:$0xff] %v1124
        %1270 = vst [vmem:[#allocation2 + $0x178] sm:$0xff] %v1220
        loop: start=0, step=1, limit=8
        $region101: #{tpu_custom_call.1} parent=75 // loop_pre_header
          _
        $region102: #{tpu_custom_call.1} parent=75 // loop_header
          %s1272 = sphi 0, %s1276
          %p1273 = scmp.ge.s32.totalorder %s1272, 8
        $region103: #{tpu_custom_call.1} parent=75 // loop_header_branch
          %1275 = sbr.rel (%p1273) target = $region107
        $region104: #{tpu_custom_call.1} parent=75 // loop_body
          %s1277 = smul.u32 %s1272, 16
          %s1278 = sshra.s32 %s1277, 3
          %s1279 = sand.u32 %s1277, 7
          %s1280 = smul.u32 %s1278, 3
          %s1281 = smul.addr %s1280, 8
          %s1282 = scalar_lea.vmem [#allocation2], %s1281
          %v1283 = vld [vmem:[%s1282] sm:$0xff]
          %v1284 = vld [vmem:[%s1282 + $0x8] sm:$0xff]
          %v1285 = vld [vmem:[%s1282 + $0x10] sm:$0xff]
          %v1286 = vld [vmem:[%s1282 + $0x18] sm:$0xff]
          %v1287 = vld [vmem:[%s1282 + $0x20] sm:$0xff]
          %v1288 = vld [vmem:[%s1282 + $0x28] sm:$0xff]
          %s1289 = scalar_lea.vmem %s519, %s1272 [#allocation7]
          %v1290 = vld [vmem:[%s1289] sm:$0x1]
          %vm1291 = vcmp.eq.f32.partialorder %v1290, 0.0
          %v1292 = vsel %vm1291, -1e+30, 0.0
          %v1293 = vsel %vm1291, 0.0, 1.0
          %vm1294 = vcmask 122880
          %v1295 = vsel %vm1294, %v1293, -inf
          %1296 = vmax.xlane.f32.xlu0 %v1295
          %v1297 = vpop.xlane.xlu0 %1296
          %v1298 = vpack.c.bf16 %v1286, %v1283
          %v1299 = vpack.c.bf16 %v1287, %v1284
          %v1300 = vpack.c.bf16 %v1288, %v1285
          %v1302 = vlaneseq
          %v1303 = vshrl.u32 %v1302, 7
          %v1304 = vsub.s32 0, %v1303
          %v1305 = vrot.slane %v1292, %v1304
          %vm1307 = vcmask 261120
          %v1309 = vsel %vm1307, %v1298, 0
          %v1312 = vsel %vm1307, %v1299, 0
          %1314 = vmatprep.subr.bf16.mxu0 0
          %1315 = vmatpush1.bf16.xpose.msra.mxu0 %v1312
          %1316 = vmatprep.subr.bf16.mxu0 0
          %1317 = vmatpush1.bf16.xpose.msra.mxu0 0
          %1318 = vmatprep.subr.bf16.mxu0 0
          %1319 = vmatpush1.bf16.xpose.msra.mxu0 0
          %1320 = vmatprep.subr.bf16.mxu0 0
          %1321 = vmatpush1.bf16.xpose.msra.mxu0 0
          %1322 = vmatprep.subr.bf16.mxu0 0
          %1323 = vmatpush1.bf16.xpose.msra.mxu0 0
          %1324 = vmatprep.subr.bf16.mxu0 0
          %1325 = vmatpush1.bf16.xpose.msra.mxu0 0
          %1326 = vmatprep.subr.bf16.mxu0 0
          %1327 = vmatpush1.bf16.xpose.msra.mxu0 0
          %1328 = vmatprep.subr.bf16.mxu0 0
          %1329 = vmatpush1.bf16.xpose.msra.mxu0 0
          %1330 = vmatprep.subr.bf16.mxu0 0
          %1331 = vmatpush1.bf16.xpose.msra.mxu0 0
          %1332 = vmatprep.subr.bf16.mxu0 0
          %1333 = vmatpush1.bf16.xpose.msra.mxu0 0
          %1334 = vmatprep.subr.bf16.mxu0 0
          %1335 = vmatpush1.bf16.xpose.msra.mxu0 0
          %1336 = vmatprep.subr.bf16.mxu0 0
          %1337 = vmatpush1.bf16.xpose.msra.mxu0 0
          %1338 = vmatprep.subr.bf16.mxu0 0
          %1339 = vmatpush1.bf16.xpose.msra.mxu0 0
          %1340 = vmatprep.subr.bf16.mxu0 0
          %1341 = vmatpush1.bf16.xpose.msra.mxu0 0
          %1342 = vmatprep.subr.bf16.mxu0 0
          %1343 = vmatpush1.bf16.xpose.msra.mxu0 0
          %1344 = vmatprep.subr.bf16.mxu0 0
          %1345 = vmatpush1.bf16.xpose.msra.mxu0 0
          %1346 = vmatprep.mubr.bf16.mxu0 0
          %1347 = vmatmul.mubr.bf16.gmra.mrb[0].mxu0 %v1309
          %v1348 = vpop.f32.mrb[0].mxu0
          %v1349 = vadd.f32 %v1305, %v1348
          %v1350 = vpop.f32.mrb[0].mxu0
          %v1351 = vpop.f32.mrb[0].mxu0
          %v1352 = vadd.f32 %v1305, %v1351
          %v1353 = vpop.f32.mrb[0].mxu0
          %1354 = vdwg.mxu0
          %vm1355 = vcmask 130048
          %v1356 = vsel %vm1355, %v1349, -inf
          %1357 = vmax.xlane.f32.xlu0 %v1356
          %v1358 = vpop.xlane.xlu0 %1357
          %v1359 = vsel %vm1355, %v1352, -inf
          %1360 = vmax.xlane.f32.xlu0 %v1359
          %v1361 = vpop.xlane.xlu0 %1360
          %v1362 = vsub.f32 %v1349, %v1358
          %v1363 = vsub.f32 %v1352, %v1361
          %v1364 = vmul.f32 %v1362, 1.442695
          %v1365 = vpow.pop %v1364
          %v1366 = vmul.f32 %v1363, 1.442695
          %v1367 = vpow.pop %v1366
          %v1368 = vsel %vm1355, %v1365, 0.0
          %1369 = vadd.xlane.f32.xlu0 %v1368
          %v1370 = vpop.xlane.xlu0 %1369
          %v1371 = vsel %vm1355, %v1367, 0.0
          %1372 = vadd.xlane.f32.xlu0 %v1371
          %v1373 = vpop.xlane.xlu0 %1372
          %v1374 = vpack.c.bf16 %v1367, %v1365
          %v1376 = vsel %vm1355, %v1374, 0
          %1378 = vmatprep.subr.bf16.mxu0 0
          %1379 = vmatpush1.bf16.msra.mxu0 %v1300
          %1380 = vmatprep.subr.bf16.mxu0 0
          %1381 = vmatpush1.bf16.msra.mxu0 0
          %1382 = vmatprep.subr.bf16.mxu0 0
          %1383 = vmatpush1.bf16.msra.mxu0 0
          %1384 = vmatprep.subr.bf16.mxu0 0
          %1385 = vmatpush1.bf16.msra.mxu0 0
          %1386 = vmatprep.subr.bf16.mxu0 0
          %1387 = vmatpush1.bf16.msra.mxu0 0
          %1388 = vmatprep.subr.bf16.mxu0 0
          %1389 = vmatpush1.bf16.msra.mxu0 0
          %1390 = vmatprep.subr.bf16.mxu0 0
          %1391 = vmatpush1.bf16.msra.mxu0 0
          %1392 = vmatprep.subr.bf16.mxu0 0
          %1393 = vmatpush1.bf16.msra.mxu0 0
          %1394 = vmatprep.subr.bf16.mxu0 0
          %1395 = vmatpush1.bf16.msra.mxu0 0
          %1396 = vmatprep.subr.bf16.mxu0 0
          %1397 = vmatpush1.bf16.msra.mxu0 0
          %1398 = vmatprep.subr.bf16.mxu0 0
          %1399 = vmatpush1.bf16.msra.mxu0 0
          %1400 = vmatprep.subr.bf16.mxu0 0
          %1401 = vmatpush1.bf16.msra.mxu0 0
          %1402 = vmatprep.subr.bf16.mxu0 0
          %1403 = vmatpush1.bf16.msra.mxu0 0
          %1404 = vmatprep.subr.bf16.mxu0 0
          %1405 = vmatpush1.bf16.msra.mxu0 0
          %1406 = vmatprep.subr.bf16.mxu0 0
          %1407 = vmatpush1.bf16.msra.mxu0 0
          %1408 = vmatprep.subr.bf16.mxu0 0
          %1409 = vmatpush1.bf16.msra.mxu0 0
          %1410 = vmatprep.mubr.bf16.mxu0 0
          %1411 = vmatmul.mubr.bf16.gmra.mrb[0].mxu0 %v1376
          %v1412 = vpop.f32.mrb[0].mxu0
          %v1413 = vadd.f32 0.0, %v1412
          %v1414 = vpop.f32.mrb[0].mxu0
          %v1415 = vpop.f32.mrb[0].mxu0
          %v1416 = vadd.f32 0.0, %v1415
          %v1417 = vpop.f32.mrb[0].mxu0
          %1418 = vdwg.mxu0
          %v1419 = vmax.f32 %v1370, 1e-30
          %v1420 = vmax.f32 %v1373, 1e-30
          %v1421 = vrcp.pop %v1419
          %v1422 = vrcp.pop %v1420
          %v1423 = vmul.f32 %v1413, %v1421
          %v1424 = vmul.f32 %v1416, %v1422
          %1426 = vrot.lane.b32.xlu0 %v1298, 96
          %v1427 = vpop.permute.xlu0 %1426
          %1429 = vrot.lane.b32.xlu0 %v1299, 96
          %v1430 = vpop.permute.xlu0 %1429
          %v1432 = vsel %vm1307, %v1427, 0
          %v1435 = vsel %vm1307, %v1430, 0
          %1437 = vmatprep.subr.bf16.mxu0 0
          %1438 = vmatpush1.bf16.xpose.msra.mxu0 %v1435
          %1439 = vmatprep.subr.bf16.mxu0 0
          %1440 = vmatpush1.bf16.xpose.msra.mxu0 0
          %1441 = vmatprep.subr.bf16.mxu0 0
          %1442 = vmatpush1.bf16.xpose.msra.mxu0 0
          %1443 = vmatprep.subr.bf16.mxu0 0
          %1444 = vmatpush1.bf16.xpose.msra.mxu0 0
          %1445 = vmatprep.subr.bf16.mxu0 0
          %1446 = vmatpush1.bf16.xpose.msra.mxu0 0
          %1447 = vmatprep.subr.bf16.mxu0 0
          %1448 = vmatpush1.bf16.xpose.msra.mxu0 0
          %1449 = vmatprep.subr.bf16.mxu0 0
          %1450 = vmatpush1.bf16.xpose.msra.mxu0 0
          %1451 = vmatprep.subr.bf16.mxu0 0
          %1452 = vmatpush1.bf16.xpose.msra.mxu0 0
          %1453 = vmatprep.subr.bf16.mxu0 0
          %1454 = vmatpush1.bf16.xpose.msra.mxu0 0
          %1455 = vmatprep.subr.bf16.mxu0 0
          %1456 = vmatpush1.bf16.xpose.msra.mxu0 0
          %1457 = vmatprep.subr.bf16.mxu0 0
          %1458 = vmatpush1.bf16.xpose.msra.mxu0 0
          %1459 = vmatprep.subr.bf16.mxu0 0
          %1460 = vmatpush1.bf16.xpose.msra.mxu0 0
          %1461 = vmatprep.subr.bf16.mxu0 0
          %1462 = vmatpush1.bf16.xpose.msra.mxu0 0
          %1463 = vmatprep.subr.bf16.mxu0 0
          %1464 = vmatpush1.bf16.xpose.msra.mxu0 0
          %1465 = vmatprep.subr.bf16.mxu0 0
          %1466 = vmatpush1.bf16.xpose.msra.mxu0 0
          %1467 = vmatprep.subr.bf16.mxu0 0
          %1468 = vmatpush1.bf16.xpose.msra.mxu0 0
          %1469 = vmatprep.mubr.bf16.mxu0 0
          %1470 = vmatmul.mubr.bf16.gmra.mrb[0].mxu0 %v1432
          %v1471 = vpop.f32.mrb[0].mxu0
          %v1472 = vadd.f32 %v1305, %v1471
          %v1473 = vpop.f32.mrb[0].mxu0
          %v1474 = vpop.f32.mrb[0].mxu0
          %v1475 = vadd.f32 %v1305, %v1474
          %v1476 = vpop.f32.mrb[0].mxu0
          %1477 = vdwg.mxu0
          %v1478 = vsel %vm1355, %v1472, -inf
          %1479 = vmax.xlane.f32.xlu0 %v1478
          %v1480 = vpop.xlane.xlu0 %1479
          %v1481 = vsel %vm1355, %v1475, -inf
          %1482 = vmax.xlane.f32.xlu0 %v1481
          %v1483 = vpop.xlane.xlu0 %1482
          %v1484 = vsub.f32 %v1472, %v1480
          %v1485 = vsub.f32 %v1475, %v1483
          %v1486 = vmul.f32 %v1484, 1.442695
          %v1487 = vpow.pop %v1486
          %v1488 = vmul.f32 %v1485, 1.442695
          %v1489 = vpow.pop %v1488
          %v1490 = vsel %vm1355, %v1487, 0.0
          %1491 = vadd.xlane.f32.xlu0 %v1490
          %v1492 = vpop.xlane.xlu0 %1491
          %v1493 = vsel %vm1355, %v1489, 0.0
          %1494 = vadd.xlane.f32.xlu0 %v1493
          %v1495 = vpop.xlane.xlu0 %1494
          %v1496 = vpack.c.bf16 %v1489, %v1487
          %1498 = vrot.lane.b32.xlu0 %v1300, 96
          %v1499 = vpop.permute.xlu0 %1498
          %v1502 = vsel %vm1355, %v1496, 0
          %1504 = vmatprep.subr.bf16.mxu0 0
          %1505 = vmatpush1.bf16.msra.mxu0 %v1499
          %1506 = vmatprep.subr.bf16.mxu0 0
          %1507 = vmatpush1.bf16.msra.mxu0 0
          %1508 = vmatprep.subr.bf16.mxu0 0
          %1509 = vmatpush1.bf16.msra.mxu0 0
          %1510 = vmatprep.subr.bf16.mxu0 0
          %1511 = vmatpush1.bf16.msra.mxu0 0
          %1512 = vmatprep.subr.bf16.mxu0 0
          %1513 = vmatpush1.bf16.msra.mxu0 0
          %1514 = vmatprep.subr.bf16.mxu0 0
          %1515 = vmatpush1.bf16.msra.mxu0 0
          %1516 = vmatprep.subr.bf16.mxu0 0
          %1517 = vmatpush1.bf16.msra.mxu0 0
          %1518 = vmatprep.subr.bf16.mxu0 0
          %1519 = vmatpush1.bf16.msra.mxu0 0
          %1520 = vmatprep.subr.bf16.mxu0 0
          %1521 = vmatpush1.bf16.msra.mxu0 0
          %1522 = vmatprep.subr.bf16.mxu0 0
          %1523 = vmatpush1.bf16.msra.mxu0 0
          %1524 = vmatprep.subr.bf16.mxu0 0
          %1525 = vmatpush1.bf16.msra.mxu0 0
          %1526 = vmatprep.subr.bf16.mxu0 0
          %1527 = vmatpush1.bf16.msra.mxu0 0
          %1528 = vmatprep.subr.bf16.mxu0 0
          %1529 = vmatpush1.bf16.msra.mxu0 0
          %1530 = vmatprep.subr.bf16.mxu0 0
          %1531 = vmatpush1.bf16.msra.mxu0 0
          %1532 = vmatprep.subr.bf16.mxu0 0
          %1533 = vmatpush1.bf16.msra.mxu0 0
          %1534 = vmatprep.subr.bf16.mxu0 0
          %1535 = vmatpush1.bf16.msra.mxu0 0
          %1536 = vmatprep.mubr.bf16.mxu0 0
          %1537 = vmatmul.mubr.bf16.gmra.mrb[0].mxu0 %v1502
          %v1538 = vpop.f32.mrb[0].mxu0
          %v1539 = vadd.f32 0.0, %v1538
          %v1540 = vpop.f32.mrb[0].mxu0
          %v1541 = vpop.f32.mrb[0].mxu0
          %v1542 = vadd.f32 0.0, %v1541
          %v1543 = vpop.f32.mrb[0].mxu0
          %1544 = vdwg.mxu0
          %v1545 = vmax.f32 %v1492, 1e-30
          %v1546 = vmax.f32 %v1495, 1e-30
          %v1547 = vrcp.pop %v1545
          %v1548 = vrcp.pop %v1546
          %v1549 = vmul.f32 %v1539, %v1547
          %v1550 = vmul.f32 %v1542, %v1548
          %1551 = vrot.lane.b32.xlu0 %v1298, 64
          %v1552 = vpop.permute.xlu0 %1551
          %1553 = vrot.lane.b32.xlu0 %v1299, 64
          %v1554 = vpop.permute.xlu0 %1553
          %v1556 = vsel %vm1307, %v1552, 0
          %v1559 = vsel %vm1307, %v1554, 0
          %1561 = vmatprep.subr.bf16.mxu0 0
          %1562 = vmatpush1.bf16.xpose.msra.mxu0 %v1559
          %1563 = vmatprep.subr.bf16.mxu0 0
          %1564 = vmatpush1.bf16.xpose.msra.mxu0 0
          %1565 = vmatprep.subr.bf16.mxu0 0
          %1566 = vmatpush1.bf16.xpose.msra.mxu0 0
          %1567 = vmatprep.subr.bf16.mxu0 0
          %1568 = vmatpush1.bf16.xpose.msra.mxu0 0
          %1569 = vmatprep.subr.bf16.mxu0 0
          %1570 = vmatpush1.bf16.xpose.msra.mxu0 0
          %1571 = vmatprep.subr.bf16.mxu0 0
          %1572 = vmatpush1.bf16.xpose.msra.mxu0 0
          %1573 = vmatprep.subr.bf16.mxu0 0
          %1574 = vmatpush1.bf16.xpose.msra.mxu0 0
          %1575 = vmatprep.subr.bf16.mxu0 0
          %1576 = vmatpush1.bf16.xpose.msra.mxu0 0
          %1577 = vmatprep.subr.bf16.mxu0 0
          %1578 = vmatpush1.bf16.xpose.msra.mxu0 0
          %1579 = vmatprep.subr.bf16.mxu0 0
          %1580 = vmatpush1.bf16.xpose.msra.mxu0 0
          %1581 = vmatprep.subr.bf16.mxu0 0
          %1582 = vmatpush1.bf16.xpose.msra.mxu0 0
          %1583 = vmatprep.subr.bf16.mxu0 0
          %1584 = vmatpush1.bf16.xpose.msra.mxu0 0
          %1585 = vmatprep.subr.bf16.mxu0 0
          %1586 = vmatpush1.bf16.xpose.msra.mxu0 0
          %1587 = vmatprep.subr.bf16.mxu0 0
          %1588 = vmatpush1.bf16.xpose.msra.mxu0 0
          %1589 = vmatprep.subr.bf16.mxu0 0
          %1590 = vmatpush1.bf16.xpose.msra.mxu0 0
          %1591 = vmatprep.subr.bf16.mxu0 0
          %1592 = vmatpush1.bf16.xpose.msra.mxu0 0
          %1593 = vmatprep.mubr.bf16.mxu0 0
          %1594 = vmatmul.mubr.bf16.gmra.mrb[0].mxu0 %v1556
          %v1595 = vpop.f32.mrb[0].mxu0
          %v1596 = vadd.f32 %v1305, %v1595
          %v1597 = vpop.f32.mrb[0].mxu0
          %v1598 = vpop.f32.mrb[0].mxu0
          %v1599 = vadd.f32 %v1305, %v1598
          %v1600 = vpop.f32.mrb[0].mxu0
          %1601 = vdwg.mxu0
          %v1602 = vsel %vm1355, %v1596, -inf
          %1603 = vmax.xlane.f32.xlu0 %v1602
          %v1604 = vpop.xlane.xlu0 %1603
          %v1605 = vsel %vm1355, %v1599, -inf
          %1606 = vmax.xlane.f32.xlu0 %v1605
          %v1607 = vpop.xlane.xlu0 %1606
          %v1608 = vsub.f32 %v1596, %v1604
          %v1609 = vsub.f32 %v1599, %v1607
          %v1610 = vmul.f32 %v1608, 1.442695
          %v1611 = vpow.pop %v1610
          %v1612 = vmul.f32 %v1609, 1.442695
          %v1613 = vpow.pop %v1612
          %v1614 = vsel %vm1355, %v1611, 0.0
          %1615 = vadd.xlane.f32.xlu0 %v1614
          %v1616 = vpop.xlane.xlu0 %1615
          %v1617 = vsel %vm1355, %v1613, 0.0
          %1618 = vadd.xlane.f32.xlu0 %v1617
          %v1619 = vpop.xlane.xlu0 %1618
          %v1620 = vpack.c.bf16 %v1613, %v1611
          %1621 = vrot.lane.b32.xlu0 %v1300, 64
          %v1622 = vpop.permute.xlu0 %1621
          %v1625 = vsel %vm1355, %v1620, 0
          %1627 = vmatprep.subr.bf16.mxu0 0
          %1628 = vmatpush1.bf16.msra.mxu0 %v1622
          %1629 = vmatprep.subr.bf16.mxu0 0
          %1630 = vmatpush1.bf16.msra.mxu0 0
          %1631 = vmatprep.subr.bf16.mxu0 0
          %1632 = vmatpush1.bf16.msra.mxu0 0
          %1633 = vmatprep.subr.bf16.mxu0 0
          %1634 = vmatpush1.bf16.msra.mxu0 0
          %1635 = vmatprep.subr.bf16.mxu0 0
          %1636 = vmatpush1.bf16.msra.mxu0 0
          %1637 = vmatprep.subr.bf16.mxu0 0
          %1638 = vmatpush1.bf16.msra.mxu0 0
          %1639 = vmatprep.subr.bf16.mxu0 0
          %1640 = vmatpush1.bf16.msra.mxu0 0
          %1641 = vmatprep.subr.bf16.mxu0 0
          %1642 = vmatpush1.bf16.msra.mxu0 0
          %1643 = vmatprep.subr.bf16.mxu0 0
          %1644 = vmatpush1.bf16.msra.mxu0 0
          %1645 = vmatprep.subr.bf16.mxu0 0
          %1646 = vmatpush1.bf16.msra.mxu0 0
          %1647 = vmatprep.subr.bf16.mxu0 0
          %1648 = vmatpush1.bf16.msra.mxu0 0
          %1649 = vmatprep.subr.bf16.mxu0 0
          %1650 = vmatpush1.bf16.msra.mxu0 0
          %1651 = vmatprep.subr.bf16.mxu0 0
          %1652 = vmatpush1.bf16.msra.mxu0 0
          %1653 = vmatprep.subr.bf16.mxu0 0
          %1654 = vmatpush1.bf16.msra.mxu0 0
          %1655 = vmatprep.subr.bf16.mxu0 0
          %1656 = vmatpush1.bf16.msra.mxu0 0
          %1657 = vmatprep.subr.bf16.mxu0 0
          %1658 = vmatpush1.bf16.msra.mxu0 0
          %1659 = vmatprep.mubr.bf16.mxu0 0
          %1660 = vmatmul.mubr.bf16.gmra.mrb[0].mxu0 %v1625
          %v1661 = vpop.f32.mrb[0].mxu0
          %v1662 = vadd.f32 0.0, %v1661
          %v1663 = vpop.f32.mrb[0].mxu0
          %v1664 = vpop.f32.mrb[0].mxu0
          %v1665 = vadd.f32 0.0, %v1664
          %v1666 = vpop.f32.mrb[0].mxu0
          %1667 = vdwg.mxu0
          %v1668 = vmax.f32 %v1616, 1e-30
          %v1669 = vmax.f32 %v1619, 1e-30
          %v1670 = vrcp.pop %v1668
          %v1671 = vrcp.pop %v1669
          %v1672 = vmul.f32 %v1662, %v1670
          %v1673 = vmul.f32 %v1665, %v1671
          %1674 = vrot.lane.b32.xlu0 %v1298, 32
          %v1675 = vpop.permute.xlu0 %1674
          %1676 = vrot.lane.b32.xlu0 %v1299, 32
          %v1677 = vpop.permute.xlu0 %1676
          %v1679 = vsel %vm1307, %v1675, 0
          %v1682 = vsel %vm1307, %v1677, 0
          %1684 = vmatprep.subr.bf16.mxu0 0
          %1685 = vmatpush1.bf16.xpose.msra.mxu0 %v1682
          %1686 = vmatprep.subr.bf16.mxu0 0
          %1687 = vmatpush1.bf16.xpose.msra.mxu0 0
          %1688 = vmatprep.subr.bf16.mxu0 0
          %1689 = vmatpush1.bf16.xpose.msra.mxu0 0
          %1690 = vmatprep.subr.bf16.mxu0 0
          %1691 = vmatpush1.bf16.xpose.msra.mxu0 0
          %1692 = vmatprep.subr.bf16.mxu0 0
          %1693 = vmatpush1.bf16.xpose.msra.mxu0 0
          %1694 = vmatprep.subr.bf16.mxu0 0
          %1695 = vmatpush1.bf16.xpose.msra.mxu0 0
          %1696 = vmatprep.subr.bf16.mxu0 0
          %1697 = vmatpush1.bf16.xpose.msra.mxu0 0
          %1698 = vmatprep.subr.bf16.mxu0 0
          %1699 = vmatpush1.bf16.xpose.msra.mxu0 0
          %1700 = vmatprep.subr.bf16.mxu0 0
          %1701 = vmatpush1.bf16.xpose.msra.mxu0 0
          %1702 = vmatprep.subr.bf16.mxu0 0
          %1703 = vmatpush1.bf16.xpose.msra.mxu0 0
          %1704 = vmatprep.subr.bf16.mxu0 0
          %1705 = vmatpush1.bf16.xpose.msra.mxu0 0
          %1706 = vmatprep.subr.bf16.mxu0 0
          %1707 = vmatpush1.bf16.xpose.msra.mxu0 0
          %1708 = vmatprep.subr.bf16.mxu0 0
          %1709 = vmatpush1.bf16.xpose.msra.mxu0 0
          %1710 = vmatprep.subr.bf16.mxu0 0
          %1711 = vmatpush1.bf16.xpose.msra.mxu0 0
          %1712 = vmatprep.subr.bf16.mxu0 0
          %1713 = vmatpush1.bf16.xpose.msra.mxu0 0
          %1714 = vmatprep.subr.bf16.mxu0 0
          %1715 = vmatpush1.bf16.xpose.msra.mxu0 0
          %1716 = vmatprep.mubr.bf16.mxu0 0
          %1717 = vmatmul.mubr.bf16.gmra.mrb[0].mxu0 %v1679
          %v1718 = vpop.f32.mrb[0].mxu0
          %v1719 = vadd.f32 %v1305, %v1718
          %v1720 = vpop.f32.mrb[0].mxu0
          %v1721 = vpop.f32.mrb[0].mxu0
          %v1722 = vadd.f32 %v1305, %v1721
          %v1723 = vpop.f32.mrb[0].mxu0
          %1724 = vdwg.mxu0
          %v1725 = vsel %vm1355, %v1719, -inf
          %1726 = vmax.xlane.f32.xlu0 %v1725
          %v1727 = vpop.xlane.xlu0 %1726
          %v1728 = vsel %vm1355, %v1722, -inf
          %1729 = vmax.xlane.f32.xlu0 %v1728
          %v1730 = vpop.xlane.xlu0 %1729
          %v1731 = vsub.f32 %v1719, %v1727
          %v1732 = vsub.f32 %v1722, %v1730
          %v1733 = vmul.f32 %v1731, 1.442695
          %v1734 = vpow.pop %v1733
          %v1735 = vmul.f32 %v1732, 1.442695
          %v1736 = vpow.pop %v1735
          %v1737 = vsel %vm1355, %v1734, 0.0
          %1738 = vadd.xlane.f32.xlu0 %v1737
          %v1739 = vpop.xlane.xlu0 %1738
          %v1740 = vsel %vm1355, %v1736, 0.0
          %1741 = vadd.xlane.f32.xlu0 %v1740
          %v1742 = vpop.xlane.xlu0 %1741
          %v1743 = vpack.c.bf16 %v1736, %v1734
          %1744 = vrot.lane.b32.xlu0 %v1300, 32
          %v1745 = vpop.permute.xlu0 %1744
          %v1748 = vsel %vm1355, %v1743, 0
          %1750 = vmatprep.subr.bf16.mxu0 0
          %1751 = vmatpush1.bf16.msra.mxu0 %v1745
          %1752 = vmatprep.subr.bf16.mxu0 0
          %1753 = vmatpush1.bf16.msra.mxu0 0
          %1754 = vmatprep.subr.bf16.mxu0 0
          %1755 = vmatpush1.bf16.msra.mxu0 0
          %1756 = vmatprep.subr.bf16.mxu0 0
          %1757 = vmatpush1.bf16.msra.mxu0 0
          %1758 = vmatprep.subr.bf16.mxu0 0
          %1759 = vmatpush1.bf16.msra.mxu0 0
          %1760 = vmatprep.subr.bf16.mxu0 0
          %1761 = vmatpush1.bf16.msra.mxu0 0
          %1762 = vmatprep.subr.bf16.mxu0 0
          %1763 = vmatpush1.bf16.msra.mxu0 0
          %1764 = vmatprep.subr.bf16.mxu0 0
          %1765 = vmatpush1.bf16.msra.mxu0 0
          %1766 = vmatprep.subr.bf16.mxu0 0
          %1767 = vmatpush1.bf16.msra.mxu0 0
          %1768 = vmatprep.subr.bf16.mxu0 0
          %1769 = vmatpush1.bf16.msra.mxu0 0
          %1770 = vmatprep.subr.bf16.mxu0 0
          %1771 = vmatpush1.bf16.msra.mxu0 0
          %1772 = vmatprep.subr.bf16.mxu0 0
          %1773 = vmatpush1.bf16.msra.mxu0 0
          %1774 = vmatprep.subr.bf16.mxu0 0
          %1775 = vmatpush1.bf16.msra.mxu0 0
          %1776 = vmatprep.subr.bf16.mxu0 0
          %1777 = vmatpush1.bf16.msra.mxu0 0
          %1778 = vmatprep.subr.bf16.mxu0 0
          %1779 = vmatpush1.bf16.msra.mxu0 0
          %1780 = vmatprep.subr.bf16.mxu0 0
          %1781 = vmatpush1.bf16.msra.mxu0 0
          %1782 = vmatprep.mubr.bf16.mxu0 0
          %1783 = vmatmul.mubr.bf16.gmra.mrb[0].mxu0 %v1748
          %v1784 = vpop.f32.mrb[0].mxu0
          %v1785 = vadd.f32 0.0, %v1784
          %v1786 = vpop.f32.mrb[0].mxu0
          %v1787 = vpop.f32.mrb[0].mxu0
          %v1788 = vadd.f32 0.0, %v1787
          %v1789 = vpop.f32.mrb[0].mxu0
          %1790 = vdwg.mxu0
          %v1791 = vmax.f32 %v1739, 1e-30
          %v1792 = vmax.f32 %v1742, 1e-30
          %v1793 = vrcp.pop %v1791
          %v1794 = vrcp.pop %v1792
          %v1795 = vmul.f32 %v1785, %v1793
          %v1796 = vmul.f32 %v1788, %v1794
          %1799 = vrot.lane.b32.xlu0 %v1549, 32
          %v1800 = vpop.permute.xlu0 %1799
          %1801 = vrot.lane.b32.xlu0 %v1550, 32
          %v1802 = vpop.permute.xlu0 %1801
          %1807 = vrot.lane.b32.xlu0 %v1672, 64
          %v1808 = vpop.permute.xlu0 %1807
          %1809 = vrot.lane.b32.xlu0 %v1673, 64
          %v1810 = vpop.permute.xlu0 %1809
          %1815 = vrot.lane.b32.xlu0 %v1795, 96
          %v1816 = vpop.permute.xlu0 %1815
          %1817 = vrot.lane.b32.xlu0 %v1796, 96
          %v1818 = vpop.permute.xlu0 %1817
          %v1821 = vsel %vm1307, %v1423, %v1800
          %v1822 = vsel %vm1307, %v1424, %v1802
          %vm1823 = vcmask 523264
          %v1824 = vsel %vm1823, %v1821, %v1808
          %v1825 = vsel %vm1823, %v1822, %v1810
          %vm1826 = vcmask 785408
          %v1827 = vsel %vm1826, %v1824, %v1816
          %v1828 = vsel %vm1826, %v1825, %v1818
          %v1829 = vlaneseq
          %v1830 = vshrl.u32 %v1829, 7
          %v1831 = vsub.s32 0, %v1830
          %v1832 = vrot.slane %v1297, %v1831
          %v1833 = vmul.f32 %v1827, %v1832
          %v1834 = vmul.f32 %v1828, %v1832
          %s1835 = scalar_lea.vmem [#allocation3], %s1277
          %1836 = vst [vmem:[%s1835] sm:$0xff] %v1833
          %1837 = vst [vmem:[%s1835 + $0x8] sm:$0xff] %v1834
        $region105: #{tpu_custom_call.1} parent=75 // loop_footer
          %s1276 = sadd.s32 1, %s1272
        $region106: #{tpu_custom_call.1} parent=75 // loop_footer_branch
          %1271 = sbr.rel target = $region102
        $region107: #{tpu_custom_call.1} parent=75 // loop_exit
          _
        %v1838 = vld [vmem:[#allocation3] sm:$0xff]
        %v1839 = vld [vmem:[#allocation3 + $0x8] sm:$0xff]
        %v1840 = vld [vmem:[#allocation3 + $0x10] sm:$0xff]
        %v1841 = vld [vmem:[#allocation3 + $0x18] sm:$0xff]
        %v1842 = vld [vmem:[#allocation3 + $0x20] sm:$0xff]
        %v1843 = vld [vmem:[#allocation3 + $0x28] sm:$0xff]
        %v1844 = vld [vmem:[#allocation3 + $0x30] sm:$0xff]
        %v1845 = vld [vmem:[#allocation3 + $0x38] sm:$0xff]
        %v1846 = vld [vmem:[#allocation3 + $0x40] sm:$0xff]
        %v1847 = vld [vmem:[#allocation3 + $0x48] sm:$0xff]
        %v1848 = vld [vmem:[#allocation3 + $0x50] sm:$0xff]
        %v1849 = vld [vmem:[#allocation3 + $0x58] sm:$0xff]
        %v1850 = vld [vmem:[#allocation3 + $0x60] sm:$0xff]
        %v1851 = vld [vmem:[#allocation3 + $0x68] sm:$0xff]
        %v1852 = vld [vmem:[#allocation3 + $0x70] sm:$0xff]
        %v1853 = vld [vmem:[#allocation3 + $0x78] sm:$0xff]
        %v1854 = vpack.c.bf16 %v1839, %v1838
        %v1855 = vpack.c.bf16 %v1841, %v1840
        %v1856 = vpack.c.bf16 %v1843, %v1842
        %v1857 = vpack.c.bf16 %v1845, %v1844
        %v1858 = vpack.c.bf16 %v1847, %v1846
        %v1859 = vpack.c.bf16 %v1849, %v1848
        %v1860 = vpack.c.bf16 %v1851, %v1850
        %v1861 = vpack.c.bf16 %v1853, %v1852
        %v1862 = vld [vmem:[#allocation10] sm:$0xf]
        %v1863 = vld [vmem:[#allocation10 + $0x4] sm:$0xf]
        %v1864 = vld [vmem:[#allocation10 + $0x8] sm:$0xf]
        %v1865 = vld [vmem:[#allocation10 + $0xc] sm:$0xf]
        %v1866 = vld [vmem:[#allocation10 + $0x10] sm:$0xf]
        %v1867 = vld [vmem:[#allocation10 + $0x14] sm:$0xf]
        %v1868 = vld [vmem:[#allocation10 + $0x18] sm:$0xf]
        %v1869 = vld [vmem:[#allocation10 + $0x1c] sm:$0xf]
        %v1870 = vld [vmem:[#allocation10 + $0x20] sm:$0xf]
        %v1871 = vld [vmem:[#allocation10 + $0x24] sm:$0xf]
        %v1872 = vld [vmem:[#allocation10 + $0x28] sm:$0xf]
        %v1873 = vld [vmem:[#allocation10 + $0x2c] sm:$0xf]
        %v1874 = vld [vmem:[#allocation10 + $0x30] sm:$0xf]
        %v1875 = vld [vmem:[#allocation10 + $0x34] sm:$0xf]
        %v1876 = vld [vmem:[#allocation10 + $0x38] sm:$0xf]
        %v1877 = vld [vmem:[#allocation10 + $0x3c] sm:$0xf]
        %v1878 = vld [vmem:[%s7] sm:$0x1]
        %v1880 = vlaneseq
        %v1881 = vshrl.u32 %v1880, 7
        %v1882 = vsub.s32 0, %v1881
        %v1883 = vrot.slane %v1878, %v1882
        %v1901 = vunpack.c.l.b16 %v1862
        %v1902 = vunpack.c.l.b16 %v1863
        %v1903 = vunpack.c.l.b16 %v1864
        %v1904 = vunpack.c.l.b16 %v1865
        %v1905 = vunpack.c.l.b16 %v1866
        %v1906 = vunpack.c.l.b16 %v1867
        %v1907 = vunpack.c.l.b16 %v1868
        %v1908 = vunpack.c.l.b16 %v1869
        %v1909 = vunpack.c.l.b16 %v1870
        %v1910 = vunpack.c.l.b16 %v1871
        %v1911 = vunpack.c.l.b16 %v1872
        %v1912 = vunpack.c.l.b16 %v1873
        %v1913 = vunpack.c.l.b16 %v1874
        %v1914 = vunpack.c.l.b16 %v1875
        %v1915 = vunpack.c.l.b16 %v1876
        %v1916 = vunpack.c.l.b16 %v1877
        %v1917 = vpack.c.b16 %v1902, %v1901
        %v1918 = vpack.c.b16 %v1904, %v1903
        %v1919 = vpack.c.b16 %v1906, %v1905
        %v1920 = vpack.c.b16 %v1908, %v1907
        %v1921 = vpack.c.b16 %v1910, %v1909
        %v1922 = vpack.c.b16 %v1912, %v1911
        %v1923 = vpack.c.b16 %v1914, %v1913
        %v1924 = vpack.c.b16 %v1916, %v1915
        %1933 = vmatprep.subr.bf16.mxu0 0
        %1934 = vmatpush1.bf16.msra.mxu0 %v1917
        %1935 = vmatprep.subr.bf16.mxu0 0
        %1936 = vmatpush1.bf16.msra.mxu0 %v1918
        %1937 = vmatprep.subr.bf16.mxu0 0
        %1938 = vmatpush1.bf16.msra.mxu0 %v1919
        %1939 = vmatprep.subr.bf16.mxu0 0
        %1940 = vmatpush1.bf16.msra.mxu0 %v1920
        %1941 = vmatprep.subr.bf16.mxu0 0
        %1942 = vmatpush1.bf16.msra.mxu0 %v1921
        %1943 = vmatprep.subr.bf16.mxu0 0
        %1944 = vmatpush1.bf16.msra.mxu0 %v1922
        %1945 = vmatprep.subr.bf16.mxu0 0
        %1946 = vmatpush1.bf16.msra.mxu0 %v1923
        %1947 = vmatprep.subr.bf16.mxu0 0
        %1948 = vmatpush1.bf16.msra.mxu0 %v1924
        %1949 = vmatprep.subr.bf16.mxu0 0
        %1950 = vmatpush1.bf16.msra.mxu0 0
        %1951 = vmatprep.subr.bf16.mxu0 0
        %1952 = vmatpush1.bf16.msra.mxu0 0
        %1953 = vmatprep.subr.bf16.mxu0 0
        %1954 = vmatpush1.bf16.msra.mxu0 0
        %1955 = vmatprep.subr.bf16.mxu0 0
        %1956 = vmatpush1.bf16.msra.mxu0 0
        %1957 = vmatprep.subr.bf16.mxu0 0
        %1958 = vmatpush1.bf16.msra.mxu0 0
        %1959 = vmatprep.subr.bf16.mxu0 0
        %1960 = vmatpush1.bf16.msra.mxu0 0
        %1961 = vmatprep.subr.bf16.mxu0 0
        %1962 = vmatpush1.bf16.msra.mxu0 0
        %1963 = vmatprep.subr.bf16.mxu0 0
        %1964 = vmatpush1.bf16.msra.mxu0 0
        %1965 = vmatprep.mubr.bf16.mxu0 0
        %1966 = vmatmul.mubr.bf16.gmra.mrb[0].mxu0 %v1854
        %v1967 = vpop.f32.mrb[0].mxu0
        %v1968 = vadd.f32 %v1883, %v1967
        %v1969 = vpop.f32.mrb[0].mxu0
        %v1970 = vpop.f32.mrb[0].mxu0
        %v1971 = vadd.f32 %v1883, %v1970
        %v1972 = vpop.f32.mrb[0].mxu0
        %1973 = vmatprep.mubr.bf16.mxu0 0
        %1974 = vmatmul.mubr.bf16.gmra.mrb[0].mxu0 %v1855
        %v1975 = vpop.f32.mrb[0].mxu0
        %v1976 = vadd.f32 %v1883, %v1975
        %v1977 = vpop.f32.mrb[0].mxu0
        %v1978 = vpop.f32.mrb[0].mxu0
        %v1979 = vadd.f32 %v1883, %v1978
        %v1980 = vpop.f32.mrb[0].mxu0
        %1981 = vmatprep.mubr.bf16.mxu0 0
        %1982 = vmatmul.mubr.bf16.gmra.mrb[0].mxu0 %v1856
        %v1983 = vpop.f32.mrb[0].mxu0
        %v1984 = vadd.f32 %v1883, %v1983
        %v1985 = vpop.f32.mrb[0].mxu0
        %v1986 = vpop.f32.mrb[0].mxu0
        %v1987 = vadd.f32 %v1883, %v1986
        %v1988 = vpop.f32.mrb[0].mxu0
        %1989 = vmatprep.mubr.bf16.mxu0 0
        %1990 = vmatmul.mubr.bf16.gmra.mrb[0].mxu0 %v1857
        %v1991 = vpop.f32.mrb[0].mxu0
        %v1992 = vadd.f32 %v1883, %v1991
        %v1993 = vpop.f32.mrb[0].mxu0
        %v1994 = vpop.f32.mrb[0].mxu0
        %v1995 = vadd.f32 %v1883, %v1994
        %v1996 = vpop.f32.mrb[0].mxu0
        %1997 = vmatprep.mubr.bf16.mxu0 0
        %1998 = vmatmul.mubr.bf16.gmra.mrb[0].mxu0 %v1858
        %v1999 = vpop.f32.mrb[0].mxu0
        %v2000 = vadd.f32 %v1883, %v1999
        %v2001 = vpop.f32.mrb[0].mxu0
        %v2002 = vpop.f32.mrb[0].mxu0
        %v2003 = vadd.f32 %v1883, %v2002
        %v2004 = vpop.f32.mrb[0].mxu0
        %2005 = vmatprep.mubr.bf16.mxu0 0
        %2006 = vmatmul.mubr.bf16.gmra.mrb[0].mxu0 %v1859
        %v2007 = vpop.f32.mrb[0].mxu0
        %v2008 = vadd.f32 %v1883, %v2007
        %v2009 = vpop.f32.mrb[0].mxu0
        %v2010 = vpop.f32.mrb[0].mxu0
        %v2011 = vadd.f32 %v1883, %v2010
        %v2012 = vpop.f32.mrb[0].mxu0
        %2013 = vmatprep.mubr.bf16.mxu0 0
        %2014 = vmatmul.mubr.bf16.gmra.mrb[0].mxu0 %v1860
        %v2015 = vpop.f32.mrb[0].mxu0
        %v2016 = vadd.f32 %v1883, %v2015
        %v2017 = vpop.f32.mrb[0].mxu0
        %v2018 = vpop.f32.mrb[0].mxu0
        %v2019 = vadd.f32 %v1883, %v2018
        %v2020 = vpop.f32.mrb[0].mxu0
        %2021 = vmatprep.mubr.bf16.mxu0 0
        %2022 = vmatmul.mubr.bf16.gmra.mrb[0].mxu0 %v1861
        %v2023 = vpop.f32.mrb[0].mxu0
        %v2024 = vadd.f32 %v1883, %v2023
        %v2025 = vpop.f32.mrb[0].mxu0
        %v2026 = vpop.f32.mrb[0].mxu0
        %v2027 = vadd.f32 %v1883, %v2026
        %v2028 = vpop.f32.mrb[0].mxu0
        %2029 = vdwg.mxu0
        %v2030 = vld [vmem:[%s510] sm:$0xff]
        %v2031 = vld [vmem:[%s510 + $0x8] sm:$0xff]
        %v2032 = vld [vmem:[%s510 + $0x10] sm:$0xff]
        %v2033 = vld [vmem:[%s510 + $0x18] sm:$0xff]
        %v2034 = vld [vmem:[%s510 + $0x20] sm:$0xff]
        %v2035 = vld [vmem:[%s510 + $0x28] sm:$0xff]
        %v2036 = vld [vmem:[%s510 + $0x30] sm:$0xff]
        %v2037 = vld [vmem:[%s510 + $0x38] sm:$0xff]
        %v2038 = vld [vmem:[%s510 + $0x40] sm:$0xff]
        %v2039 = vld [vmem:[%s510 + $0x48] sm:$0xff]
        %v2040 = vld [vmem:[%s510 + $0x50] sm:$0xff]
        %v2041 = vld [vmem:[%s510 + $0x58] sm:$0xff]
        %v2042 = vld [vmem:[%s510 + $0x60] sm:$0xff]
        %v2043 = vld [vmem:[%s510 + $0x68] sm:$0xff]
        %v2044 = vld [vmem:[%s510 + $0x70] sm:$0xff]
        %v2045 = vld [vmem:[%s510 + $0x78] sm:$0xff]
        %v2046 = vadd.f32 %v2030, %v1968
        %v2047 = vadd.f32 %v2031, %v1971
        %v2048 = vadd.f32 %v2032, %v1976
        %v2049 = vadd.f32 %v2033, %v1979
        %v2050 = vadd.f32 %v2034, %v1984
        %v2051 = vadd.f32 %v2035, %v1987
        %v2052 = vadd.f32 %v2036, %v1992
        %v2053 = vadd.f32 %v2037, %v1995
        %v2054 = vadd.f32 %v2038, %v2000
        %v2055 = vadd.f32 %v2039, %v2003
        %v2056 = vadd.f32 %v2040, %v2008
        %v2057 = vadd.f32 %v2041, %v2011
        %v2058 = vadd.f32 %v2042, %v2016
        %v2059 = vadd.f32 %v2043, %v2019
        %v2060 = vadd.f32 %v2044, %v2024
        %v2061 = vadd.f32 %v2045, %v2027
        %v2062 = vld [vmem:[%s8] sm:$0x1]
        %v2063 = vld [vmem:[%s9] sm:$0x1]
        %2064 = vadd.xlane.f32.xlu0 %v2046
        %v2065 = vpop.xlane.xlu0 %2064
        %2066 = vadd.xlane.f32.xlu0 %v2047
        %v2067 = vpop.xlane.xlu0 %2066
        %2068 = vadd.xlane.f32.xlu0 %v2048
        %v2069 = vpop.xlane.xlu0 %2068
        %2070 = vadd.xlane.f32.xlu0 %v2049
        %v2071 = vpop.xlane.xlu0 %2070
        %2072 = vadd.xlane.f32.xlu0 %v2050
        %v2073 = vpop.xlane.xlu0 %2072
        %2074 = vadd.xlane.f32.xlu0 %v2051
        %v2075 = vpop.xlane.xlu0 %2074
        %2076 = vadd.xlane.f32.xlu0 %v2052
        %v2077 = vpop.xlane.xlu0 %2076
        %2078 = vadd.xlane.f32.xlu0 %v2053
        %v2079 = vpop.xlane.xlu0 %2078
        %2080 = vadd.xlane.f32.xlu0 %v2054
        %v2081 = vpop.xlane.xlu0 %2080
        %2082 = vadd.xlane.f32.xlu0 %v2055
        %v2083 = vpop.xlane.xlu0 %2082
        %2084 = vadd.xlane.f32.xlu0 %v2056
        %v2085 = vpop.xlane.xlu0 %2084
        %2086 = vadd.xlane.f32.xlu0 %v2057
        %v2087 = vpop.xlane.xlu0 %2086
        %2088 = vadd.xlane.f32.xlu0 %v2058
        %v2089 = vpop.xlane.xlu0 %2088
        %2090 = vadd.xlane.f32.xlu0 %v2059
        %v2091 = vpop.xlane.xlu0 %2090
        %2092 = vadd.xlane.f32.xlu0 %v2060
        %v2093 = vpop.xlane.xlu0 %2092
        %2094 = vadd.xlane.f32.xlu0 %v2061
        %v2095 = vpop.xlane.xlu0 %2094
        %v2096 = vmul.f32 %v2065, %v639
        %v2097 = vmul.f32 %v2067, %v639
        %v2098 = vmul.f32 %v2069, %v639
        %v2099 = vmul.f32 %v2071, %v639
        %v2100 = vmul.f32 %v2073, %v639
        %v2101 = vmul.f32 %v2075, %v639
        %v2102 = vmul.f32 %v2077, %v639
        %v2103 = vmul.f32 %v2079, %v639
        %v2104 = vmul.f32 %v2081, %v639
        %v2105 = vmul.f32 %v2083, %v639
        %v2106 = vmul.f32 %v2085, %v639
        %v2107 = vmul.f32 %v2087, %v639
        %v2108 = vmul.f32 %v2089, %v639
        %v2109 = vmul.f32 %v2091, %v639
        %v2110 = vmul.f32 %v2093, %v639
        %v2111 = vmul.f32 %v2095, %v639
        %v2112 = vsub.f32 %v2046, %v2096
        %v2113 = vsub.f32 %v2047, %v2097
        %v2114 = vsub.f32 %v2048, %v2098
        %v2115 = vsub.f32 %v2049, %v2099
        %v2116 = vsub.f32 %v2050, %v2100
        %v2117 = vsub.f32 %v2051, %v2101
        %v2118 = vsub.f32 %v2052, %v2102
        %v2119 = vsub.f32 %v2053, %v2103
        %v2120 = vsub.f32 %v2054, %v2104
        %v2121 = vsub.f32 %v2055, %v2105
        %v2122 = vsub.f32 %v2056, %v2106
        %v2123 = vsub.f32 %v2057, %v2107
        %v2124 = vsub.f32 %v2058, %v2108
        %v2125 = vsub.f32 %v2059, %v2109
        %v2126 = vsub.f32 %v2060, %v2110
        %v2127 = vsub.f32 %v2061, %v2111
        %v2128 = vmul.f32 %v2112, %v2112
        %v2129 = vmul.f32 %v2113, %v2113
        %v2130 = vmul.f32 %v2114, %v2114
        %v2131 = vmul.f32 %v2115, %v2115
        %v2132 = vmul.f32 %v2116, %v2116
        %v2133 = vmul.f32 %v2117, %v2117
        %v2134 = vmul.f32 %v2118, %v2118
        %v2135 = vmul.f32 %v2119, %v2119
        %v2136 = vmul.f32 %v2120, %v2120
        %v2137 = vmul.f32 %v2121, %v2121
        %v2138 = vmul.f32 %v2122, %v2122
        %v2139 = vmul.f32 %v2123, %v2123
        %v2140 = vmul.f32 %v2124, %v2124
        %v2141 = vmul.f32 %v2125, %v2125
        %v2142 = vmul.f32 %v2126, %v2126
        %v2143 = vmul.f32 %v2127, %v2127
        %2144 = vadd.xlane.f32.xlu0 %v2128
        %v2145 = vpop.xlane.xlu0 %2144
        %2146 = vadd.xlane.f32.xlu0 %v2129
        %v2147 = vpop.xlane.xlu0 %2146
        %2148 = vadd.xlane.f32.xlu0 %v2130
        %v2149 = vpop.xlane.xlu0 %2148
        %2150 = vadd.xlane.f32.xlu0 %v2131
        %v2151 = vpop.xlane.xlu0 %2150
        %2152 = vadd.xlane.f32.xlu0 %v2132
        %v2153 = vpop.xlane.xlu0 %2152
        %2154 = vadd.xlane.f32.xlu0 %v2133
        %v2155 = vpop.xlane.xlu0 %2154
        %2156 = vadd.xlane.f32.xlu0 %v2134
        %v2157 = vpop.xlane.xlu0 %2156
        %2158 = vadd.xlane.f32.xlu0 %v2135
        %v2159 = vpop.xlane.xlu0 %2158
        %2160 = vadd.xlane.f32.xlu0 %v2136
        %v2161 = vpop.xlane.xlu0 %2160
        %2162 = vadd.xlane.f32.xlu0 %v2137
        %v2163 = vpop.xlane.xlu0 %2162
        %2164 = vadd.xlane.f32.xlu0 %v2138
        %v2165 = vpop.xlane.xlu0 %2164
        %2166 = vadd.xlane.f32.xlu0 %v2139
        %v2167 = vpop.xlane.xlu0 %2166
        %2168 = vadd.xlane.f32.xlu0 %v2140
        %v2169 = vpop.xlane.xlu0 %2168
        %2170 = vadd.xlane.f32.xlu0 %v2141
        %v2171 = vpop.xlane.xlu0 %2170
        %2172 = vadd.xlane.f32.xlu0 %v2142
        %v2173 = vpop.xlane.xlu0 %2172
        %2174 = vadd.xlane.f32.xlu0 %v2143
        %v2175 = vpop.xlane.xlu0 %2174
        %v2176 = vmul.f32 %v2145, %v639
        %v2177 = vmul.f32 %v2147, %v639
        %v2178 = vmul.f32 %v2149, %v639
        %v2179 = vmul.f32 %v2151, %v639
        %v2180 = vmul.f32 %v2153, %v639
        %v2181 = vmul.f32 %v2155, %v639
        %v2182 = vmul.f32 %v2157, %v639
        %v2183 = vmul.f32 %v2159, %v639
        %v2184 = vmul.f32 %v2161, %v639
        %v2185 = vmul.f32 %v2163, %v639
        %v2186 = vmul.f32 %v2165, %v639
        %v2187 = vmul.f32 %v2167, %v639
        %v2188 = vmul.f32 %v2169, %v639
        %v2189 = vmul.f32 %v2171, %v639
        %v2190 = vmul.f32 %v2173, %v639
        %v2191 = vmul.f32 %v2175, %v639
        %v2192 = vadd.f32 %v2176, 1e-05
        %v2193 = vadd.f32 %v2177, 1e-05
        %v2194 = vadd.f32 %v2178, 1e-05
        %v2195 = vadd.f32 %v2179, 1e-05
        %v2196 = vadd.f32 %v2180, 1e-05
        %v2197 = vadd.f32 %v2181, 1e-05
        %v2198 = vadd.f32 %v2182, 1e-05
        %v2199 = vadd.f32 %v2183, 1e-05
        %v2200 = vadd.f32 %v2184, 1e-05
        %v2201 = vadd.f32 %v2185, 1e-05
        %v2202 = vadd.f32 %v2186, 1e-05
        %v2203 = vadd.f32 %v2187, 1e-05
        %v2204 = vadd.f32 %v2188, 1e-05
        %v2205 = vadd.f32 %v2189, 1e-05
        %v2206 = vadd.f32 %v2190, 1e-05
        %v2207 = vadd.f32 %v2191, 1e-05
        %v2208 = vrsqrt.pop %v2192
        %v2209 = vrsqrt.pop %v2193
        %v2210 = vrsqrt.pop %v2194
        %v2211 = vrsqrt.pop %v2195
        %v2212 = vrsqrt.pop %v2196
        %v2213 = vrsqrt.pop %v2197
        %v2214 = vrsqrt.pop %v2198
        %v2215 = vrsqrt.pop %v2199
        %v2216 = vrsqrt.pop %v2200
        %v2217 = vrsqrt.pop %v2201
        %v2218 = vrsqrt.pop %v2202
        %v2219 = vrsqrt.pop %v2203
        %v2220 = vrsqrt.pop %v2204
        %v2221 = vrsqrt.pop %v2205
        %v2222 = vrsqrt.pop %v2206
        %v2223 = vrsqrt.pop %v2207
        %v2224 = vmul.f32 %v2112, %v2208
        %v2225 = vmul.f32 %v2113, %v2209
        %v2226 = vmul.f32 %v2114, %v2210
        %v2227 = vmul.f32 %v2115, %v2211
        %v2228 = vmul.f32 %v2116, %v2212
        %v2229 = vmul.f32 %v2117, %v2213
        %v2230 = vmul.f32 %v2118, %v2214
        %v2231 = vmul.f32 %v2119, %v2215
        %v2232 = vmul.f32 %v2120, %v2216
        %v2233 = vmul.f32 %v2121, %v2217
        %v2234 = vmul.f32 %v2122, %v2218
        %v2235 = vmul.f32 %v2123, %v2219
        %v2236 = vmul.f32 %v2124, %v2220
        %v2237 = vmul.f32 %v2125, %v2221
        %v2238 = vmul.f32 %v2126, %v2222
        %v2239 = vmul.f32 %v2127, %v2223
        %v2241 = vlaneseq
        %v2242 = vshrl.u32 %v2241, 7
        %v2243 = vsub.s32 0, %v2242
        %v2244 = vrot.slane %v2062, %v2243
        %v2246 = vmul.f32 %v2224, %v2244
        %v2247 = vmul.f32 %v2225, %v2244
        %v2248 = vmul.f32 %v2226, %v2244
        %v2249 = vmul.f32 %v2227, %v2244
        %v2250 = vmul.f32 %v2228, %v2244
        %v2251 = vmul.f32 %v2229, %v2244
        %v2252 = vmul.f32 %v2230, %v2244
        %v2253 = vmul.f32 %v2231, %v2244
        %v2254 = vmul.f32 %v2232, %v2244
        %v2255 = vmul.f32 %v2233, %v2244
        %v2256 = vmul.f32 %v2234, %v2244
        %v2257 = vmul.f32 %v2235, %v2244
        %v2258 = vmul.f32 %v2236, %v2244
        %v2259 = vmul.f32 %v2237, %v2244
        %v2260 = vmul.f32 %v2238, %v2244
        %v2261 = vmul.f32 %v2239, %v2244
        %v2263 = vlaneseq
        %v2264 = vshrl.u32 %v2263, 7
        %v2265 = vsub.s32 0, %v2264
        %v2266 = vrot.slane %v2063, %v2265
        %v2268 = vadd.f32 %v2246, %v2266
        %v2269 = vadd.f32 %v2247, %v2266
        %v2270 = vadd.f32 %v2248, %v2266
        %v2271 = vadd.f32 %v2249, %v2266
        %v2272 = vadd.f32 %v2250, %v2266
        %v2273 = vadd.f32 %v2251, %v2266
        %v2274 = vadd.f32 %v2252, %v2266
        %v2275 = vadd.f32 %v2253, %v2266
        %v2276 = vadd.f32 %v2254, %v2266
        %v2277 = vadd.f32 %v2255, %v2266
        %v2278 = vadd.f32 %v2256, %v2266
        %v2279 = vadd.f32 %v2257, %v2266
        %v2280 = vadd.f32 %v2258, %v2266
        %v2281 = vadd.f32 %v2259, %v2266
        %v2282 = vadd.f32 %v2260, %v2266
        %v2283 = vadd.f32 %v2261, %v2266
        %v2284 = vpack.c.bf16 %v2269, %v2268
        %v2285 = vpack.c.bf16 %v2271, %v2270
        %v2286 = vpack.c.bf16 %v2273, %v2272
        %v2287 = vpack.c.bf16 %v2275, %v2274
        %v2288 = vpack.c.bf16 %v2277, %v2276
        %v2289 = vpack.c.bf16 %v2279, %v2278
        %v2290 = vpack.c.bf16 %v2281, %v2280
        %v2291 = vpack.c.bf16 %v2283, %v2282
        %v2292 = vld [vmem:[#allocation12] sm:$0xff]
        %v2293 = vld [vmem:[#allocation12 + $0x8] sm:$0xff]
        %v2294 = vld [vmem:[#allocation12 + $0x10] sm:$0xff]
        %v2295 = vld [vmem:[#allocation12 + $0x18] sm:$0xff]
        %v2296 = vld [vmem:[#allocation12 + $0x20] sm:$0xff]
        %v2297 = vld [vmem:[#allocation12 + $0x28] sm:$0xff]
        %v2298 = vld [vmem:[#allocation12 + $0x30] sm:$0xff]
        %v2299 = vld [vmem:[#allocation12 + $0x38] sm:$0xff]
        %v2300 = vld [vmem:[#allocation12 + $0x40] sm:$0xff]
        %v2301 = vld [vmem:[#allocation12 + $0x48] sm:$0xff]
        %v2302 = vld [vmem:[#allocation12 + $0x50] sm:$0xff]
        %v2303 = vld [vmem:[#allocation12 + $0x58] sm:$0xff]
        %v2304 = vld [vmem:[#allocation12 + $0x60] sm:$0xff]
        %v2305 = vld [vmem:[#allocation12 + $0x68] sm:$0xff]
        %v2306 = vld [vmem:[#allocation12 + $0x70] sm:$0xff]
        %v2307 = vld [vmem:[#allocation12 + $0x78] sm:$0xff]
        %v2308 = vld [vmem:[%s11] sm:$0x3]
        %v2310 = vlaneseq
        %v2311 = vshrl.u32 %v2310, 7
        %v2312 = vsub.s32 0, %v2311
        %v2313 = vrot.slane %v2308, %v2312
        %v2314 = vlaneseq
        %v2315 = vshrl.u32 %v2314, 7
        %v2316 = vsub.s32 1, %v2315
        %v2317 = vrot.slane %v2308, %v2316
        %v2336 = vunpack.c.l.b16 %v2292
        %v2337 = vunpack.c.h.b16 %v2292
        %v2338 = vunpack.c.l.b16 %v2293
        %v2339 = vunpack.c.h.b16 %v2293
        %v2340 = vunpack.c.l.b16 %v2294
        %v2341 = vunpack.c.h.b16 %v2294
        %v2342 = vunpack.c.l.b16 %v2295
        %v2343 = vunpack.c.h.b16 %v2295
        %v2344 = vunpack.c.l.b16 %v2296
        %v2345 = vunpack.c.h.b16 %v2296
        %v2346 = vunpack.c.l.b16 %v2297
        %v2347 = vunpack.c.h.b16 %v2297
        %v2348 = vunpack.c.l.b16 %v2298
        %v2349 = vunpack.c.h.b16 %v2298
        %v2350 = vunpack.c.l.b16 %v2299
        %v2351 = vunpack.c.h.b16 %v2299
        %v2352 = vunpack.c.l.b16 %v2300
        %v2353 = vunpack.c.h.b16 %v2300
        %v2354 = vunpack.c.l.b16 %v2301
        %v2355 = vunpack.c.h.b16 %v2301
        %v2356 = vunpack.c.l.b16 %v2302
        %v2357 = vunpack.c.h.b16 %v2302
        %v2358 = vunpack.c.l.b16 %v2303
        %v2359 = vunpack.c.h.b16 %v2303
        %v2360 = vunpack.c.l.b16 %v2304
        %v2361 = vunpack.c.h.b16 %v2304
        %v2362 = vunpack.c.l.b16 %v2305
        %v2363 = vunpack.c.h.b16 %v2305
        %v2364 = vunpack.c.l.b16 %v2306
        %v2365 = vunpack.c.h.b16 %v2306
        %v2366 = vunpack.c.l.b16 %v2307
        %v2367 = vunpack.c.h.b16 %v2307
        %v2368 = vpack.c.b16 %v2338, %v2336
        %v2369 = vpack.c.b16 %v2339, %v2337
        %v2370 = vpack.c.b16 %v2342, %v2340
        %v2371 = vpack.c.b16 %v2343, %v2341
        %v2372 = vpack.c.b16 %v2346, %v2344
        %v2373 = vpack.c.b16 %v2347, %v2345
        %v2374 = vpack.c.b16 %v2350, %v2348
        %v2375 = vpack.c.b16 %v2351, %v2349
        %v2376 = vpack.c.b16 %v2354, %v2352
        %v2377 = vpack.c.b16 %v2355, %v2353
        %v2378 = vpack.c.b16 %v2358, %v2356
        %v2379 = vpack.c.b16 %v2359, %v2357
        %v2380 = vpack.c.b16 %v2362, %v2360
        %v2381 = vpack.c.b16 %v2363, %v2361
        %v2382 = vpack.c.b16 %v2366, %v2364
        %v2383 = vpack.c.b16 %v2367, %v2365
        %2400 = vmatprep.subr.bf16.mxu0 %v2369
        %2401 = vmatpush1.bf16.msra.mxu0 %v2368
        %2402 = vmatprep.subr.bf16.mxu0 %v2371
        %2403 = vmatpush1.bf16.msra.mxu0 %v2370
        %2404 = vmatprep.subr.bf16.mxu0 %v2373
        %2405 = vmatpush1.bf16.msra.mxu0 %v2372
        %2406 = vmatprep.subr.bf16.mxu0 %v2375
        %2407 = vmatpush1.bf16.msra.mxu0 %v2374
        %2408 = vmatprep.subr.bf16.mxu0 %v2377
        %2409 = vmatpush1.bf16.msra.mxu0 %v2376
        %2410 = vmatprep.subr.bf16.mxu0 %v2379
        %2411 = vmatpush1.bf16.msra.mxu0 %v2378
        %2412 = vmatprep.subr.bf16.mxu0 %v2381
        %2413 = vmatpush1.bf16.msra.mxu0 %v2380
        %2414 = vmatprep.subr.bf16.mxu0 %v2383
        %2415 = vmatpush1.bf16.msra.mxu0 %v2382
        %2416 = vmatprep.subr.bf16.mxu0 0
        %2417 = vmatpush1.bf16.msra.mxu0 0
        %2418 = vmatprep.subr.bf16.mxu0 0
        %2419 = vmatpush1.bf16.msra.mxu0 0
        %2420 = vmatprep.subr.bf16.mxu0 0
        %2421 = vmatpush1.bf16.msra.mxu0 0
        %2422 = vmatprep.subr.bf16.mxu0 0
        %2423 = vmatpush1.bf16.msra.mxu0 0
        %2424 = vmatprep.subr.bf16.mxu0 0
        %2425 = vmatpush1.bf16.msra.mxu0 0
        %2426 = vmatprep.subr.bf16.mxu0 0
        %2427 = vmatpush1.bf16.msra.mxu0 0
        %2428 = vmatprep.subr.bf16.mxu0 0
        %2429 = vmatpush1.bf16.msra.mxu0 0
        %2430 = vmatprep.subr.bf16.mxu0 0
        %2431 = vmatpush1.bf16.msra.mxu0 0
        %2432 = vmatprep.mubr.bf16.mxu0 0
        %2433 = vmatmul.mubr.bf16.gmra.mrb[0].mxu0 %v2284
        %v2434 = vpop.f32.mrb[0].mxu0
        %v2435 = vadd.f32 %v2313, %v2434
        %v2436 = vpop.f32.mrb[0].mxu0
        %v2437 = vadd.f32 %v2317, %v2436
        %v2438 = vpop.f32.mrb[0].mxu0
        %v2439 = vadd.f32 %v2313, %v2438
        %v2440 = vpop.f32.mrb[0].mxu0
        %v2441 = vadd.f32 %v2317, %v2440
        %2442 = vmatprep.mubr.bf16.mxu0 0
        %2443 = vmatmul.mubr.bf16.gmra.mrb[0].mxu0 %v2285
        %v2444 = vpop.f32.mrb[0].mxu0
        %v2445 = vadd.f32 %v2313, %v2444
        %v2446 = vpop.f32.mrb[0].mxu0
        %v2447 = vadd.f32 %v2317, %v2446
        %v2448 = vpop.f32.mrb[0].mxu0
        %v2449 = vadd.f32 %v2313, %v2448
        %v2450 = vpop.f32.mrb[0].mxu0
        %v2451 = vadd.f32 %v2317, %v2450
        %2452 = vmatprep.mubr.bf16.mxu0 0
        %2453 = vmatmul.mubr.bf16.gmra.mrb[0].mxu0 %v2286
        %v2454 = vpop.f32.mrb[0].mxu0
        %v2455 = vadd.f32 %v2313, %v2454
        %v2456 = vpop.f32.mrb[0].mxu0
        %v2457 = vadd.f32 %v2317, %v2456
        %v2458 = vpop.f32.mrb[0].mxu0
        %v2459 = vadd.f32 %v2313, %v2458
        %v2460 = vpop.f32.mrb[0].mxu0
        %v2461 = vadd.f32 %v2317, %v2460
        %2462 = vmatprep.mubr.bf16.mxu0 0
        %2463 = vmatmul.mubr.bf16.gmra.mrb[0].mxu0 %v2287
        %v2464 = vpop.f32.mrb[0].mxu0
        %v2465 = vadd.f32 %v2313, %v2464
        %v2466 = vpop.f32.mrb[0].mxu0
        %v2467 = vadd.f32 %v2317, %v2466
        %v2468 = vpop.f32.mrb[0].mxu0
        %v2469 = vadd.f32 %v2313, %v2468
        %v2470 = vpop.f32.mrb[0].mxu0
        %v2471 = vadd.f32 %v2317, %v2470
        %2472 = vmatprep.mubr.bf16.mxu0 0
        %2473 = vmatmul.mubr.bf16.gmra.mrb[0].mxu0 %v2288
        %v2474 = vpop.f32.mrb[0].mxu0
        %v2475 = vadd.f32 %v2313, %v2474
        %v2476 = vpop.f32.mrb[0].mxu0
        %v2477 = vadd.f32 %v2317, %v2476
        %v2478 = vpop.f32.mrb[0].mxu0
        %v2479 = vadd.f32 %v2313, %v2478
        %v2480 = vpop.f32.mrb[0].mxu0
        %v2481 = vadd.f32 %v2317, %v2480
        %2482 = vmatprep.mubr.bf16.mxu0 0
        %2483 = vmatmul.mubr.bf16.gmra.mrb[0].mxu0 %v2289
        %v2484 = vpop.f32.mrb[0].mxu0
        %v2485 = vadd.f32 %v2313, %v2484
        %v2486 = vpop.f32.mrb[0].mxu0
        %v2487 = vadd.f32 %v2317, %v2486
        %v2488 = vpop.f32.mrb[0].mxu0
        %v2489 = vadd.f32 %v2313, %v2488
        %v2490 = vpop.f32.mrb[0].mxu0
        %v2491 = vadd.f32 %v2317, %v2490
        %2492 = vmatprep.mubr.bf16.mxu0 0
        %2493 = vmatmul.mubr.bf16.gmra.mrb[0].mxu0 %v2290
        %v2494 = vpop.f32.mrb[0].mxu0
        %v2495 = vadd.f32 %v2313, %v2494
        %v2496 = vpop.f32.mrb[0].mxu0
        %v2497 = vadd.f32 %v2317, %v2496
        %v2498 = vpop.f32.mrb[0].mxu0
        %v2499 = vadd.f32 %v2313, %v2498
        %v2500 = vpop.f32.mrb[0].mxu0
        %v2501 = vadd.f32 %v2317, %v2500
        %2502 = vmatprep.mubr.bf16.mxu0 0
        %2503 = vmatmul.mubr.bf16.gmra.mrb[0].mxu0 %v2291
        %v2504 = vpop.f32.mrb[0].mxu0
        %v2505 = vadd.f32 %v2313, %v2504
        %v2506 = vpop.f32.mrb[0].mxu0
        %v2507 = vadd.f32 %v2317, %v2506
        %v2508 = vpop.f32.mrb[0].mxu0
        %v2509 = vadd.f32 %v2313, %v2508
        %v2510 = vpop.f32.mrb[0].mxu0
        %v2511 = vadd.f32 %v2317, %v2510
        %2512 = vdwg.mxu0
        %v2513 = vmax.f32 %v2435, 0.0
        %v2514 = vmax.f32 %v2437, 0.0
        %v2515 = vmax.f32 %v2439, 0.0
        %v2516 = vmax.f32 %v2441, 0.0
        %v2517 = vmax.f32 %v2445, 0.0
        %v2518 = vmax.f32 %v2447, 0.0
        %v2519 = vmax.f32 %v2449, 0.0
        %v2520 = vmax.f32 %v2451, 0.0
        %v2521 = vmax.f32 %v2455, 0.0
        %v2522 = vmax.f32 %v2457, 0.0
        %v2523 = vmax.f32 %v2459, 0.0
        %v2524 = vmax.f32 %v2461, 0.0
        %v2525 = vmax.f32 %v2465, 0.0
        %v2526 = vmax.f32 %v2467, 0.0
        %v2527 = vmax.f32 %v2469, 0.0
        %v2528 = vmax.f32 %v2471, 0.0
        %v2529 = vmax.f32 %v2475, 0.0
        %v2530 = vmax.f32 %v2477, 0.0
        %v2531 = vmax.f32 %v2479, 0.0
        %v2532 = vmax.f32 %v2481, 0.0
        %v2533 = vmax.f32 %v2485, 0.0
        %v2534 = vmax.f32 %v2487, 0.0
        %v2535 = vmax.f32 %v2489, 0.0
        %v2536 = vmax.f32 %v2491, 0.0
        %v2537 = vmax.f32 %v2495, 0.0
        %v2538 = vmax.f32 %v2497, 0.0
        %v2539 = vmax.f32 %v2499, 0.0
        %v2540 = vmax.f32 %v2501, 0.0
        %v2541 = vmax.f32 %v2505, 0.0
        %v2542 = vmax.f32 %v2507, 0.0
        %v2543 = vmax.f32 %v2509, 0.0
        %v2544 = vmax.f32 %v2511, 0.0
        %v2545 = vpack.c.bf16 %v2515, %v2513
        %v2546 = vpack.c.bf16 %v2516, %v2514
        %v2547 = vpack.c.bf16 %v2519, %v2517
        %v2548 = vpack.c.bf16 %v2520, %v2518
        %v2549 = vpack.c.bf16 %v2523, %v2521
        %v2550 = vpack.c.bf16 %v2524, %v2522
        %v2551 = vpack.c.bf16 %v2527, %v2525
        %v2552 = vpack.c.bf16 %v2528, %v2526
        %v2553 = vpack.c.bf16 %v2531, %v2529
        %v2554 = vpack.c.bf16 %v2532, %v2530
        %v2555 = vpack.c.bf16 %v2535, %v2533
        %v2556 = vpack.c.bf16 %v2536, %v2534
        %v2557 = vpack.c.bf16 %v2539, %v2537
        %v2558 = vpack.c.bf16 %v2540, %v2538
        %v2559 = vpack.c.bf16 %v2543, %v2541
        %v2560 = vpack.c.bf16 %v2544, %v2542
        %v2561 = vld [vmem:[#allocation13] sm:$0xf]
        %v2562 = vld [vmem:[#allocation13 + $0x4] sm:$0xf]
        %v2563 = vld [vmem:[#allocation13 + $0x8] sm:$0xf]
        %v2564 = vld [vmem:[#allocation13 + $0xc] sm:$0xf]
        %v2565 = vld [vmem:[#allocation13 + $0x10] sm:$0xf]
        %v2566 = vld [vmem:[#allocation13 + $0x14] sm:$0xf]
        %v2567 = vld [vmem:[#allocation13 + $0x18] sm:$0xf]
        %v2568 = vld [vmem:[#allocation13 + $0x1c] sm:$0xf]
        %v2569 = vld [vmem:[#allocation13 + $0x20] sm:$0xf]
        %v2570 = vld [vmem:[#allocation13 + $0x24] sm:$0xf]
        %v2571 = vld [vmem:[#allocation13 + $0x28] sm:$0xf]
        %v2572 = vld [vmem:[#allocation13 + $0x2c] sm:$0xf]
        %v2573 = vld [vmem:[#allocation13 + $0x30] sm:$0xf]
        %v2574 = vld [vmem:[#allocation13 + $0x34] sm:$0xf]
        %v2575 = vld [vmem:[#allocation13 + $0x38] sm:$0xf]
        %v2576 = vld [vmem:[#allocation13 + $0x3c] sm:$0xf]
        %v2577 = vld [vmem:[#allocation13 + $0x40] sm:$0xf]
        %v2578 = vld [vmem:[#allocation13 + $0x44] sm:$0xf]
        %v2579 = vld [vmem:[#allocation13 + $0x48] sm:$0xf]
        %v2580 = vld [vmem:[#allocation13 + $0x4c] sm:$0xf]
        %v2581 = vld [vmem:[#allocation13 + $0x50] sm:$0xf]
        %v2582 = vld [vmem:[#allocation13 + $0x54] sm:$0xf]
        %v2583 = vld [vmem:[#allocation13 + $0x58] sm:$0xf]
        %v2584 = vld [vmem:[#allocation13 + $0x5c] sm:$0xf]
        %v2585 = vld [vmem:[#allocation13 + $0x60] sm:$0xf]
        %v2586 = vld [vmem:[#allocation13 + $0x64] sm:$0xf]
        %v2587 = vld [vmem:[#allocation13 + $0x68] sm:$0xf]
        %v2588 = vld [vmem:[#allocation13 + $0x6c] sm:$0xf]
        %v2589 = vld [vmem:[#allocation13 + $0x70] sm:$0xf]
        %v2590 = vld [vmem:[#allocation13 + $0x74] sm:$0xf]
        %v2591 = vld [vmem:[#allocation13 + $0x78] sm:$0xf]
        %v2592 = vld [vmem:[#allocation13 + $0x7c] sm:$0xf]
        %v2593 = vld [vmem:[%s13] sm:$0x1]
        %v2595 = vlaneseq
        %v2596 = vshrl.u32 %v2595, 7
        %v2597 = vsub.s32 0, %v2596
        %v2598 = vrot.slane %v2593, %v2597
        %v2632 = vunpack.c.l.b16 %v2561
        %v2633 = vunpack.c.l.b16 %v2562
        %v2634 = vunpack.c.l.b16 %v2563
        %v2635 = vunpack.c.l.b16 %v2564
        %v2636 = vunpack.c.l.b16 %v2565
        %v2637 = vunpack.c.l.b16 %v2566
        %v2638 = vunpack.c.l.b16 %v2567
        %v2639 = vunpack.c.l.b16 %v2568
        %v2640 = vunpack.c.l.b16 %v2569
        %v2641 = vunpack.c.l.b16 %v2570
        %v2642 = vunpack.c.l.b16 %v2571
        %v2643 = vunpack.c.l.b16 %v2572
        %v2644 = vunpack.c.l.b16 %v2573
        %v2645 = vunpack.c.l.b16 %v2574
        %v2646 = vunpack.c.l.b16 %v2575
        %v2647 = vunpack.c.l.b16 %v2576
        %v2648 = vunpack.c.l.b16 %v2577
        %v2649 = vunpack.c.l.b16 %v2578
        %v2650 = vunpack.c.l.b16 %v2579
        %v2651 = vunpack.c.l.b16 %v2580
        %v2652 = vunpack.c.l.b16 %v2581
        %v2653 = vunpack.c.l.b16 %v2582
        %v2654 = vunpack.c.l.b16 %v2583
        %v2655 = vunpack.c.l.b16 %v2584
        %v2656 = vunpack.c.l.b16 %v2585
        %v2657 = vunpack.c.l.b16 %v2586
        %v2658 = vunpack.c.l.b16 %v2587
        %v2659 = vunpack.c.l.b16 %v2588
        %v2660 = vunpack.c.l.b16 %v2589
        %v2661 = vunpack.c.l.b16 %v2590
        %v2662 = vunpack.c.l.b16 %v2591
        %v2663 = vunpack.c.l.b16 %v2592
        %v2664 = vpack.c.b16 %v2633, %v2632
        %v2665 = vpack.c.b16 %v2635, %v2634
        %v2666 = vpack.c.b16 %v2637, %v2636
        %v2667 = vpack.c.b16 %v2639, %v2638
        %v2668 = vpack.c.b16 %v2641, %v2640
        %v2669 = vpack.c.b16 %v2643, %v2642
        %v2670 = vpack.c.b16 %v2645, %v2644
        %v2671 = vpack.c.b16 %v2647, %v2646
        %v2672 = vpack.c.b16 %v2649, %v2648
        %v2673 = vpack.c.b16 %v2651, %v2650
        %v2674 = vpack.c.b16 %v2653, %v2652
        %v2675 = vpack.c.b16 %v2655, %v2654
        %v2676 = vpack.c.b16 %v2657, %v2656
        %v2677 = vpack.c.b16 %v2659, %v2658
        %v2678 = vpack.c.b16 %v2661, %v2660
        %v2679 = vpack.c.b16 %v2663, %v2662
        %2696 = vmatprep.subr.bf16.mxu0 0
        %2697 = vmatpush1.bf16.msra.mxu0 %v2664
        %2698 = vmatprep.subr.bf16.mxu0 0
        %2699 = vmatpush1.bf16.msra.mxu0 %v2665
        %2700 = vmatprep.subr.bf16.mxu0 0
        %2701 = vmatpush1.bf16.msra.mxu0 %v2666
        %2702 = vmatprep.subr.bf16.mxu0 0
        %2703 = vmatpush1.bf16.msra.mxu0 %v2667
        %2704 = vmatprep.subr.bf16.mxu0 0
        %2705 = vmatpush1.bf16.msra.mxu0 %v2668
        %2706 = vmatprep.subr.bf16.mxu0 0
        %2707 = vmatpush1.bf16.msra.mxu0 %v2669
        %2708 = vmatprep.subr.bf16.mxu0 0
        %2709 = vmatpush1.bf16.msra.mxu0 %v2670
        %2710 = vmatprep.subr.bf16.mxu0 0
        %2711 = vmatpush1.bf16.msra.mxu0 %v2671
        %2712 = vmatprep.subr.bf16.mxu0 0
        %2713 = vmatpush1.bf16.msra.mxu0 %v2672
        %2714 = vmatprep.subr.bf16.mxu0 0
        %2715 = vmatpush1.bf16.msra.mxu0 %v2673
        %2716 = vmatprep.subr.bf16.mxu0 0
        %2717 = vmatpush1.bf16.msra.mxu0 %v2674
        %2718 = vmatprep.subr.bf16.mxu0 0
        %2719 = vmatpush1.bf16.msra.mxu0 %v2675
        %2720 = vmatprep.subr.bf16.mxu0 0
        %2721 = vmatpush1.bf16.msra.mxu0 %v2676
        %2722 = vmatprep.subr.bf16.mxu0 0
        %2723 = vmatpush1.bf16.msra.mxu0 %v2677
        %2724 = vmatprep.subr.bf16.mxu0 0
        %2725 = vmatpush1.bf16.msra.mxu0 %v2678
        %2726 = vmatprep.subr.bf16.mxu0 0
        %2727 = vmatpush1.bf16.msra.mxu0 %v2679
        %2728 = vmatprep.mubr.bf16.mxu0 %v2546
        %2729 = vmatmul.mubr.bf16.gmra.mrb[0].mxu0 %v2545
        %v2730 = vpop.f32.mrb[0].mxu0
        %v2731 = vadd.f32 %v2598, %v2730
        %v2732 = vpop.f32.mrb[0].mxu0
        %v2733 = vpop.f32.mrb[0].mxu0
        %v2734 = vadd.f32 %v2598, %v2733
        %v2735 = vpop.f32.mrb[0].mxu0
        %2736 = vmatprep.mubr.bf16.mxu0 %v2548
        %2737 = vmatmul.mubr.bf16.gmra.mrb[0].mxu0 %v2547
        %v2738 = vpop.f32.mrb[0].mxu0
        %v2739 = vadd.f32 %v2598, %v2738
        %v2740 = vpop.f32.mrb[0].mxu0
        %v2741 = vpop.f32.mrb[0].mxu0
        %v2742 = vadd.f32 %v2598, %v2741
        %v2743 = vpop.f32.mrb[0].mxu0
        %2744 = vmatprep.mubr.bf16.mxu0 %v2550
        %2745 = vmatmul.mubr.bf16.gmra.mrb[0].mxu0 %v2549
        %v2746 = vpop.f32.mrb[0].mxu0
        %v2747 = vadd.f32 %v2598, %v2746
        %v2748 = vpop.f32.mrb[0].mxu0
        %v2749 = vpop.f32.mrb[0].mxu0
        %v2750 = vadd.f32 %v2598, %v2749
        %v2751 = vpop.f32.mrb[0].mxu0
        %2752 = vmatprep.mubr.bf16.mxu0 %v2552
        %2753 = vmatmul.mubr.bf16.gmra.mrb[0].mxu0 %v2551
        %v2754 = vpop.f32.mrb[0].mxu0
        %v2755 = vadd.f32 %v2598, %v2754
        %v2756 = vpop.f32.mrb[0].mxu0
        %v2757 = vpop.f32.mrb[0].mxu0
        %v2758 = vadd.f32 %v2598, %v2757
        %v2759 = vpop.f32.mrb[0].mxu0
        %2760 = vmatprep.mubr.bf16.mxu0 %v2554
        %2761 = vmatmul.mubr.bf16.gmra.mrb[0].mxu0 %v2553
        %v2762 = vpop.f32.mrb[0].mxu0
        %v2763 = vadd.f32 %v2598, %v2762
        %v2764 = vpop.f32.mrb[0].mxu0
        %v2765 = vpop.f32.mrb[0].mxu0
        %v2766 = vadd.f32 %v2598, %v2765
        %v2767 = vpop.f32.mrb[0].mxu0
        %2768 = vmatprep.mubr.bf16.mxu0 %v2556
        %2769 = vmatmul.mubr.bf16.gmra.mrb[0].mxu0 %v2555
        %v2770 = vpop.f32.mrb[0].mxu0
        %v2771 = vadd.f32 %v2598, %v2770
        %v2772 = vpop.f32.mrb[0].mxu0
        %v2773 = vpop.f32.mrb[0].mxu0
        %v2774 = vadd.f32 %v2598, %v2773
        %v2775 = vpop.f32.mrb[0].mxu0
        %2776 = vmatprep.mubr.bf16.mxu0 %v2558
        %2777 = vmatmul.mubr.bf16.gmra.mrb[0].mxu0 %v2557
        %v2778 = vpop.f32.mrb[0].mxu0
        %v2779 = vadd.f32 %v2598, %v2778
        %v2780 = vpop.f32.mrb[0].mxu0
        %v2781 = vpop.f32.mrb[0].mxu0
        %v2782 = vadd.f32 %v2598, %v2781
        %v2783 = vpop.f32.mrb[0].mxu0
        %2784 = vmatprep.mubr.bf16.mxu0 %v2560
        %2785 = vmatmul.mubr.bf16.gmra.mrb[0].mxu0 %v2559
        %v2786 = vpop.f32.mrb[0].mxu0
        %v2787 = vadd.f32 %v2598, %v2786
        %v2788 = vpop.f32.mrb[0].mxu0
        %v2789 = vpop.f32.mrb[0].mxu0
        %v2790 = vadd.f32 %v2598, %v2789
        %v2791 = vpop.f32.mrb[0].mxu0
        %2792 = vdwg.mxu0
        %v2793 = vadd.f32 %v2046, %v2731
        %v2794 = vadd.f32 %v2047, %v2734
        %v2795 = vadd.f32 %v2048, %v2739
        %v2796 = vadd.f32 %v2049, %v2742
        %v2797 = vadd.f32 %v2050, %v2747
        %v2798 = vadd.f32 %v2051, %v2750
        %v2799 = vadd.f32 %v2052, %v2755
        %v2800 = vadd.f32 %v2053, %v2758
        %v2801 = vadd.f32 %v2054, %v2763
        %v2802 = vadd.f32 %v2055, %v2766
        %v2803 = vadd.f32 %v2056, %v2771
        %v2804 = vadd.f32 %v2057, %v2774
        %v2805 = vadd.f32 %v2058, %v2779
        %v2806 = vadd.f32 %v2059, %v2782
        %v2807 = vadd.f32 %v2060, %v2787
        %v2808 = vadd.f32 %v2061, %v2790
        %2809 = vst [vmem:[%s584] sm:$0xff] %v2793
        %2810 = vst [vmem:[%s584 + $0x8] sm:$0xff] %v2794
        %2811 = vst [vmem:[%s584 + $0x10] sm:$0xff] %v2795
        %2812 = vst [vmem:[%s584 + $0x18] sm:$0xff] %v2796
        %2813 = vst [vmem:[%s584 + $0x20] sm:$0xff] %v2797
        %2814 = vst [vmem:[%s584 + $0x28] sm:$0xff] %v2798
        %2815 = vst [vmem:[%s584 + $0x30] sm:$0xff] %v2799
        %2816 = vst [vmem:[%s584 + $0x38] sm:$0xff] %v2800
        %2817 = vst [vmem:[%s584 + $0x40] sm:$0xff] %v2801
        %2818 = vst [vmem:[%s584 + $0x48] sm:$0xff] %v2802
        %2819 = vst [vmem:[%s584 + $0x50] sm:$0xff] %v2803
        %2820 = vst [vmem:[%s584 + $0x58] sm:$0xff] %v2804
        %2821 = vst [vmem:[%s584 + $0x60] sm:$0xff] %v2805
        %2822 = vst [vmem:[%s584 + $0x68] sm:$0xff] %v2806
        %2823 = vst [vmem:[%s584 + $0x70] sm:$0xff] %v2807
        %2824 = vst [vmem:[%s584 + $0x78] sm:$0xff] %v2808
        %s2825 = sand.u32 %s348, 1
        %s2826 = scalar_lea.sflag [#allocation6], %s2825
        %s2827 = sand.u32 %s348, 1
        %s2828 = smul.addr %s2827, 128
        %s2829 = scalar_lea.vmem [#allocation15], %s2828
        // Predicated region
        $region108: #{tpu_custom_call.1} parent=75 // pred_check
          %p2830 = pneg %p358
        $region109: #{tpu_custom_call.1} parent=75 // pred_check_branch
          %2832 = sbr.rel (%p2830) target = $region111
        $region110: #{tpu_custom_call.1} parent=75 // pred_region
          %s2833 = smul.u32 8, %s36
          %s2835 = ssub.s32 2048, 2048
          %2836 = vsyncadd %s2826, %s2835
          %s2837 = smul.addr %s2833, 2
          %s2838 = smul.addr %s2837, 128
          %s2839 = scalar_lea.hbm %s14, %s2838
          %s2840 = sshll.u32 %s2829, 4
          %s2841 = int_to_ptr.vmem [resolvable:$true] %s2840
          %2846 = dma.vmem_to_hbm [thread:$0]  %s2841, 2048, %s2839, %s2826, 128, 128, 8
        $region111: #{tpu_custom_call.1} parent=75 // pred_fallthru
          _
      $region76: #{tpu_custom_call.1} parent=5 // pred_fallthru
        _
      %p2847 = scmp.le.s32.totalorder 2, %s31
      // Predicated region
      $region112: #{tpu_custom_call.1} parent=5 // pred_check
        %p2848 = pneg %p2847
      $region113: #{tpu_custom_call.1} parent=5 // pred_check_branch
        %2850 = sbr.rel (%p2848) target = $region115
      $region114: #{tpu_custom_call.1} parent=5 // pred_region
        %s2851 = ssub.s32 %s31, 2
        // Predicated region
        $region116: #{tpu_custom_call.1} parent=114 // pred_check
          %p2852 = pneg %p364
        $region117: #{tpu_custom_call.1} parent=114 // pred_check_branch
          %2854 = sbr.rel (%p2852) target = $region119
        $region118: #{tpu_custom_call.1} parent=114 // pred_region
          %s2855 = sand.u32 %s349, 1
          %s2856 = scalar_lea.sflag [#allocation6], %s2855
          %s2857 = sand.u32 %s349, 1
          %s2858 = smul.addr %s2857, 128
          %s2859 = scalar_lea.vmem [#allocation15], %s2858
          %2860 = dma.done %s2856, 2048
        $region119: #{tpu_custom_call.1} parent=114 // pred_fallthru
          _
      $region115: #{tpu_custom_call.1} parent=5 // pred_fallthru
        _
    $region6: #{tpu_custom_call.1} parent=1 // loop_footer
      %s35 = sadd.s32 1, %s31
    $region7: #{tpu_custom_call.1} parent=1 // loop_footer_branch
      %30 = sbr.rel target = $region3
    $region8: #{tpu_custom_call.1} parent=1 // loop_exit
      _
    %2861 = vsyncpa [#allocation5], 1
    %s2862 = scalar_lea.sflag [#allocation5], 1
    %2863 = vsyncpa %s2862, 1
    %2864 = vsyncpa [#allocation8], 1
    %s2865 = scalar_lea.sflag [#allocation8], 1
    %2866 = vsyncpa %s2865, 1
    %2867 = vsyncpa [#allocation11], 1
    %2868 = vsyncpa [#allocation14], 1
    %2869 = vsyncpa [#allocation6], 1
    %s2870 = scalar_lea.sflag [#allocation6], 1
    %2871 = vsyncpa %s2870, 1

</llo_original>
